<compile_context>
chip_gen: v5e
topology: v5e:2x2
jax: 0.10.0
libtpu: 0.0.40
codegen_flags: <defaults>
</compile_context>

<pallas_src>
import jax
import jax.numpy as jnp
from jax import lax
from jax.experimental import pallas as pl
from jax.experimental.pallas import tpu as pltpu

_BN_EPS = 1e-5
_VMEM_LIMIT = 64 * 1024 * 1024


# --------------------------------------------------------------------------
# In-kernel helpers
# --------------------------------------------------------------------------
def _swish(v):
    # v * sigmoid(v); only the sigmoid reciprocal uses the approximate EUP
    # path.  All statistics use exact divides (review correctness fix).
    return v * pl.reciprocal(1.0 + jnp.exp(-v), approx=True)


def _bn_apply_swish(x, stats, g, b):
    # stats [2, C]: row 0 = masked mean, row 1 = 1/sqrt(var+eps), precomputed.
    mean = stats[0:1, :]
    invstd = stats[1:2, :]
    return _swish(g * ((x - mean) * invstd) + b)


# --------------------------------------------------------------------------
# Host-side helpers
# --------------------------------------------------------------------------
def _finalize_stats(mom, inv_count):
    # mom [2, C] masked (sum, sum_sq) -> [2, C] (mean, invstd).  Exact divide.
    mean = mom[0:1, :] * inv_count
    var = jnp.maximum(mom[1:2, :] * inv_count - mean * mean, 0.0)
    return jnp.concatenate([mean, lax.rsqrt(var + _BN_EPS)], axis=0)


def _pick_row_tile(m):
    cap = min(256, max(8, ((m // 2) // 8) * 8))
    t = min(cap, m)
    while t > 8 and m % t:
        t -= 8
    if m % t:
        t = m
    return t


def _pick_j_tile(n):
    for t in (256, 128):
        if n % t == 0:
            return t
    return n


# --------------------------------------------------------------------------
# Kernel 1: masked-BN-apply -> Swish -> Linear (+ optional residual),
#           fused masked moments of the output for the NEXT BatchNorm.
#           Grid: M-row tiles, "parallel"; weights resident.
# --------------------------------------------------------------------------
def _bn_swish_linear_kernel(x_ref, m_ref, st_ref, g_ref, b_ref, w_ref,
                            bias_ref, o_ref, mom_ref):
    m = m_ref[...]
    x = x_ref[...] * m                       # x_or_zero (MaskBatchNormNd)
    h = _bn_apply_swish(x, st_ref[...], g_ref[...], b_ref[...])
    y = jnp.dot(h.astype(jnp.bfloat16), w_ref[...],
                preferred_element_type=jnp.float32) + bias_ref[...]
    o_ref[...] = y
    yz = y * m
    mom_ref[0, 0:1, :] = jnp.sum(yz, axis=0, keepdims=True)
    mom_ref[0, 1:2, :] = jnp.sum(yz * yz, axis=0, keepdims=True)


def _bn_swish_linear_res_kernel(res_ref, x_ref, m_ref, st_ref, g_ref, b_ref,
                                w_ref, bias_ref, o_ref, mom_ref):
    m = m_ref[...]
    x = x_ref[...] * m
    h = _bn_apply_swish(x, st_ref[...], g_ref[...], b_ref[...])
    y = res_ref[...] + jnp.dot(h.astype(jnp.bfloat16), w_ref[...],
                               preferred_element_type=jnp.float32) + bias_ref[...]
    o_ref[...] = y
    yz = y * m
    mom_ref[0, 0:1, :] = jnp.sum(yz, axis=0, keepdims=True)
    mom_ref[0, 1:2, :] = jnp.sum(yz * yz, axis=0, keepdims=True)


def bn_swish_linear(x, mcol, stats, g, b, w, bias, residual=None):
    M, CIN = x.shape
    KOUT = w.shape[1]
    tm = _pick_row_tile(M)
    nt = M // tm
    wb16 = w.astype(jnp.bfloat16)            # bf16 operands, f32 accumulation

    row = lambda i: (i, 0)
    fix = lambda i: (0, 0)

    in_specs = [
        pl.BlockSpec((tm, CIN), row),                      # x tile
        pl.BlockSpec((tm, 1), row),                        # mask column tile
        pl.BlockSpec((2, CIN), fix),                       # (mean, invstd)
        pl.BlockSpec((1, CIN), fix),                       # gamma
        pl.BlockSpec((1, CIN), fix),                       # beta
        pl.BlockSpec((CIN, KOUT), fix),                    # weight (resident)
        pl.BlockSpec((1, KOUT), fix),                      # bias
    ]
    out_specs = (
        pl.BlockSpec((tm, KOUT), row),                     # y tile
        pl.BlockSpec((1, 2, KOUT), lambda i: (i, 0, 0)),   # per-tile moments
    )
    out_shape = (
        jax.ShapeDtypeStruct((M, KOUT), jnp.float32),
        jax.ShapeDtypeStruct((nt, 2, KOUT), jnp.float32),
    )
    cost = pl.CostEstimate(
        flops=2 * M * CIN * KOUT,
        transcendentals=M * CIN,
        bytes_accessed=4 * (M * CIN + 2 * M * KOUT + 2 * M) + 2 * CIN * KOUT,
    )
    cparams = pltpu.CompilerParams(
        dimension_semantics=("parallel",),
        vmem_limit_bytes=_VMEM_LIMIT,
    )
    if residual is None:
        return pl.pallas_call(
            _bn_swish_linear_kernel,
            out_shape=out_shape,
            grid=(nt,),
            in_specs=in_specs,
            out_specs=out_specs,
            compiler_params=cparams,
            cost_estimate=cost,
        )(x, mcol, stats, g, b, wb16, bias)

    res_spec = pl.BlockSpec((tm, KOUT), row)
    return pl.pallas_call(
        _bn_swish_linear_res_kernel,
        out_shape=out_shape,
        grid=(nt,),
        in_specs=[res_spec] + in_specs,
        out_specs=out_specs,
        input_output_aliases={0: 0},         # residual written in place
        compiler_params=cparams,
        cost_estimate=cost,
    )(residual, x, mcol, stats, g, b, wb16, bias)


# --------------------------------------------------------------------------
# Kernel 2: fused BN2+Swish -> LieConvAutoregressive (T(3), liftsamples=1,
#           mean=True), flash-style over neighbour (j) tiles, causal mask,
#           hoisted neighbour counts, folded WeightNet projection.
#           Grid: (B "parallel", N//TJ "arbitrary").
# --------------------------------------------------------------------------
def _lieconv_kernel(qinfo_ref, kinfo_ref, h_ref, st_ref, g_ref, b_ref,
                    w1_ref, b1_ref, wall_ref, bl_ref,
                    o_ref, mom_ref, acc_ref):
    jt = pl.program_id(1)
    njt = pl.num_programs(1)
    N, COUT = acc_ref.shape
    TJ = h_ref.shape[0]
    H = w1_ref.shape[1]

    q = qinfo_ref[0]                         # [N, 8]  lanes: x,y,z,inv_cnt,mask
    kv = kinfo_ref[0]                        # [8, TJ] rows : x,y,z,mask

    # MaskBatchNormNd(k/4) + Swish on the conv-input tile (precomputed stats).
    # No row masking needed: masked neighbour columns are zeroed by nb below
    # and masked query rows never read their own feature.
    f = _bn_apply_swish(h_ref[...], st_ref[...], g_ref[...], b_ref[...])

    # ONE lane-dense matmul: fproj[:, 0:COUT] is the folded WeightNet bias
    # path (b2 . wl); block h+1 is the folded hidden->output path (w2[h] . wl).
    fproj = jnp.dot(f.astype(jnp.bfloat16), wall_ref[...],
                    preferred_element_type=jnp.float32)
    fproj = fproj.astype(jnp.bfloat16)       # [TJ, (H+1)*COUT]

    # Pairwise T(3) group elements a_ij = x_i - x_j for this neighbour tile.
    d0 = q[:, 0:1] - kv[0:1, :]
    d1 = q[:, 1:2] - kv[1:2, :]
    d2 = q[:, 2:3] - kv[2:3, :]
    mrow = kv[3:4, :]

    # Causal (autoregressive) neighbourhood x atom mask.  Counts are hoisted
    # (qinfo lane 3, exact divide); only the cheap iota/compare stays here.
    ii = lax.broadcasted_iota(jnp.int32, (N, TJ), 0)
    jj = lax.broadcasted_iota(jnp.int32, (N, TJ), 1) + jt * TJ
    nb = jnp.where(jj <= ii, 1.0, 0.0) * mrow             # [N, TJ]

    out = jnp.dot(nb.astype(jnp.bfloat16), fproj[:, 0:COUT],
                  preferred_element_type=jnp.float32)
    # Interleaved WeightNet: one hidden [N,TJ] plane live at a time, all the
    # per-hidden aggregation on the MXU, accumulating into a single f32 tile.
    for hh in range(H):
        pre = (d0 * w1_ref[0, hh] + d1 * w1_ref[1, hh] + d2 * w1_ref[2, hh]
               + b1_ref[0, hh])
        hplane = _swish(pre) * nb
        out = out + jnp.dot(hplane.astype(jnp.bfloat16),
                            fproj[:, (hh + 1) * COUT:(hh + 2) * COUT],
                            preferred_element_type=jnp.float32)

    @pl.when(jt == 0)
    def _():
        acc_ref[...] = out

    @pl.when(jt > 0)
    def _():
        acc_ref[...] += out

    @pl.when(jt == njt - 1)
    def _():
        inv_cnt = q[:, 3:4]                  # exact 1/|causal nbhd|, hoisted
        c = acc_ref[...] * inv_cnt + bl_ref[...]
        o_ref[...] = c
        cz = c * q[:, 4:5]                   # masked moments for the next BN
        mom_ref[0, 0:1, :] = jnp.sum(cz, axis=0, keepdims=True)
        mom_ref[0, 1:2, :] = jnp.sum(cz * cz, axis=0, keepdims=True)


def lieconv(qinfo, kinfo, h, stats, g, b, w1, b1, wall, bl):
    B, N, _ = qinfo.shape
    M, CIN = h.shape
    COUT = bl.shape[1]
    H = w1.shape[1]
    TJ = _pick_j_tile(N)
    njt = N // TJ

    smem = pltpu.MemorySpace.SMEM
    fix = lambda bi, ji: (0, 0)

    in_specs = [
        pl.BlockSpec((1, N, 8), lambda bi, ji: (bi, 0, 0)),     # qinfo
        pl.BlockSpec((1, 8, TJ), lambda bi, ji: (bi, 0, ji)),   # kinfo j-tile
        pl.BlockSpec((TJ, CIN), lambda bi, ji: (bi * njt + ji, 0)),  # f_j tile
        pl.BlockSpec((2, CIN), fix),                            # BN2 stats
        pl.BlockSpec((1, CIN), fix),                            # BN2 gamma
        pl.BlockSpec((1, CIN), fix),                            # BN2 beta
        pl.BlockSpec((3, H), fix, memory_space=smem),           # WeightNet w1
        pl.BlockSpec((1, H), fix, memory_space=smem),           # WeightNet b1
        pl.BlockSpec((CIN, (H + 1) * COUT), fix),               # folded proj
        pl.BlockSpec((1, COUT), fix),                           # conv bias
    ]
    out_specs = (
        pl.BlockSpec((N, COUT), lambda bi, ji: (bi, 0)),        # conv output
        pl.BlockSpec((1, 2, COUT), lambda bi, ji: (bi, 0, 0)),  # moments
    )
    out_shape = (
        jax.ShapeDtypeStruct((M, COUT), jnp.float32),
        jax.ShapeDtypeStruct((B, 2, COUT), jnp.float32),
    )
    cost = pl.CostEstimate(
        flops=B * (2 * N * CIN * (H + 1) * COUT
                   + (H + 1) * 2 * N * N * COUT + 10 * H * N * N),
        transcendentals=B * (H * N * N + N * CIN),
        bytes_accessed=4 * (M * CIN + M * COUT + 2 * B * N * 8)
        + 2 * CIN * (H + 1) * COUT,
    )
    return pl.pallas_call(
        _lieconv_kernel,
        out_shape=out_shape,
        grid=(B, njt),
        in_specs=in_specs,
        out_specs=out_specs,
        scratch_shapes=[pltpu.VMEM((N, COUT), jnp.float32)],
        compiler_params=pltpu.CompilerParams(
            dimension_semantics=("parallel", "arbitrary"),
            vmem_limit_bytes=_VMEM_LIMIT,
        ),
        cost_estimate=cost,
    )(qinfo, kinfo, h, stats, g, b, w1, b1, wall, bl)


# --------------------------------------------------------------------------
# Parameters (deterministic synthetic init — shapes follow SeqMolec.__init__)
# --------------------------------------------------------------------------
def init_params(key, num_species, k, num_layers, weightnet_hidden=8, cm=4):
    k4 = k // 4
    counter = [0]

    def nxt():
        counter[0] += 1
        return jax.random.fold_in(key, counter[0])

    def dense(fan_in, fan_out):
        w = jax.random.normal(nxt(), (fan_in, fan_out), jnp.float32) / jnp.sqrt(
            float(fan_in))
        b = jnp.zeros((1, fan_out), jnp.float32)
        return w, b

    def bn(c):
        return jnp.ones((1, c), jnp.float32), jnp.zeros((1, c), jnp.float32)

    params = {}
    params["embed_w"], params["embed_b"] = dense(num_species, k)

    blocks = []
    for _ in range(num_layers):
        blk = {}
        blk["bn1_g"], blk["bn1_b"] = bn(k)
        blk["lin1_w"], blk["lin1_b"] = dense(k, k4)
        blk["bn2_g"], blk["bn2_b"] = bn(k4)
        conv = {}
        conv["w1"] = jax.random.normal(nxt(), (3, weightnet_hidden),
                                       jnp.float32) / jnp.sqrt(3.0)
        conv["b1"] = jnp.zeros((1, weightnet_hidden), jnp.float32)
        conv["w2"] = jax.random.normal(nxt(), (weightnet_hidden, cm),
                                       jnp.float32) / jnp.sqrt(
                                           float(weightnet_hidden))
        conv["b2"] = jnp.zeros((1, cm), jnp.float32)
        conv["wl"], conv["bl"] = dense(cm * k4, k4)
        blk["conv"] = conv
        blk["bn3_g"], blk["bn3_b"] = bn(k4)
        blk["lin2_w"], blk["lin2_b"] = dense(k4, k)
        blocks.append(blk)
    params["blocks"] = blocks

    params["bnf_g"], params["bnf_b"] = bn(k)
    params["head_w"], params["head_b"] = dense(k, num_species + k)
    return params


# --------------------------------------------------------------------------
# SeqMolec.forward:  simple_lift(T(3), x, 1) -> body(lifted_x)
# Returns (coords, features [B,N,S+k], mask), like the torch module.
# --------------------------------------------------------------------------
def seqmolec_forward(params, coords, feats, mask):
    B, N, S = feats.shape
    M = B * N
    k = params["embed_w"].shape[1]

    maskf = mask.astype(jnp.float32)                          # [B, N]
    mcol = maskf.reshape(M, 1)
    inv_count = 1.0 / jnp.maximum(jnp.sum(maskf), 1.0)        # exact divide

    # Hoisted per-query geometry: causal neighbour counts depend only on the
    # mask, identical across layers -> compute once with an exact divide and
    # pack with coords.  qinfo lanes: (x, y, z, 1/cnt, mask); kinfo rows:
    # (x, y, z, mask) so the neighbour side is lane-dense [B, 8, N].
    cnt = jnp.maximum(jnp.cumsum(maskf, axis=1), 1.0)         # [B, N]
    qinfo = jnp.zeros((B, N, 8), jnp.float32)
    qinfo = qinfo.at[:, :, 0:3].set(coords)
    qinfo = qinfo.at[:, :, 3].set(1.0 / cnt)
    qinfo = qinfo.at[:, :, 4].set(maskf)
    kinfo = jnp.zeros((B, 8, N), jnp.float32)
    kinfo = kinfo.at[:, 0:3, :].set(jnp.swapaxes(coords, 1, 2))
    kinfo = kinfo.at[:, 3, :].set(maskf)

    # Pass(Linear(num_species, k), dim=1): feats is exactly one-hot by
    # construction, so the K=S matmul is replaced by a row gather.
    species = jnp.argmax(feats, axis=-1).reshape(-1)
    v = params["embed_w"][species] + params["embed_b"]        # [M, k]

    # Initial masked BN statistics of the embedding (tiny plain-JAX reduction;
    # every later statistic comes fused out of the producing kernel).
    vz = v * mcol
    stats = _finalize_stats(
        jnp.stack([jnp.sum(vz, axis=0), jnp.sum(vz * vz, axis=0)]), inv_count)

    # num_layers x BottleBlock(k, k, LieConvAutoregressive, bn=True)
    for blk in params["blocks"]:
        conv = blk["conv"]
        H, CM = conv["w2"].shape
        k4 = blk["lin1_w"].shape[1]
        COUT = conv["wl"].shape[1]

        # Fold WeightNet hidden->CM mixing and the CM*CIN->COUT projection into
        # one lane-dense matrix: column block 0 = b2.wl, block h+1 = w2[h].wl.
        wl_r = conv["wl"].reshape(CM, k4, COUT)
        wcomb = jnp.einsum("hm,mio->hio", conv["w2"], wl_r)   # [H, k4, COUT]
        wb = jnp.einsum("m,mio->io", conv["b2"][0], wl_r)     # [k4, COUT]
        wall = jnp.concatenate([wb[None], wcomb], axis=0)     # [H+1, k4, COUT]
        wall = jnp.transpose(wall, (1, 0, 2)).reshape(k4, (H + 1) * COUT)
        wall = wall.astype(jnp.bfloat16)

        h, mom_h = bn_swish_linear(v, mcol, stats,
                                   blk["bn1_g"], blk["bn1_b"],
                                   blk["lin1_w"], blk["lin1_b"])
        stats_h = _finalize_stats(jnp.sum(mom_h, axis=0), inv_count)

        c, mom_c = lieconv(qinfo, kinfo, h, stats_h,
                           blk["bn2_g"], blk["bn2_b"],
                           conv["w1"], conv["b1"], wall, conv["bl"])
        stats_c = _finalize_stats(jnp.sum(mom_c, axis=0), inv_count)

        v, mom_v = bn_swish_linear(c, mcol, stats_c,
                                   blk["bn3_g"], blk["bn3_b"],
                                   blk["lin2_w"], blk["lin2_b"], residual=v)
        stats = _finalize_stats(jnp.sum(mom_v, axis=0), inv_count)

    # MaskBatchNormNd(k) -> Swish -> Linear(k, num_species + k)
    out, _ = bn_swish_linear(v, mcol, stats, params["bnf_g"], params["bnf_b"],
                             params["head_w"], params["head_b"])
    return coords, out.reshape(B, N, S + k), mask


# --------------------------------------------------------------------------
if __name__ == "__main__":
    key = jax.random.PRNGKey(0)
    B, N = 2, 8            # N includes the CoM/start token at index 0
    NUM_SPECIES = 6
    K = 32                 # channel width (k), divisible by 4
    NUM_LAYERS = 3

    kp, kc, ks = jax.random.split(key, 3)
    params = init_params(kp, NUM_SPECIES, K, NUM_LAYERS)

    # featurize-style inputs: coords / one-hot species (column 0 = start) / mask
    coords = jax.random.normal(kc, (B, N, 3), jnp.float32)
    species = jax.random.randint(ks, (B, N), 1, NUM_SPECIES)
    species = species.at[:, 0].set(0)                       # start token
    feats = jax.nn.one_hot(species, NUM_SPECIES, dtype=jnp.float32)
    mask = jnp.ones((B, N), dtype=bool)
    mask = mask.at[:, 0].set(False)                         # start token masked
    mask = mask.at[1, -1].set(False)                        # padded atom

    fwd = jax.jit(seqmolec_forward)
    xyz_out, feats_out, mask_out = fwd(params, coords, feats, mask)
    jax.block_until_ready(feats_out)

    assert xyz_out.shape == (B, N, 3)
    assert feats_out.shape == (B, N, NUM_SPECIES + K)
    assert mask_out.shape == (B, N)
    assert bool(jnp.isfinite(feats_out).all())
    print("KERNEL_OK")
</pallas_src>

<mosaic_0001>
module attributes {stable_mosaic.version = 11 : i64} {
  func.func @_bn_swish_linear_kernel(%arg0: i32, %arg1: memref<8x32xf32, #tpu.memory_space<vmem>>, %arg2: memref<8x1xf32, #tpu.memory_space<vmem>>, %arg3: memref<2x32xf32, #tpu.memory_space<vmem>>, %arg4: memref<1x32xf32, #tpu.memory_space<vmem>>, %arg5: memref<1x32xf32, #tpu.memory_space<vmem>>, %arg6: memref<32x8xbf16, #tpu.memory_space<vmem>>, %arg7: memref<1x8xf32, #tpu.memory_space<vmem>>, %arg8: memref<8x8xf32, #tpu.memory_space<vmem>>, %arg9: memref<1x2x8xf32, #tpu.memory_space<vmem>>) attributes {dimension_semantics = [#tpu.dimension_semantics<parallel>], iteration_bounds = array<i64: 2>, scalar_prefetch = 0 : i64, scratch_operands = 0 : i64, tpu.core_type = #tpu.core_type<tc>, window_params = [{transform_indices = @transform_0, window_bounds = array<i64: 8, 32>}, {transform_indices = @transform_1, window_bounds = array<i64: 8, 1>}, {pipeline_mode = #tpu.pipeline_mode<synchronous>, transform_indices = @transform_2, window_bounds = array<i64: 2, 32>}, {pipeline_mode = #tpu.pipeline_mode<synchronous>, transform_indices = @transform_3, window_bounds = array<i64: 1, 32>}, {pipeline_mode = #tpu.pipeline_mode<synchronous>, transform_indices = @transform_4, window_bounds = array<i64: 1, 32>}, {pipeline_mode = #tpu.pipeline_mode<synchronous>, transform_indices = @transform_5, window_bounds = array<i64: 32, 8>}, {pipeline_mode = #tpu.pipeline_mode<synchronous>, transform_indices = @transform_6, window_bounds = array<i64: 1, 8>}, {transform_indices = @transform_7, window_bounds = array<i64: 8, 8>}, {transform_indices = @transform_8, window_bounds = array<i64: 1, 2, 8>}]} {
    %c0 = arith.constant 0 : index
    %c0_0 = arith.constant 0 : index
    %0 = vector.load %arg2[%c0, %c0_0] : memref<8x1xf32, #tpu.memory_space<vmem>>, vector<8x1xf32>
    %c0_1 = arith.constant 0 : index
    %c0_2 = arith.constant 0 : index
    %1 = vector.load %arg1[%c0_1, %c0_2] : memref<8x32xf32, #tpu.memory_space<vmem>>, vector<8x32xf32>
    %2 = vector.broadcast %0 : vector<8x1xf32> to vector<8x32xf32>
    %3 = arith.mulf %1, %2 : vector<8x32xf32>
    %c0_3 = arith.constant 0 : index
    %c0_4 = arith.constant 0 : index
    %4 = vector.load %arg3[%c0_3, %c0_4] : memref<2x32xf32, #tpu.memory_space<vmem>>, vector<2x32xf32>
    %c0_5 = arith.constant 0 : index
    %c0_6 = arith.constant 0 : index
    %5 = vector.load %arg4[%c0_5, %c0_6] : memref<1x32xf32, #tpu.memory_space<vmem>>, vector<1x32xf32>
    %c0_7 = arith.constant 0 : index
    %c0_8 = arith.constant 0 : index
    %6 = vector.load %arg5[%c0_7, %c0_8] : memref<1x32xf32, #tpu.memory_space<vmem>>, vector<1x32xf32>
    %7 = vector.extract_strided_slice %4 {offsets = [0, 0], sizes = [1, 32], strides = [1, 1]} : vector<2x32xf32> to vector<1x32xf32>
    %8 = vector.extract_strided_slice %4 {offsets = [1, 0], sizes = [1, 32], strides = [1, 1]} : vector<2x32xf32> to vector<1x32xf32>
    %9 = vector.broadcast %7 : vector<1x32xf32> to vector<8x32xf32>
    %10 = arith.subf %3, %9 : vector<8x32xf32>
    %11 = vector.broadcast %8 : vector<1x32xf32> to vector<8x32xf32>
    %12 = arith.mulf %10, %11 : vector<8x32xf32>
    %13 = vector.broadcast %5 : vector<1x32xf32> to vector<8x32xf32>
    %14 = arith.mulf %13, %12 : vector<8x32xf32>
    %15 = vector.broadcast %6 : vector<1x32xf32> to vector<8x32xf32>
    %16 = arith.addf %14, %15 : vector<8x32xf32>
    %cst = arith.constant 0.000000e+00 : f32
    %17 = vector.broadcast %cst : f32 to vector<8x32xf32>
    %18 = arith.subf %17, %16 : vector<8x32xf32>
    %19 = math.exp %18 : vector<8x32xf32>
    %cst_9 = arith.constant 1.000000e+00 : f32
    %20 = vector.broadcast %cst_9 : f32 to vector<8x32xf32>
    %21 = arith.addf %20, %19 : vector<8x32xf32>
    %22 = tpu.reciprocal %21 {approx = true} : vector<8x32xf32> -> vector<8x32xf32>
    %23 = arith.mulf %16, %22 : vector<8x32xf32>
    %24 = arith.truncf %23 : vector<8x32xf32> to vector<8x32xbf16>
    %c0_10 = arith.constant 0 : index
    %c0_11 = arith.constant 0 : index
    %25 = vector.load %arg6[%c0_10, %c0_11] : memref<32x8xbf16, #tpu.memory_space<vmem>>, vector<32x8xbf16>
    %cst_12 = arith.constant dense<0.000000e+00> : vector<8x8xf32>
    %26 = tpu.matmul %24, %25, %cst_12 {dimension_numbers = #tpu.dot_dimension_numbers<[1], [0], [0], [1], [0, 0, 1, 1], [], []>} : vector<8x32xbf16>, vector<32x8xbf16>, vector<8x8xf32> -> vector<8x8xf32>
    %c0_13 = arith.constant 0 : index
    %c0_14 = arith.constant 0 : index
    %27 = vector.load %arg7[%c0_13, %c0_14] : memref<1x8xf32, #tpu.memory_space<vmem>>, vector<1x8xf32>
    %28 = vector.broadcast %27 : vector<1x8xf32> to vector<8x8xf32>
    %29 = arith.addf %26, %28 : vector<8x8xf32>
    %c0_15 = arith.constant 0 : index
    %c0_16 = arith.constant 0 : index
    %30 = vector.load %arg8[%c0_15, %c0_16] : memref<8x8xf32, #tpu.memory_space<vmem>>, vector<8x8xf32>
    tpu.vector_store %arg8[%c0_15, %c0_16], %29 {strides = array<i32>} : memref<8x8xf32, #tpu.memory_space<vmem>>, vector<8x8xf32>,
    %31 = vector.broadcast %0 : vector<8x1xf32> to vector<8x8xf32>
    %32 = arith.mulf %29, %31 : vector<8x8xf32>
    %cst_17 = arith.constant dense<0.000000e+00> : vector<8xf32>
    %33 = vector.multi_reduction <add>, %32, %cst_17 [0] : vector<8x8xf32> to vector<8xf32>
    %34 = vector.shape_cast %33 : vector<8xf32> to vector<1x8xf32>
    %c0_18 = arith.constant 0 : index
    %c0_19 = arith.constant 0 : index
    %c0_20 = arith.constant 0 : index
    %35 = vector.load %arg9[%c0_18, %c0_19, %c0_20] : memref<1x2x8xf32, #tpu.memory_space<vmem>>, vector<1x1x8xf32>
    %36 = vector.shape_cast %35 : vector<1x1x8xf32> to vector<1x8xf32>
    %37 = vector.shape_cast %34 : vector<1x8xf32> to vector<1x1x8xf32>
    tpu.vector_store %arg9[%c0_18, %c0_19, %c0_20], %37 {strides = array<i32>} : memref<1x2x8xf32, #tpu.memory_space<vmem>>, vector<1x1x8xf32>,
    %38 = arith.mulf %32, %32 : vector<8x8xf32>
    %cst_21 = arith.constant dense<0.000000e+00> : vector<8xf32>
    %39 = vector.multi_reduction <add>, %38, %cst_21 [0] : vector<8x8xf32> to vector<8xf32>
    %40 = vector.shape_cast %39 : vector<8xf32> to vector<1x8xf32>
    %c0_22 = arith.constant 0 : index
    %c1 = arith.constant 1 : index
    %c0_23 = arith.constant 0 : index
    %41 = vector.load %arg9[%c0_22, %c1, %c0_23] : memref<1x2x8xf32, #tpu.memory_space<vmem>>, vector<1x1x8xf32>
    %42 = vector.shape_cast %41 : vector<1x1x8xf32> to vector<1x8xf32>
    %43 = vector.shape_cast %40 : vector<1x8xf32> to vector<1x1x8xf32>
    tpu.vector_store %arg9[%c0_22, %c1, %c0_23], %43 {strides = array<i32>} : memref<1x2x8xf32, #tpu.memory_space<vmem>>, vector<1x1x8xf32>,
    return
  }
  func.func @transform_0(%arg0: i32) -> (i32, i32) {
    %c0_i32 = arith.constant 0 : i32
    %c0_i32_0 = arith.constant 0 : i32
    return %arg0, %c0_i32 : i32, i32
  }
  func.func @transform_1(%arg0: i32) -> (i32, i32) {
    %c0_i32 = arith.constant 0 : i32
    %c0_i32_0 = arith.constant 0 : i32
    return %arg0, %c0_i32 : i32, i32
  }
  func.func @transform_2(%arg0: i32) -> (i32, i32) {
    %c0_i32 = arith.constant 0 : i32
    %c0_i32_0 = arith.constant 0 : i32
    %c0_i32_1 = arith.constant 0 : i32
    return %c0_i32, %c0_i32_0 : i32, i32
  }
  func.func @transform_3(%arg0: i32) -> (i32, i32) {
    %c0_i32 = arith.constant 0 : i32
    %c0_i32_0 = arith.constant 0 : i32
    %c0_i32_1 = arith.constant 0 : i32
    return %c0_i32, %c0_i32_0 : i32, i32
  }
  func.func @transform_4(%arg0: i32) -> (i32, i32) {
    %c0_i32 = arith.constant 0 : i32
    %c0_i32_0 = arith.constant 0 : i32
    %c0_i32_1 = arith.constant 0 : i32
    return %c0_i32, %c0_i32_0 : i32, i32
  }
  func.func @transform_5(%arg0: i32) -> (i32, i32) {
    %c0_i32 = arith.constant 0 : i32
    %c0_i32_0 = arith.constant 0 : i32
    %c0_i32_1 = arith.constant 0 : i32
    return %c0_i32, %c0_i32_0 : i32, i32
  }
  func.func @transform_6(%arg0: i32) -> (i32, i32) {
    %c0_i32 = arith.constant 0 : i32
    %c0_i32_0 = arith.constant 0 : i32
    %c0_i32_1 = arith.constant 0 : i32
    return %c0_i32, %c0_i32_0 : i32, i32
  }
  func.func @transform_7(%arg0: i32) -> (i32, i32) {
    %c0_i32 = arith.constant 0 : i32
    %c0_i32_0 = arith.constant 0 : i32
    return %arg0, %c0_i32 : i32, i32
  }
  func.func @transform_8(%arg0: i32) -> (i32, i32, i32) {
    %c0_i32 = arith.constant 0 : i32
    %c0_i32_0 = arith.constant 0 : i32
    %c0_i32_1 = arith.constant 0 : i32
    return %arg0, %c0_i32, %c0_i32_0 : i32, i32, i32
  }
}

module attributes {stable_mosaic.version = 11 : i64} {
  func.func @_lieconv_kernel(%arg0: i32, %arg1: i32, %arg2: memref<1x8x8xf32, #tpu.memory_space<vmem>>, %arg3: memref<1x8x8xf32, #tpu.memory_space<vmem>>, %arg4: memref<8x8xf32, #tpu.memory_space<vmem>>, %arg5: memref<2x8xf32, #tpu.memory_space<vmem>>, %arg6: memref<1x8xf32, #tpu.memory_space<vmem>>, %arg7: memref<1x8xf32, #tpu.memory_space<vmem>>, %arg8: memref<3x8xf32, #tpu.memory_space<smem>>, %arg9: memref<1x8xf32, #tpu.memory_space<smem>>, %arg10: memref<8x72xbf16, #tpu.memory_space<vmem>>, %arg11: memref<1x8xf32, #tpu.memory_space<vmem>>, %arg12: memref<8x8xf32, #tpu.memory_space<vmem>>, %arg13: memref<1x2x8xf32, #tpu.memory_space<vmem>>, %arg14: memref<8x8xf32, #tpu.memory_space<vmem>>) attributes {dimension_semantics = [#tpu.dimension_semantics<parallel>, #tpu.dimension_semantics<arbitrary>], iteration_bounds = array<i64: 2, 1>, scalar_prefetch = 0 : i64, scratch_operands = 1 : i64, tpu.core_type = #tpu.core_type<tc>, window_params = [{transform_indices = @transform_0, window_bounds = array<i64: 1, 8, 8>}, {transform_indices = @transform_1, window_bounds = array<i64: 1, 8, 8>}, {transform_indices = @transform_2, window_bounds = array<i64: 8, 8>}, {pipeline_mode = #tpu.pipeline_mode<synchronous>, transform_indices = @transform_3, window_bounds = array<i64: 2, 8>}, {pipeline_mode = #tpu.pipeline_mode<synchronous>, transform_indices = @transform_4, window_bounds = array<i64: 1, 8>}, {pipeline_mode = #tpu.pipeline_mode<synchronous>, transform_indices = @transform_5, window_bounds = array<i64: 1, 8>}, {transform_indices = @transform_6, window_bounds = array<i64: 3, 8>}, {transform_indices = @transform_7, window_bounds = array<i64: 1, 8>}, {pipeline_mode = #tpu.pipeline_mode<synchronous>, transform_indices = @transform_8, window_bounds = array<i64: 8, 72>}, {pipeline_mode = #tpu.pipeline_mode<synchronous>, transform_indices = @transform_9, window_bounds = array<i64: 1, 8>}, {transform_indices = @transform_10, window_bounds = array<i64: 8, 8>}, {transform_indices = @transform_11, window_bounds = array<i64: 1, 2, 8>}]} {
    %c0 = arith.constant 0 : index
    %c0_0 = arith.constant 0 : index
    %c0_1 = arith.constant 0 : index
    %0 = vector.load %arg2[%c0, %c0_0, %c0_1] : memref<1x8x8xf32, #tpu.memory_space<vmem>>, vector<1x8x8xf32>
    %1 = vector.shape_cast %0 : vector<1x8x8xf32> to vector<8x8xf32>
    %c0_2 = arith.constant 0 : index
    %c0_3 = arith.constant 0 : index
    %c0_4 = arith.constant 0 : index
    %2 = vector.load %arg3[%c0_2, %c0_3, %c0_4] : memref<1x8x8xf32, #tpu.memory_space<vmem>>, vector<1x8x8xf32>
    %3 = vector.shape_cast %2 : vector<1x8x8xf32> to vector<8x8xf32>
    %c0_5 = arith.constant 0 : index
    %c0_6 = arith.constant 0 : index
    %4 = vector.load %arg4[%c0_5, %c0_6] : memref<8x8xf32, #tpu.memory_space<vmem>>, vector<8x8xf32>
    %c0_7 = arith.constant 0 : index
    %c0_8 = arith.constant 0 : index
    %5 = vector.load %arg5[%c0_7, %c0_8] : memref<2x8xf32, #tpu.memory_space<vmem>>, vector<2x8xf32>
    %c0_9 = arith.constant 0 : index
    %c0_10 = arith.constant 0 : index
    %6 = vector.load %arg6[%c0_9, %c0_10] : memref<1x8xf32, #tpu.memory_space<vmem>>, vector<1x8xf32>
    %c0_11 = arith.constant 0 : index
    %c0_12 = arith.constant 0 : index
    %7 = vector.load %arg7[%c0_11, %c0_12] : memref<1x8xf32, #tpu.memory_space<vmem>>, vector<1x8xf32>
    %8 = vector.extract_strided_slice %5 {offsets = [0, 0], sizes = [1, 8], strides = [1, 1]} : vector<2x8xf32> to vector<1x8xf32>
    %9 = vector.extract_strided_slice %5 {offsets = [1, 0], sizes = [1, 8], strides = [1, 1]} : vector<2x8xf32> to vector<1x8xf32>
    %10 = vector.broadcast %8 : vector<1x8xf32> to vector<8x8xf32>
    %11 = arith.subf %4, %10 : vector<8x8xf32>
    %12 = vector.broadcast %9 : vector<1x8xf32> to vector<8x8xf32>
    %13 = arith.mulf %11, %12 : vector<8x8xf32>
    %14 = vector.broadcast %6 : vector<1x8xf32> to vector<8x8xf32>
    %15 = arith.mulf %14, %13 : vector<8x8xf32>
    %16 = vector.broadcast %7 : vector<1x8xf32> to vector<8x8xf32>
    %17 = arith.addf %15, %16 : vector<8x8xf32>
    %cst = arith.constant 0.000000e+00 : f32
    %18 = vector.broadcast %cst : f32 to vector<8x8xf32>
    %19 = arith.subf %18, %17 : vector<8x8xf32>
    %20 = math.exp %19 : vector<8x8xf32>
    %cst_13 = arith.constant 1.000000e+00 : f32
    %21 = vector.broadcast %cst_13 : f32 to vector<8x8xf32>
    %22 = arith.addf %21, %20 : vector<8x8xf32>
    %23 = tpu.reciprocal %22 {approx = true} : vector<8x8xf32> -> vector<8x8xf32>
    %24 = arith.mulf %17, %23 : vector<8x8xf32>
    %25 = arith.truncf %24 : vector<8x8xf32> to vector<8x8xbf16>
    %c0_14 = arith.constant 0 : index
    %c0_15 = arith.constant 0 : index
    %26 = vector.load %arg10[%c0_14, %c0_15] : memref<8x72xbf16, #tpu.memory_space<vmem>>, vector<8x72xbf16>
    %cst_16 = arith.constant dense<0.000000e+00> : vector<8x72xf32>
    %27 = tpu.matmul %25, %26, %cst_16 {dimension_numbers = #tpu.dot_dimension_numbers<[1], [0], [0], [1], [0, 0, 1, 1], [], []>} : vector<8x8xbf16>, vector<8x72xbf16>, vector<8x72xf32> -> vector<8x72xf32>
    %28 = arith.truncf %27 : vector<8x72xf32> to vector<8x72xbf16>
    %29 = vector.extract_strided_slice %1 {offsets = [0, 0], sizes = [8, 1], strides = [1, 1]} : vector<8x8xf32> to vector<8x1xf32>
    %30 = vector.extract_strided_slice %3 {offsets = [0, 0], sizes = [1, 8], strides = [1, 1]} : vector<8x8xf32> to vector<1x8xf32>
    %31 = vector.broadcast %29 : vector<8x1xf32> to vector<8x8xf32>
    %32 = vector.broadcast %30 : vector<1x8xf32> to vector<8x8xf32>
    %33 = arith.subf %31, %32 : vector<8x8xf32>
    %34 = vector.extract_strided_slice %1 {offsets = [0, 1], sizes = [8, 1], strides = [1, 1]} : vector<8x8xf32> to vector<8x1xf32>
    %35 = vector.extract_strided_slice %3 {offsets = [1, 0], sizes = [1, 8], strides = [1, 1]} : vector<8x8xf32> to vector<1x8xf32>
    %36 = vector.broadcast %34 : vector<8x1xf32> to vector<8x8xf32>
    %37 = vector.broadcast %35 : vector<1x8xf32> to vector<8x8xf32>
    %38 = arith.subf %36, %37 : vector<8x8xf32>
    %39 = vector.extract_strided_slice %1 {offsets = [0, 2], sizes = [8, 1], strides = [1, 1]} : vector<8x8xf32> to vector<8x1xf32>
    %40 = vector.extract_strided_slice %3 {offsets = [2, 0], sizes = [1, 8], strides = [1, 1]} : vector<8x8xf32> to vector<1x8xf32>
    %41 = vector.broadcast %39 : vector<8x1xf32> to vector<8x8xf32>
    %42 = vector.broadcast %40 : vector<1x8xf32> to vector<8x8xf32>
    %43 = arith.subf %41, %42 : vector<8x8xf32>
    %44 = vector.extract_strided_slice %3 {offsets = [3, 0], sizes = [1, 8], strides = [1, 1]} : vector<8x8xf32> to vector<1x8xf32>
    %45 = tpu.iota {dimensions = array<i32: 0>} : vector<8x8xi32>
    %46 = tpu.iota {dimensions = array<i32: 1>} : vector<8x8xi32>
    %c8_i32 = arith.constant 8 : i32
    %47 = arith.muli %arg1, %c8_i32 : i32
    %48 = vector.broadcast %47 : i32 to vector<8x8xi32>
    %49 = arith.addi %46, %48 : vector<8x8xi32>
    %50 = arith.cmpi sle, %49, %45 : vector<8x8xi32>
    %cst_17 = arith.constant 1.000000e+00 : f32
    %cst_18 = arith.constant 0.000000e+00 : f32
    %51 = vector.broadcast %cst_17 : f32 to vector<8x8xf32>
    %52 = vector.broadcast %cst_18 : f32 to vector<8x8xf32>
    %53 = arith.select %50, %51, %52 : vector<8x8xi1>, vector<8x8xf32>
    %54 = vector.broadcast %44 : vector<1x8xf32> to vector<8x8xf32>
    %55 = arith.mulf %53, %54 : vector<8x8xf32>
    %56 = arith.truncf %55 : vector<8x8xf32> to vector<8x8xbf16>
    %57 = vector.extract_strided_slice %28 {offsets = [0, 0], sizes = [8, 8], strides = [1, 1]} : vector<8x72xbf16> to vector<8x8xbf16>
    %cst_19 = arith.constant dense<0.000000e+00> : vector<8x8xf32>
    %58 = tpu.matmul %56, %57, %cst_19 {dimension_numbers = #tpu.dot_dimension_numbers<[1], [0], [0], [1], [0, 0, 1, 1], [], []>} : vector<8x8xbf16>, vector<8x8xbf16>, vector<8x8xf32> -> vector<8x8xf32>
    %c0_20 = arith.constant 0 : index
    %c0_21 = arith.constant 0 : index
    %59 = memref.load %arg8[%c0_20, %c0_21] : memref<3x8xf32, #tpu.memory_space<smem>>
    %60 = vector.broadcast %59 : f32 to vector<8x8xf32>
    %61 = arith.mulf %33, %60 : vector<8x8xf32>
    %c1 = arith.constant 1 : index
    %c0_22 = arith.constant 0 : index
    %62 = memref.load %arg8[%c1, %c0_22] : memref<3x8xf32, #tpu.memory_space<smem>>
    %63 = vector.broadcast %62 : f32 to vector<8x8xf32>
    %64 = arith.mulf %38, %63 : vector<8x8xf32>
    %65 = arith.addf %61, %64 : vector<8x8xf32>
    %c2 = arith.constant 2 : index
    %c0_23 = arith.constant 0 : index
    %66 = memref.load %arg8[%c2, %c0_23] : memref<3x8xf32, #tpu.memory_space<smem>>
    %67 = vector.broadcast %66 : f32 to vector<8x8xf32>
    %68 = arith.mulf %43, %67 : vector<8x8xf32>
    %69 = arith.addf %65, %68 : vector<8x8xf32>
    %c0_24 = arith.constant 0 : index
    %c0_25 = arith.constant 0 : index
    %70 = memref.load %arg9[%c0_24, %c0_25] : memref<1x8xf32, #tpu.memory_space<smem>>
    %71 = vector.broadcast %70 : f32 to vector<8x8xf32>
    %72 = arith.addf %69, %71 : vector<8x8xf32>
    %cst_26 = arith.constant 0.000000e+00 : f32
    %73 = vector.broadcast %cst_26 : f32 to vector<8x8xf32>
    %74 = arith.subf %73, %72 : vector<8x8xf32>
    %75 = math.exp %74 : vector<8x8xf32>
    %cst_27 = arith.constant 1.000000e+00 : f32
    %76 = vector.broadcast %cst_27 : f32 to vector<8x8xf32>
    %77 = arith.addf %76, %75 : vector<8x8xf32>
    %78 = tpu.reciprocal %77 {approx = true} : vector<8x8xf32> -> vector<8x8xf32>
    %79 = arith.mulf %72, %78 : vector<8x8xf32>
    %80 = arith.mulf %79, %55 : vector<8x8xf32>
    %81 = arith.truncf %80 : vector<8x8xf32> to vector<8x8xbf16>
    %82 = vector.extract_strided_slice %28 {offsets = [0, 8], sizes = [8, 8], strides = [1, 1]} : vector<8x72xbf16> to vector<8x8xbf16>
    %cst_28 = arith.constant dense<0.000000e+00> : vector<8x8xf32>
    %83 = tpu.matmul %81, %82, %cst_28 {dimension_numbers = #tpu.dot_dimension_numbers<[1], [0], [0], [1], [0, 0, 1, 1], [], []>} : vector<8x8xbf16>, vector<8x8xbf16>, vector<8x8xf32> -> vector<8x8xf32>
    %84 = arith.addf %58, %83 : vector<8x8xf32>
    %c0_29 = arith.constant 0 : index
    %c1_30 = arith.constant 1 : index
    %85 = memref.load %arg8[%c0_29, %c1_30] : memref<3x8xf32, #tpu.memory_space<smem>>
    %86 = vector.broadcast %85 : f32 to vector<8x8xf32>
    %87 = arith.mulf %33, %86 : vector<8x8xf32>
    %c1_31 = arith.constant 1 : index
    %c1_32 = arith.constant 1 : index
    %88 = memref.load %arg8[%c1_31, %c1_32] : memref<3x8xf32, #tpu.memory_space<smem>>
    %89 = vector.broadcast %88 : f32 to vector<8x8xf32>
    %90 = arith.mulf %38, %89 : vector<8x8xf32>
    %91 = arith.addf %87, %90 : vector<8x8xf32>
    %c2_33 = arith.constant 2 : index
    %c1_34 = arith.constant 1 : index
    %92 = memref.load %arg8[%c2_33, %c1_34] : memref<3x8xf32, #tpu.memory_space<smem>>
    %93 = vector.broadcast %92 : f32 to vector<8x8xf32>
    %94 = arith.mulf %43, %93 : vector<8x8xf32>
    %95 = arith.addf %91, %94 : vector<8x8xf32>
    %c0_35 = arith.constant 0 : index
    %c1_36 = arith.constant 1 : index
    %96 = memref.load %arg9[%c0_35, %c1_36] : memref<1x8xf32, #tpu.memory_space<smem>>
    %97 = vector.broadcast %96 : f32 to vector<8x8xf32>
    %98 = arith.addf %95, %97 : vector<8x8xf32>
    %cst_37 = arith.constant 0.000000e+00 : f32
    %99 = vector.broadcast %cst_37 : f32 to vector<8x8xf32>
    %100 = arith.subf %99, %98 : vector<8x8xf32>
    %101 = math.exp %100 : vector<8x8xf32>
    %cst_38 = arith.constant 1.000000e+00 : f32
    %102 = vector.broadcast %cst_38 : f32 to vector<8x8xf32>
    %103 = arith.addf %102, %101 : vector<8x8xf32>
    %104 = tpu.reciprocal %103 {approx = true} : vector<8x8xf32> -> vector<8x8xf32>
    %105 = arith.mulf %98, %104 : vector<8x8xf32>
    %106 = arith.mulf %105, %55 : vector<8x8xf32>
    %107 = arith.truncf %106 : vector<8x8xf32> to vector<8x8xbf16>
    %108 = vector.extract_strided_slice %28 {offsets = [0, 16], sizes = [8, 8], strides = [1, 1]} : vector<8x72xbf16> to vector<8x8xbf16>
    %cst_39 = arith.constant dense<0.000000e+00> : vector<8x8xf32>
    %109 = tpu.matmul %107, %108, %cst_39 {dimension_numbers = #tpu.dot_dimension_numbers<[1], [0], [0], [1], [0, 0, 1, 1], [], []>} : vector<8x8xbf16>, vector<8x8xbf16>, vector<8x8xf32> -> vector<8x8xf32>
    %110 = arith.addf %84, %109 : vector<8x8xf32>
    %c0_40 = arith.constant 0 : index
    %c2_41 = arith.constant 2 : index
    %111 = memref.load %arg8[%c0_40, %c2_41] : memref<3x8xf32, #tpu.memory_space<smem>>
    %112 = vector.broadcast %111 : f32 to vector<8x8xf32>
    %113 = arith.mulf %33, %112 : vector<8x8xf32>
    %c1_42 = arith.constant 1 : index
    %c2_43 = arith.constant 2 : index
    %114 = memref.load %arg8[%c1_42, %c2_43] : memref<3x8xf32, #tpu.memory_space<smem>>
    %115 = vector.broadcast %114 : f32 to vector<8x8xf32>
    %116 = arith.mulf %38, %115 : vector<8x8xf32>
    %117 = arith.addf %113, %116 : vector<8x8xf32>
    %c2_44 = arith.constant 2 : index
    %c2_45 = arith.constant 2 : index
    %118 = memref.load %arg8[%c2_44, %c2_45] : memref<3x8xf32, #tpu.memory_space<smem>>
    %119 = vector.broadcast %118 : f32 to vector<8x8xf32>
    %120 = arith.mulf %43, %119 : vector<8x8xf32>
    %121 = arith.addf %117, %120 : vector<8x8xf32>
    %c0_46 = arith.constant 0 : index
    %c2_47 = arith.constant 2 : index
    %122 = memref.load %arg9[%c0_46, %c2_47] : memref<1x8xf32, #tpu.memory_space<smem>>
    %123 = vector.broadcast %122 : f32 to vector<8x8xf32>
    %124 = arith.addf %121, %123 : vector<8x8xf32>
    %cst_48 = arith.constant 0.000000e+00 : f32
    %125 = vector.broadcast %cst_48 : f32 to vector<8x8xf32>
    %126 = arith.subf %125, %124 : vector<8x8xf32>
    %127 = math.exp %126 : vector<8x8xf32>
    %cst_49 = arith.constant 1.000000e+00 : f32
    %128 = vector.broadcast %cst_49 : f32 to vector<8x8xf32>
    %129 = arith.addf %128, %127 : vector<8x8xf32>
    %130 = tpu.reciprocal %129 {approx = true} : vector<8x8xf32> -> vector<8x8xf32>
    %131 = arith.mulf %124, %130 : vector<8x8xf32>
    %132 = arith.mulf %131, %55 : vector<8x8xf32>
    %133 = arith.truncf %132 : vector<8x8xf32> to vector<8x8xbf16>
    %134 = vector.extract_strided_slice %28 {offsets = [0, 24], sizes = [8, 8], strides = [1, 1]} : vector<8x72xbf16> to vector<8x8xbf16>
    %cst_50 = arith.constant dense<0.000000e+00> : vector<8x8xf32>
    %135 = tpu.matmul %133, %134, %cst_50 {dimension_numbers = #tpu.dot_dimension_numbers<[1], [0], [0], [1], [0, 0, 1, 1], [], []>} : vector<8x8xbf16>, vector<8x8xbf16>, vector<8x8xf32> -> vector<8x8xf32>
    %136 = arith.addf %110, %135 : vector<8x8xf32>
    %c0_51 = arith.constant 0 : index
    %c3 = arith.constant 3 : index
    %137 = memref.load %arg8[%c0_51, %c3] : memref<3x8xf32, #tpu.memory_space<smem>>
    %138 = vector.broadcast %137 : f32 to vector<8x8xf32>
    %139 = arith.mulf %33, %138 : vector<8x8xf32>
    %c1_52 = arith.constant 1 : index
    %c3_53 = arith.constant 3 : index
    %140 = memref.load %arg8[%c1_52, %c3_53] : memref<3x8xf32, #tpu.memory_space<smem>>
    %141 = vector.broadcast %140 : f32 to vector<8x8xf32>
    %142 = arith.mulf %38, %141 : vector<8x8xf32>
    %143 = arith.addf %139, %142 : vector<8x8xf32>
    %c2_54 = arith.constant 2 : index
    %c3_55 = arith.constant 3 : index
    %144 = memref.load %arg8[%c2_54, %c3_55] : memref<3x8xf32, #tpu.memory_space<smem>>
    %145 = vector.broadcast %144 : f32 to vector<8x8xf32>
    %146 = arith.mulf %43, %145 : vector<8x8xf32>
    %147 = arith.addf %143, %146 : vector<8x8xf32>
    %c0_56 = arith.constant 0 : index
    %c3_57 = arith.constant 3 : index
    %148 = memref.load %arg9[%c0_56, %c3_57] : memref<1x8xf32, #tpu.memory_space<smem>>
    %149 = vector.broadcast %148 : f32 to vector<8x8xf32>
    %150 = arith.addf %147, %149 : vector<8x8xf32>
    %cst_58 = arith.constant 0.000000e+00 : f32
    %151 = vector.broadcast %cst_58 : f32 to vector<8x8xf32>
    %152 = arith.subf %151, %150 : vector<8x8xf32>
    %153 = math.exp %152 : vector<8x8xf32>
    %cst_59 = arith.constant 1.000000e+00 : f32
    %154 = vector.broadcast %cst_59 : f32 to vector<8x8xf32>
    %155 = arith.addf %154, %153 : vector<8x8xf32>
    %156 = tpu.reciprocal %155 {approx = true} : vector<8x8xf32> -> vector<8x8xf32>
    %157 = arith.mulf %150, %156 : vector<8x8xf32>
    %158 = arith.mulf %157, %55 : vector<8x8xf32>
    %159 = arith.truncf %158 : vector<8x8xf32> to vector<8x8xbf16>
    %160 = vector.extract_strided_slice %28 {offsets = [0, 32], sizes = [8, 8], strides = [1, 1]} : vector<8x72xbf16> to vector<8x8xbf16>
    %cst_60 = arith.constant dense<0.000000e+00> : vector<8x8xf32>
    %161 = tpu.matmul %159, %160, %cst_60 {dimension_numbers = #tpu.dot_dimension_numbers<[1], [0], [0], [1], [0, 0, 1, 1], [], []>} : vector<8x8xbf16>, vector<8x8xbf16>, vector<8x8xf32> -> vector<8x8xf32>
    %162 = arith.addf %136, %161 : vector<8x8xf32>
    %c0_61 = arith.constant 0 : index
    %c4 = arith.constant 4 : index
    %163 = memref.load %arg8[%c0_61, %c4] : memref<3x8xf32, #tpu.memory_space<smem>>
    %164 = vector.broadcast %163 : f32 to vector<8x8xf32>
    %165 = arith.mulf %33, %164 : vector<8x8xf32>
    %c1_62 = arith.constant 1 : index
    %c4_63 = arith.constant 4 : index
    %166 = memref.load %arg8[%c1_62, %c4_63] : memref<3x8xf32, #tpu.memory_space<smem>>
    %167 = vector.broadcast %166 : f32 to vector<8x8xf32>
    %168 = arith.mulf %38, %167 : vector<8x8xf32>
    %169 = arith.addf %165, %168 : vector<8x8xf32>
    %c2_64 = arith.constant 2 : index
    %c4_65 = arith.constant 4 : index
    %170 = memref.load %arg8[%c2_64, %c4_65] : memref<3x8xf32, #tpu.memory_space<smem>>
    %171 = vector.broadcast %170 : f32 to vector<8x8xf32>
    %172 = arith.mulf %43, %171 : vector<8x8xf32>
    %173 = arith.addf %169, %172 : vector<8x8xf32>
    %c0_66 = arith.constant 0 : index
    %c4_67 = arith.constant 4 : index
    %174 = memref.load %arg9[%c0_66, %c4_67] : memref<1x8xf32, #tpu.memory_space<smem>>
    %175 = vector.broadcast %174 : f32 to vector<8x8xf32>
    %176 = arith.addf %173, %175 : vector<8x8xf32>
    %cst_68 = arith.constant 0.000000e+00 : f32
    %177 = vector.broadcast %cst_68 : f32 to vector<8x8xf32>
    %178 = arith.subf %177, %176 : vector<8x8xf32>
    %179 = math.exp %178 : vector<8x8xf32>
    %cst_69 = arith.constant 1.000000e+00 : f32
    %180 = vector.broadcast %cst_69 : f32 to vector<8x8xf32>
    %181 = arith.addf %180, %179 : vector<8x8xf32>
    %182 = tpu.reciprocal %181 {approx = true} : vector<8x8xf32> -> vector<8x8xf32>
    %183 = arith.mulf %176, %182 : vector<8x8xf32>
    %184 = arith.mulf %183, %55 : vector<8x8xf32>
    %185 = arith.truncf %184 : vector<8x8xf32> to vector<8x8xbf16>
    %186 = vector.extract_strided_slice %28 {offsets = [0, 40], sizes = [8, 8], strides = [1, 1]} : vector<8x72xbf16> to vector<8x8xbf16>
    %cst_70 = arith.constant dense<0.000000e+00> : vector<8x8xf32>
    %187 = tpu.matmul %185, %186, %cst_70 {dimension_numbers = #tpu.dot_dimension_numbers<[1], [0], [0], [1], [0, 0, 1, 1], [], []>} : vector<8x8xbf16>, vector<8x8xbf16>, vector<8x8xf32> -> vector<8x8xf32>
    %188 = arith.addf %162, %187 : vector<8x8xf32>
    %c0_71 = arith.constant 0 : index
    %c5 = arith.constant 5 : index
    %189 = memref.load %arg8[%c0_71, %c5] : memref<3x8xf32, #tpu.memory_space<smem>>
    %190 = vector.broadcast %189 : f32 to vector<8x8xf32>
    %191 = arith.mulf %33, %190 : vector<8x8xf32>
    %c1_72 = arith.constant 1 : index
    %c5_73 = arith.constant 5 : index
    %192 = memref.load %arg8[%c1_72, %c5_73] : memref<3x8xf32, #tpu.memory_space<smem>>
    %193 = vector.broadcast %192 : f32 to vector<8x8xf32>
    %194 = arith.mulf %38, %193 : vector<8x8xf32>
    %195 = arith.addf %191, %194 : vector<8x8xf32>
    %c2_74 = arith.constant 2 : index
    %c5_75 = arith.constant 5 : index
    %196 = memref.load %arg8[%c2_74, %c5_75] : memref<3x8xf32, #tpu.memory_space<smem>>
    %197 = vector.broadcast %196 : f32 to vector<8x8xf32>
    %198 = arith.mulf %43, %197 : vector<8x8xf32>
    %199 = arith.addf %195, %198 : vector<8x8xf32>
    %c0_76 = arith.constant 0 : index
    %c5_77 = arith.constant 5 : index
    %200 = memref.load %arg9[%c0_76, %c5_77] : memref<1x8xf32, #tpu.memory_space<smem>>
    %201 = vector.broadcast %200 : f32 to vector<8x8xf32>
    %202 = arith.addf %199, %201 : vector<8x8xf32>
    %cst_78 = arith.constant 0.000000e+00 : f32
    %203 = vector.broadcast %cst_78 : f32 to vector<8x8xf32>
    %204 = arith.subf %203, %202 : vector<8x8xf32>
    %205 = math.exp %204 : vector<8x8xf32>
    %cst_79 = arith.constant 1.000000e+00 : f32
    %206 = vector.broadcast %cst_79 : f32 to vector<8x8xf32>
    %207 = arith.addf %206, %205 : vector<8x8xf32>
    %208 = tpu.reciprocal %207 {approx = true} : vector<8x8xf32> -> vector<8x8xf32>
    %209 = arith.mulf %202, %208 : vector<8x8xf32>
    %210 = arith.mulf %209, %55 : vector<8x8xf32>
    %211 = arith.truncf %210 : vector<8x8xf32> to vector<8x8xbf16>
    %212 = vector.extract_strided_slice %28 {offsets = [0, 48], sizes = [8, 8], strides = [1, 1]} : vector<8x72xbf16> to vector<8x8xbf16>
    %cst_80 = arith.constant dense<0.000000e+00> : vector<8x8xf32>
    %213 = tpu.matmul %211, %212, %cst_80 {dimension_numbers = #tpu.dot_dimension_numbers<[1], [0], [0], [1], [0, 0, 1, 1], [], []>} : vector<8x8xbf16>, vector<8x8xbf16>, vector<8x8xf32> -> vector<8x8xf32>
    %214 = arith.addf %188, %213 : vector<8x8xf32>
    %c0_81 = arith.constant 0 : index
    %c6 = arith.constant 6 : index
    %215 = memref.load %arg8[%c0_81, %c6] : memref<3x8xf32, #tpu.memory_space<smem>>
    %216 = vector.broadcast %215 : f32 to vector<8x8xf32>
    %217 = arith.mulf %33, %216 : vector<8x8xf32>
    %c1_82 = arith.constant 1 : index
    %c6_83 = arith.constant 6 : index
    %218 = memref.load %arg8[%c1_82, %c6_83] : memref<3x8xf32, #tpu.memory_space<smem>>
    %219 = vector.broadcast %218 : f32 to vector<8x8xf32>
    %220 = arith.mulf %38, %219 : vector<8x8xf32>
    %221 = arith.addf %217, %220 : vector<8x8xf32>
    %c2_84 = arith.constant 2 : index
    %c6_85 = arith.constant 6 : index
    %222 = memref.load %arg8[%c2_84, %c6_85] : memref<3x8xf32, #tpu.memory_space<smem>>
    %223 = vector.broadcast %222 : f32 to vector<8x8xf32>
    %224 = arith.mulf %43, %223 : vector<8x8xf32>
    %225 = arith.addf %221, %224 : vector<8x8xf32>
    %c0_86 = arith.constant 0 : index
    %c6_87 = arith.constant 6 : index
    %226 = memref.load %arg9[%c0_86, %c6_87] : memref<1x8xf32, #tpu.memory_space<smem>>
    %227 = vector.broadcast %226 : f32 to vector<8x8xf32>
    %228 = arith.addf %225, %227 : vector<8x8xf32>
    %cst_88 = arith.constant 0.000000e+00 : f32
    %229 = vector.broadcast %cst_88 : f32 to vector<8x8xf32>
    %230 = arith.subf %229, %228 : vector<8x8xf32>
    %231 = math.exp %230 : vector<8x8xf32>
    %cst_89 = arith.constant 1.000000e+00 : f32
    %232 = vector.broadcast %cst_89 : f32 to vector<8x8xf32>
    %233 = arith.addf %232, %231 : vector<8x8xf32>
    %234 = tpu.reciprocal %233 {approx = true} : vector<8x8xf32> -> vector<8x8xf32>
    %235 = arith.mulf %228, %234 : vector<8x8xf32>
    %236 = arith.mulf %235, %55 : vector<8x8xf32>
    %237 = arith.truncf %236 : vector<8x8xf32> to vector<8x8xbf16>
    %238 = vector.extract_strided_slice %28 {offsets = [0, 56], sizes = [8, 8], strides = [1, 1]} : vector<8x72xbf16> to vector<8x8xbf16>
    %cst_90 = arith.constant dense<0.000000e+00> : vector<8x8xf32>
    %239 = tpu.matmul %237, %238, %cst_90 {dimension_numbers = #tpu.dot_dimension_numbers<[1], [0], [0], [1], [0, 0, 1, 1], [], []>} : vector<8x8xbf16>, vector<8x8xbf16>, vector<8x8xf32> -> vector<8x8xf32>
    %240 = arith.addf %214, %239 : vector<8x8xf32>
    %c0_91 = arith.constant 0 : index
    %c7 = arith.constant 7 : index
    %241 = memref.load %arg8[%c0_91, %c7] : memref<3x8xf32, #tpu.memory_space<smem>>
    %242 = vector.broadcast %241 : f32 to vector<8x8xf32>
    %243 = arith.mulf %33, %242 : vector<8x8xf32>
    %c1_92 = arith.constant 1 : index
    %c7_93 = arith.constant 7 : index
    %244 = memref.load %arg8[%c1_92, %c7_93] : memref<3x8xf32, #tpu.memory_space<smem>>
    %245 = vector.broadcast %244 : f32 to vector<8x8xf32>
    %246 = arith.mulf %38, %245 : vector<8x8xf32>
    %247 = arith.addf %243, %246 : vector<8x8xf32>
    %c2_94 = arith.constant 2 : index
    %c7_95 = arith.constant 7 : index
    %248 = memref.load %arg8[%c2_94, %c7_95] : memref<3x8xf32, #tpu.memory_space<smem>>
    %249 = vector.broadcast %248 : f32 to vector<8x8xf32>
    %250 = arith.mulf %43, %249 : vector<8x8xf32>
    %251 = arith.addf %247, %250 : vector<8x8xf32>
    %c0_96 = arith.constant 0 : index
    %c7_97 = arith.constant 7 : index
    %252 = memref.load %arg9[%c0_96, %c7_97] : memref<1x8xf32, #tpu.memory_space<smem>>
    %253 = vector.broadcast %252 : f32 to vector<8x8xf32>
    %254 = arith.addf %251, %253 : vector<8x8xf32>
    %cst_98 = arith.constant 0.000000e+00 : f32
    %255 = vector.broadcast %cst_98 : f32 to vector<8x8xf32>
    %256 = arith.subf %255, %254 : vector<8x8xf32>
    %257 = math.exp %256 : vector<8x8xf32>
    %cst_99 = arith.constant 1.000000e+00 : f32
    %258 = vector.broadcast %cst_99 : f32 to vector<8x8xf32>
    %259 = arith.addf %258, %257 : vector<8x8xf32>
    %260 = tpu.reciprocal %259 {approx = true} : vector<8x8xf32> -> vector<8x8xf32>
    %261 = arith.mulf %254, %260 : vector<8x8xf32>
    %262 = arith.mulf %261, %55 : vector<8x8xf32>
    %263 = arith.truncf %262 : vector<8x8xf32> to vector<8x8xbf16>
    %264 = vector.extract_strided_slice %28 {offsets = [0, 64], sizes = [8, 8], strides = [1, 1]} : vector<8x72xbf16> to vector<8x8xbf16>
    %cst_100 = arith.constant dense<0.000000e+00> : vector<8x8xf32>
    %265 = tpu.matmul %263, %264, %cst_100 {dimension_numbers = #tpu.dot_dimension_numbers<[1], [0], [0], [1], [0, 0, 1, 1], [], []>} : vector<8x8xbf16>, vector<8x8xbf16>, vector<8x8xf32> -> vector<8x8xf32>
    %266 = arith.addf %240, %265 : vector<8x8xf32>
    %c0_i32 = arith.constant 0 : i32
    %267 = arith.cmpi eq, %arg1, %c0_i32 : i32
    %268 = arith.extui %267 : i1 to i32
    %c0_i32_101 = arith.constant 0 : i32
    %269 = arith.cmpi ne, %268, %c0_i32_101 : i32
    scf.if %269 {
      %c0_106 = arith.constant 0 : index
      %c0_107 = arith.constant 0 : index
      %276 = vector.load %arg14[%c0_106, %c0_107] : memref<8x8xf32, #tpu.memory_space<vmem>>, vector<8x8xf32>
      tpu.vector_store %arg14[%c0_106, %c0_107], %266 {strides = array<i32>} : memref<8x8xf32, #tpu.memory_space<vmem>>, vector<8x8xf32>,
    } else {
    }
    %c0_i32_102 = arith.constant 0 : i32
    %270 = arith.cmpi sgt, %arg1, %c0_i32_102 : i32
    %271 = arith.extui %270 : i1 to i32
    %c0_i32_103 = arith.constant 0 : i32
    %272 = arith.cmpi ne, %271, %c0_i32_103 : i32
    scf.if %272 {
      %c0_106 = arith.constant 0 : index
      %c0_107 = arith.constant 0 : index
      %276 = vector.load %arg14[%c0_106, %c0_107] : memref<8x8xf32, #tpu.memory_space<vmem>>, vector<8x8xf32>
      %277 = arith.addf %276, %266 : vector<8x8xf32>
      %c0_108 = arith.constant 0 : index
      %c0_109 = arith.constant 0 : index
      %278 = vector.load %arg14[%c0_108, %c0_109] : memref<8x8xf32, #tpu.memory_space<vmem>>, vector<8x8xf32>
      tpu.vector_store %arg14[%c0_108, %c0_109], %277 {strides = array<i32>} : memref<8x8xf32, #tpu.memory_space<vmem>>, vector<8x8xf32>,
    } else {
    }
    %c0_i32_104 = arith.constant 0 : i32
    %273 = arith.cmpi eq, %arg1, %c0_i32_104 : i32
    %274 = arith.extui %273 : i1 to i32
    %c0_i32_105 = arith.constant 0 : i32
    %275 = arith.cmpi ne, %274, %c0_i32_105 : i32
    scf.if %275 {
      %276 = vector.extract_strided_slice %1 {offsets = [0, 3], sizes = [8, 1], strides = [1, 1]} : vector<8x8xf32> to vector<8x1xf32>
      %c0_106 = arith.constant 0 : index
      %c0_107 = arith.constant 0 : index
      %277 = vector.load %arg14[%c0_106, %c0_107] : memref<8x8xf32, #tpu.memory_space<vmem>>, vector<8x8xf32>
      %278 = vector.broadcast %276 : vector<8x1xf32> to vector<8x8xf32>
      %279 = arith.mulf %277, %278 : vector<8x8xf32>
      %c0_108 = arith.constant 0 : index
      %c0_109 = arith.constant 0 : index
      %280 = vector.load %arg11[%c0_108, %c0_109] : memref<1x8xf32, #tpu.memory_space<vmem>>, vector<1x8xf32>
      %281 = vector.broadcast %280 : vector<1x8xf32> to vector<8x8xf32>
      %282 = arith.addf %279, %281 : vector<8x8xf32>
      %c0_110 = arith.constant 0 : index
      %c0_111 = arith.constant 0 : index
      %283 = vector.load %arg12[%c0_110, %c0_111] : memref<8x8xf32, #tpu.memory_space<vmem>>, vector<8x8xf32>
      tpu.vector_store %arg12[%c0_110, %c0_111], %282 {strides = array<i32>} : memref<8x8xf32, #tpu.memory_space<vmem>>, vector<8x8xf32>,
      %284 = vector.extract_strided_slice %1 {offsets = [0, 4], sizes = [8, 1], strides = [1, 1]} : vector<8x8xf32> to vector<8x1xf32>
      %285 = vector.broadcast %284 : vector<8x1xf32> to vector<8x8xf32>
      %286 = arith.mulf %282, %285 : vector<8x8xf32>
      %cst_112 = arith.constant dense<0.000000e+00> : vector<8xf32>
      %287 = vector.multi_reduction <add>, %286, %cst_112 [0] : vector<8x8xf32> to vector<8xf32>
      %288 = vector.shape_cast %287 : vector<8xf32> to vector<1x8xf32>
      %c0_113 = arith.constant 0 : index
      %c0_114 = arith.constant 0 : index
      %c0_115 = arith.constant 0 : index
      %289 = vector.load %arg13[%c0_113, %c0_114, %c0_115] : memref<1x2x8xf32, #tpu.memory_space<vmem>>, vector<1x1x8xf32>
      %290 = vector.shape_cast %289 : vector<1x1x8xf32> to vector<1x8xf32>
      %291 = vector.shape_cast %288 : vector<1x8xf32> to vector<1x1x8xf32>
      tpu.vector_store %arg13[%c0_113, %c0_114, %c0_115], %291 {strides = array<i32>} : memref<1x2x8xf32, #tpu.memory_space<vmem>>, vector<1x1x8xf32>,
      %292 = arith.mulf %286, %286 : vector<8x8xf32>
      %cst_116 = arith.constant dense<0.000000e+00> : vector<8xf32>
      %293 = vector.multi_reduction <add>, %292, %cst_116 [0] : vector<8x8xf32> to vector<8xf32>
      %294 = vector.shape_cast %293 : vector<8xf32> to vector<1x8xf32>
      %c0_117 = arith.constant 0 : index
      %c1_118 = arith.constant 1 : index
      %c0_119 = arith.constant 0 : index
      %295 = vector.load %arg13[%c0_117, %c1_118, %c0_119] : memref<1x2x8xf32, #tpu.memory_space<vmem>>, vector<1x1x8xf32>
      %296 = vector.shape_cast %295 : vector<1x1x8xf32> to vector<1x8xf32>
      %297 = vector.shape_cast %294 : vector<1x8xf32> to vector<1x1x8xf32>
      tpu.vector_store %arg13[%c0_117, %c1_118, %c0_119], %297 {strides = array<i32>} : memref<1x2x8xf32, #tpu.memory_space<vmem>>, vector<1x1x8xf32>,
    } else {
    }
    return
  }
  func.func @transform_0(%arg0: i32, %arg1: i32) -> (i32, i32, i32) {
    %c0_i32 = arith.constant 0 : i32
    %c0_i32_0 = arith.constant 0 : i32
    %c0_i32_1 = arith.constant 0 : i32
    return %arg0, %c0_i32, %c0_i32_0 : i32, i32, i32
  }
  func.func @transform_1(%arg0: i32, %arg1: i32) -> (i32, i32, i32) {
    %c0_i32 = arith.constant 0 : i32
    %c0_i32_0 = arith.constant 0 : i32
    return %arg0, %c0_i32, %arg1 : i32, i32, i32
  }
  func.func @transform_2(%arg0: i32, %arg1: i32) -> (i32, i32) {
    %c1_i32 = arith.constant 1 : i32
    %0 = arith.muli %arg0, %c1_i32 : i32
    %1 = arith.addi %0, %arg1 : i32
    %c0_i32 = arith.constant 0 : i32
    %c0_i32_0 = arith.constant 0 : i32
    return %1, %c0_i32 : i32, i32
  }
  func.func @transform_3(%arg0: i32, %arg1: i32) -> (i32, i32) {
    %c0_i32 = arith.constant 0 : i32
    %c0_i32_0 = arith.constant 0 : i32
    %c0_i32_1 = arith.constant 0 : i32
    return %c0_i32, %c0_i32_0 : i32, i32
  }
  func.func @transform_4(%arg0: i32, %arg1: i32) -> (i32, i32) {
    %c0_i32 = arith.constant 0 : i32
    %c0_i32_0 = arith.constant 0 : i32
    %c0_i32_1 = arith.constant 0 : i32
    return %c0_i32, %c0_i32_0 : i32, i32
  }
  func.func @transform_5(%arg0: i32, %arg1: i32) -> (i32, i32) {
    %c0_i32 = arith.constant 0 : i32
    %c0_i32_0 = arith.constant 0 : i32
    %c0_i32_1 = arith.constant 0 : i32
    return %c0_i32, %c0_i32_0 : i32, i32
  }
  func.func @transform_6(%arg0: i32, %arg1: i32) -> (i32, i32) {
    %c0_i32 = arith.constant 0 : i32
    %c0_i32_0 = arith.constant 0 : i32
    %c0_i32_1 = arith.constant 0 : i32
    return %c0_i32, %c0_i32_0 : i32, i32
  }
  func.func @transform_7(%arg0: i32, %arg1: i32) -> (i32, i32) {
    %c0_i32 = arith.constant 0 : i32
    %c0_i32_0 = arith.constant 0 : i32
    %c0_i32_1 = arith.constant 0 : i32
    return %c0_i32, %c0_i32_0 : i32, i32
  }
  func.func @transform_8(%arg0: i32, %arg1: i32) -> (i32, i32) {
    %c0_i32 = arith.constant 0 : i32
    %c0_i32_0 = arith.constant 0 : i32
    %c0_i32_1 = arith.constant 0 : i32
    return %c0_i32, %c0_i32_0 : i32, i32
  }
  func.func @transform_9(%arg0: i32, %arg1: i32) -> (i32, i32) {
    %c0_i32 = arith.constant 0 : i32
    %c0_i32_0 = arith.constant 0 : i32
    %c0_i32_1 = arith.constant 0 : i32
    return %c0_i32, %c0_i32_0 : i32, i32
  }
  func.func @transform_10(%arg0: i32, %arg1: i32) -> (i32, i32) {
    %c0_i32 = arith.constant 0 : i32
    %c0_i32_0 = arith.constant 0 : i32
    return %arg0, %c0_i32 : i32, i32
  }
  func.func @transform_11(%arg0: i32, %arg1: i32) -> (i32, i32, i32) {
    %c0_i32 = arith.constant 0 : i32
    %c0_i32_0 = arith.constant 0 : i32
    %c0_i32_1 = arith.constant 0 : i32
    return %arg0, %c0_i32, %c0_i32_0 : i32, i32, i32
  }
}

module attributes {stable_mosaic.version = 11 : i64} {
  func.func @_bn_swish_linear_res_kernel(%arg0: i32, %arg1: memref<8x32xf32, #tpu.memory_space<vmem>>, %arg2: memref<8x8xf32, #tpu.memory_space<vmem>>, %arg3: memref<8x1xf32, #tpu.memory_space<vmem>>, %arg4: memref<2x8xf32, #tpu.memory_space<vmem>>, %arg5: memref<1x8xf32, #tpu.memory_space<vmem>>, %arg6: memref<1x8xf32, #tpu.memory_space<vmem>>, %arg7: memref<8x32xbf16, #tpu.memory_space<vmem>>, %arg8: memref<1x32xf32, #tpu.memory_space<vmem>>, %arg9: memref<8x32xf32, #tpu.memory_space<vmem>>, %arg10: memref<1x2x32xf32, #tpu.memory_space<vmem>>) attributes {dimension_semantics = [#tpu.dimension_semantics<parallel>], iteration_bounds = array<i64: 2>, scalar_prefetch = 0 : i64, scratch_operands = 0 : i64, tpu.core_type = #tpu.core_type<tc>, window_params = [{transform_indices = @transform_0, window_bounds = array<i64: 8, 32>}, {transform_indices = @transform_1, window_bounds = array<i64: 8, 8>}, {transform_indices = @transform_2, window_bounds = array<i64: 8, 1>}, {pipeline_mode = #tpu.pipeline_mode<synchronous>, transform_indices = @transform_3, window_bounds = array<i64: 2, 8>}, {pipeline_mode = #tpu.pipeline_mode<synchronous>, transform_indices = @transform_4, window_bounds = array<i64: 1, 8>}, {pipeline_mode = #tpu.pipeline_mode<synchronous>, transform_indices = @transform_5, window_bounds = array<i64: 1, 8>}, {pipeline_mode = #tpu.pipeline_mode<synchronous>, transform_indices = @transform_6, window_bounds = array<i64: 8, 32>}, {pipeline_mode = #tpu.pipeline_mode<synchronous>, transform_indices = @transform_7, window_bounds = array<i64: 1, 32>}, {transform_indices = @transform_8, window_bounds = array<i64: 8, 32>}, {transform_indices = @transform_9, window_bounds = array<i64: 1, 2, 32>}]} {
    %c0 = arith.constant 0 : index
    %c0_0 = arith.constant 0 : index
    %0 = vector.load %arg3[%c0, %c0_0] : memref<8x1xf32, #tpu.memory_space<vmem>>, vector<8x1xf32>
    %c0_1 = arith.constant 0 : index
    %c0_2 = arith.constant 0 : index
    %1 = vector.load %arg2[%c0_1, %c0_2] : memref<8x8xf32, #tpu.memory_space<vmem>>, vector<8x8xf32>
    %2 = vector.broadcast %0 : vector<8x1xf32> to vector<8x8xf32>
    %3 = arith.mulf %1, %2 : vector<8x8xf32>
    %c0_3 = arith.constant 0 : index
    %c0_4 = arith.constant 0 : index
    %4 = vector.load %arg4[%c0_3, %c0_4] : memref<2x8xf32, #tpu.memory_space<vmem>>, vector<2x8xf32>
    %c0_5 = arith.constant 0 : index
    %c0_6 = arith.constant 0 : index
    %5 = vector.load %arg5[%c0_5, %c0_6] : memref<1x8xf32, #tpu.memory_space<vmem>>, vector<1x8xf32>
    %c0_7 = arith.constant 0 : index
    %c0_8 = arith.constant 0 : index
    %6 = vector.load %arg6[%c0_7, %c0_8] : memref<1x8xf32, #tpu.memory_space<vmem>>, vector<1x8xf32>
    %7 = vector.extract_strided_slice %4 {offsets = [0, 0], sizes = [1, 8], strides = [1, 1]} : vector<2x8xf32> to vector<1x8xf32>
    %8 = vector.extract_strided_slice %4 {offsets = [1, 0], sizes = [1, 8], strides = [1, 1]} : vector<2x8xf32> to vector<1x8xf32>
    %9 = vector.broadcast %7 : vector<1x8xf32> to vector<8x8xf32>
    %10 = arith.subf %3, %9 : vector<8x8xf32>
    %11 = vector.broadcast %8 : vector<1x8xf32> to vector<8x8xf32>
    %12 = arith.mulf %10, %11 : vector<8x8xf32>
    %13 = vector.broadcast %5 : vector<1x8xf32> to vector<8x8xf32>
    %14 = arith.mulf %13, %12 : vector<8x8xf32>
    %15 = vector.broadcast %6 : vector<1x8xf32> to vector<8x8xf32>
    %16 = arith.addf %14, %15 : vector<8x8xf32>
    %cst = arith.constant 0.000000e+00 : f32
    %17 = vector.broadcast %cst : f32 to vector<8x8xf32>
    %18 = arith.subf %17, %16 : vector<8x8xf32>
    %19 = math.exp %18 : vector<8x8xf32>
    %cst_9 = arith.constant 1.000000e+00 : f32
    %20 = vector.broadcast %cst_9 : f32 to vector<8x8xf32>
    %21 = arith.addf %20, %19 : vector<8x8xf32>
    %22 = tpu.reciprocal %21 {approx = true} : vector<8x8xf32> -> vector<8x8xf32>
    %23 = arith.mulf %16, %22 : vector<8x8xf32>
    %c0_10 = arith.constant 0 : index
    %c0_11 = arith.constant 0 : index
    %24 = vector.load %arg1[%c0_10, %c0_11] : memref<8x32xf32, #tpu.memory_space<vmem>>, vector<8x32xf32>
    %25 = arith.truncf %23 : vector<8x8xf32> to vector<8x8xbf16>
    %c0_12 = arith.constant 0 : index
    %c0_13 = arith.constant 0 : index
    %26 = vector.load %arg7[%c0_12, %c0_13] : memref<8x32xbf16, #tpu.memory_space<vmem>>, vector<8x32xbf16>
    %cst_14 = arith.constant dense<0.000000e+00> : vector<8x32xf32>
    %27 = tpu.matmul %25, %26, %cst_14 {dimension_numbers = #tpu.dot_dimension_numbers<[1], [0], [0], [1], [0, 0, 1, 1], [], []>} : vector<8x8xbf16>, vector<8x32xbf16>, vector<8x32xf32> -> vector<8x32xf32>
    %28 = arith.addf %24, %27 : vector<8x32xf32>
    %c0_15 = arith.constant 0 : index
    %c0_16 = arith.constant 0 : index
    %29 = vector.load %arg8[%c0_15, %c0_16] : memref<1x32xf32, #tpu.memory_space<vmem>>, vector<1x32xf32>
    %30 = vector.broadcast %29 : vector<1x32xf32> to vector<8x32xf32>
    %31 = arith.addf %28, %30 : vector<8x32xf32>
    %c0_17 = arith.constant 0 : index
    %c0_18 = arith.constant 0 : index
    %32 = vector.load %arg9[%c0_17, %c0_18] : memref<8x32xf32, #tpu.memory_space<vmem>>, vector<8x32xf32>
    tpu.vector_store %arg9[%c0_17, %c0_18], %31 {strides = array<i32>} : memref<8x32xf32, #tpu.memory_space<vmem>>, vector<8x32xf32>,
    %33 = vector.broadcast %0 : vector<8x1xf32> to vector<8x32xf32>
    %34 = arith.mulf %31, %33 : vector<8x32xf32>
    %cst_19 = arith.constant dense<0.000000e+00> : vector<32xf32>
    %35 = vector.multi_reduction <add>, %34, %cst_19 [0] : vector<8x32xf32> to vector<32xf32>
    %36 = vector.shape_cast %35 : vector<32xf32> to vector<1x32xf32>
    %c0_20 = arith.constant 0 : index
    %c0_21 = arith.constant 0 : index
    %c0_22 = arith.constant 0 : index
    %37 = vector.load %arg10[%c0_20, %c0_21, %c0_22] : memref<1x2x32xf32, #tpu.memory_space<vmem>>, vector<1x1x32xf32>
    %38 = vector.shape_cast %37 : vector<1x1x32xf32> to vector<1x32xf32>
    %39 = vector.shape_cast %36 : vector<1x32xf32> to vector<1x1x32xf32>
    tpu.vector_store %arg10[%c0_20, %c0_21, %c0_22], %39 {strides = array<i32>} : memref<1x2x32xf32, #tpu.memory_space<vmem>>, vector<1x1x32xf32>,
    %40 = arith.mulf %34, %34 : vector<8x32xf32>
    %cst_23 = arith.constant dense<0.000000e+00> : vector<32xf32>
    %41 = vector.multi_reduction <add>, %40, %cst_23 [0] : vector<8x32xf32> to vector<32xf32>
    %42 = vector.shape_cast %41 : vector<32xf32> to vector<1x32xf32>
    %c0_24 = arith.constant 0 : index
    %c1 = arith.constant 1 : index
    %c0_25 = arith.constant 0 : index
    %43 = vector.load %arg10[%c0_24, %c1, %c0_25] : memref<1x2x32xf32, #tpu.memory_space<vmem>>, vector<1x1x32xf32>
    %44 = vector.shape_cast %43 : vector<1x1x32xf32> to vector<1x32xf32>
    %45 = vector.shape_cast %42 : vector<1x32xf32> to vector<1x1x32xf32>
    tpu.vector_store %arg10[%c0_24, %c1, %c0_25], %45 {strides = array<i32>} : memref<1x2x32xf32, #tpu.memory_space<vmem>>, vector<1x1x32xf32>,
    return
  }
  func.func @transform_0(%arg0: i32) -> (i32, i32) {
    %c0_i32 = arith.constant 0 : i32
    %c0_i32_0 = arith.constant 0 : i32
    return %arg0, %c0_i32 : i32, i32
  }
  func.func @transform_1(%arg0: i32) -> (i32, i32) {
    %c0_i32 = arith.constant 0 : i32
    %c0_i32_0 = arith.constant 0 : i32
    return %arg0, %c0_i32 : i32, i32
  }
  func.func @transform_2(%arg0: i32) -> (i32, i32) {
    %c0_i32 = arith.constant 0 : i32
    %c0_i32_0 = arith.constant 0 : i32
    return %arg0, %c0_i32 : i32, i32
  }
  func.func @transform_3(%arg0: i32) -> (i32, i32) {
    %c0_i32 = arith.constant 0 : i32
    %c0_i32_0 = arith.constant 0 : i32
    %c0_i32_1 = arith.constant 0 : i32
    return %c0_i32, %c0_i32_0 : i32, i32
  }
  func.func @transform_4(%arg0: i32) -> (i32, i32) {
    %c0_i32 = arith.constant 0 : i32
    %c0_i32_0 = arith.constant 0 : i32
    %c0_i32_1 = arith.constant 0 : i32
    return %c0_i32, %c0_i32_0 : i32, i32
  }
  func.func @transform_5(%arg0: i32) -> (i32, i32) {
    %c0_i32 = arith.constant 0 : i32
    %c0_i32_0 = arith.constant 0 : i32
    %c0_i32_1 = arith.constant 0 : i32
    return %c0_i32, %c0_i32_0 : i32, i32
  }
  func.func @transform_6(%arg0: i32) -> (i32, i32) {
    %c0_i32 = arith.constant 0 : i32
    %c0_i32_0 = arith.constant 0 : i32
    %c0_i32_1 = arith.constant 0 : i32
    return %c0_i32, %c0_i32_0 : i32, i32
  }
  func.func @transform_7(%arg0: i32) -> (i32, i32) {
    %c0_i32 = arith.constant 0 : i32
    %c0_i32_0 = arith.constant 0 : i32
    %c0_i32_1 = arith.constant 0 : i32
    return %c0_i32, %c0_i32_0 : i32, i32
  }
  func.func @transform_8(%arg0: i32) -> (i32, i32) {
    %c0_i32 = arith.constant 0 : i32
    %c0_i32_0 = arith.constant 0 : i32
    return %arg0, %c0_i32 : i32, i32
  }
  func.func @transform_9(%arg0: i32) -> (i32, i32, i32) {
    %c0_i32 = arith.constant 0 : i32
    %c0_i32_0 = arith.constant 0 : i32
    %c0_i32_1 = arith.constant 0 : i32
    return %arg0, %c0_i32, %c0_i32_0 : i32, i32, i32
  }
}

module attributes {stable_mosaic.version = 11 : i64} {
  func.func @_bn_swish_linear_kernel(%arg0: i32, %arg1: memref<8x32xf32, #tpu.memory_space<vmem>>, %arg2: memref<8x1xf32, #tpu.memory_space<vmem>>, %arg3: memref<2x32xf32, #tpu.memory_space<vmem>>, %arg4: memref<1x32xf32, #tpu.memory_space<vmem>>, %arg5: memref<1x32xf32, #tpu.memory_space<vmem>>, %arg6: memref<32x38xbf16, #tpu.memory_space<vmem>>, %arg7: memref<1x38xf32, #tpu.memory_space<vmem>>, %arg8: memref<8x38xf32, #tpu.memory_space<vmem>>, %arg9: memref<1x2x38xf32, #tpu.memory_space<vmem>>) attributes {dimension_semantics = [#tpu.dimension_semantics<parallel>], iteration_bounds = array<i64: 2>, scalar_prefetch = 0 : i64, scratch_operands = 0 : i64, tpu.core_type = #tpu.core_type<tc>, window_params = [{transform_indices = @transform_0, window_bounds = array<i64: 8, 32>}, {transform_indices = @transform_1, window_bounds = array<i64: 8, 1>}, {pipeline_mode = #tpu.pipeline_mode<synchronous>, transform_indices = @transform_2, window_bounds = array<i64: 2, 32>}, {pipeline_mode = #tpu.pipeline_mode<synchronous>, transform_indices = @transform_3, window_bounds = array<i64: 1, 32>}, {pipeline_mode = #tpu.pipeline_mode<synchronous>, transform_indices = @transform_4, window_bounds = array<i64: 1, 32>}, {pipeline_mode = #tpu.pipeline_mode<synchronous>, transform_indices = @transform_5, window_bounds = array<i64: 32, 38>}, {pipeline_mode = #tpu.pipeline_mode<synchronous>, transform_indices = @transform_6, window_bounds = array<i64: 1, 38>}, {transform_indices = @transform_7, window_bounds = array<i64: 8, 38>}, {transform_indices = @transform_8, window_bounds = array<i64: 1, 2, 38>}]} {
    %c0 = arith.constant 0 : index
    %c0_0 = arith.constant 0 : index
    %0 = vector.load %arg2[%c0, %c0_0] : memref<8x1xf32, #tpu.memory_space<vmem>>, vector<8x1xf32>
    %c0_1 = arith.constant 0 : index
    %c0_2 = arith.constant 0 : index
    %1 = vector.load %arg1[%c0_1, %c0_2] : memref<8x32xf32, #tpu.memory_space<vmem>>, vector<8x32xf32>
    %2 = vector.broadcast %0 : vector<8x1xf32> to vector<8x32xf32>
    %3 = arith.mulf %1, %2 : vector<8x32xf32>
    %c0_3 = arith.constant 0 : index
    %c0_4 = arith.constant 0 : index
    %4 = vector.load %arg3[%c0_3, %c0_4] : memref<2x32xf32, #tpu.memory_space<vmem>>, vector<2x32xf32>
    %c0_5 = arith.constant 0 : index
    %c0_6 = arith.constant 0 : index
    %5 = vector.load %arg4[%c0_5, %c0_6] : memref<1x32xf32, #tpu.memory_space<vmem>>, vector<1x32xf32>
    %c0_7 = arith.constant 0 : index
    %c0_8 = arith.constant 0 : index
    %6 = vector.load %arg5[%c0_7, %c0_8] : memref<1x32xf32, #tpu.memory_space<vmem>>, vector<1x32xf32>
    %7 = vector.extract_strided_slice %4 {offsets = [0, 0], sizes = [1, 32], strides = [1, 1]} : vector<2x32xf32> to vector<1x32xf32>
    %8 = vector.extract_strided_slice %4 {offsets = [1, 0], sizes = [1, 32], strides = [1, 1]} : vector<2x32xf32> to vector<1x32xf32>
    %9 = vector.broadcast %7 : vector<1x32xf32> to vector<8x32xf32>
    %10 = arith.subf %3, %9 : vector<8x32xf32>
    %11 = vector.broadcast %8 : vector<1x32xf32> to vector<8x32xf32>
    %12 = arith.mulf %10, %11 : vector<8x32xf32>
    %13 = vector.broadcast %5 : vector<1x32xf32> to vector<8x32xf32>
    %14 = arith.mulf %13, %12 : vector<8x32xf32>
    %15 = vector.broadcast %6 : vector<1x32xf32> to vector<8x32xf32>
    %16 = arith.addf %14, %15 : vector<8x32xf32>
    %cst = arith.constant 0.000000e+00 : f32
    %17 = vector.broadcast %cst : f32 to vector<8x32xf32>
    %18 = arith.subf %17, %16 : vector<8x32xf32>
    %19 = math.exp %18 : vector<8x32xf32>
    %cst_9 = arith.constant 1.000000e+00 : f32
    %20 = vector.broadcast %cst_9 : f32 to vector<8x32xf32>
    %21 = arith.addf %20, %19 : vector<8x32xf32>
    %22 = tpu.reciprocal %21 {approx = true} : vector<8x32xf32> -> vector<8x32xf32>
    %23 = arith.mulf %16, %22 : vector<8x32xf32>
    %24 = arith.truncf %23 : vector<8x32xf32> to vector<8x32xbf16>
    %c0_10 = arith.constant 0 : index
    %c0_11 = arith.constant 0 : index
    %25 = vector.load %arg6[%c0_10, %c0_11] : memref<32x38xbf16, #tpu.memory_space<vmem>>, vector<32x38xbf16>
    %cst_12 = arith.constant dense<0.000000e+00> : vector<8x38xf32>
    %26 = tpu.matmul %24, %25, %cst_12 {dimension_numbers = #tpu.dot_dimension_numbers<[1], [0], [0], [1], [0, 0, 1, 1], [], []>} : vector<8x32xbf16>, vector<32x38xbf16>, vector<8x38xf32> -> vector<8x38xf32>
    %c0_13 = arith.constant 0 : index
    %c0_14 = arith.constant 0 : index
    %27 = vector.load %arg7[%c0_13, %c0_14] : memref<1x38xf32, #tpu.memory_space<vmem>>, vector<1x38xf32>
    %28 = vector.broadcast %27 : vector<1x38xf32> to vector<8x38xf32>
    %29 = arith.addf %26, %28 : vector<8x38xf32>
    %c0_15 = arith.constant 0 : index
    %c0_16 = arith.constant 0 : index
    %30 = vector.load %arg8[%c0_15, %c0_16] : memref<8x38xf32, #tpu.memory_space<vmem>>, vector<8x38xf32>
    tpu.vector_store %arg8[%c0_15, %c0_16], %29 {strides = array<i32>} : memref<8x38xf32, #tpu.memory_space<vmem>>, vector<8x38xf32>,
    %31 = vector.broadcast %0 : vector<8x1xf32> to vector<8x38xf32>
    %32 = arith.mulf %29, %31 : vector<8x38xf32>
    %cst_17 = arith.constant dense<0.000000e+00> : vector<38xf32>
    %33 = vector.multi_reduction <add>, %32, %cst_17 [0] : vector<8x38xf32> to vector<38xf32>
    %34 = vector.shape_cast %33 : vector<38xf32> to vector<1x38xf32>
    %c0_18 = arith.constant 0 : index
    %c0_19 = arith.constant 0 : index
    %c0_20 = arith.constant 0 : index
    %35 = vector.load %arg9[%c0_18, %c0_19, %c0_20] : memref<1x2x38xf32, #tpu.memory_space<vmem>>, vector<1x1x38xf32>
    %36 = vector.shape_cast %35 : vector<1x1x38xf32> to vector<1x38xf32>
    %37 = vector.shape_cast %34 : vector<1x38xf32> to vector<1x1x38xf32>
    tpu.vector_store %arg9[%c0_18, %c0_19, %c0_20], %37 {strides = array<i32>} : memref<1x2x38xf32, #tpu.memory_space<vmem>>, vector<1x1x38xf32>,
    %38 = arith.mulf %32, %32 : vector<8x38xf32>
    %cst_21 = arith.constant dense<0.000000e+00> : vector<38xf32>
    %39 = vector.multi_reduction <add>, %38, %cst_21 [0] : vector<8x38xf32> to vector<38xf32>
    %40 = vector.shape_cast %39 : vector<38xf32> to vector<1x38xf32>
    %c0_22 = arith.constant 0 : index
    %c1 = arith.constant 1 : index
    %c0_23 = arith.constant 0 : index
    %41 = vector.load %arg9[%c0_22, %c1, %c0_23] : memref<1x2x38xf32, #tpu.memory_space<vmem>>, vector<1x1x38xf32>
    %42 = vector.shape_cast %41 : vector<1x1x38xf32> to vector<1x38xf32>
    %43 = vector.shape_cast %40 : vector<1x38xf32> to vector<1x1x38xf32>
    tpu.vector_store %arg9[%c0_22, %c1, %c0_23], %43 {strides = array<i32>} : memref<1x2x38xf32, #tpu.memory_space<vmem>>, vector<1x1x38xf32>,
    return
  }
  func.func @transform_0(%arg0: i32) -> (i32, i32) {
    %c0_i32 = arith.constant 0 : i32
    %c0_i32_0 = arith.constant 0 : i32
    return %arg0, %c0_i32 : i32, i32
  }
  func.func @transform_1(%arg0: i32) -> (i32, i32) {
    %c0_i32 = arith.constant 0 : i32
    %c0_i32_0 = arith.constant 0 : i32
    return %arg0, %c0_i32 : i32, i32
  }
  func.func @transform_2(%arg0: i32) -> (i32, i32) {
    %c0_i32 = arith.constant 0 : i32
    %c0_i32_0 = arith.constant 0 : i32
    %c0_i32_1 = arith.constant 0 : i32
    return %c0_i32, %c0_i32_0 : i32, i32
  }
  func.func @transform_3(%arg0: i32) -> (i32, i32) {
    %c0_i32 = arith.constant 0 : i32
    %c0_i32_0 = arith.constant 0 : i32
    %c0_i32_1 = arith.constant 0 : i32
    return %c0_i32, %c0_i32_0 : i32, i32
  }
  func.func @transform_4(%arg0: i32) -> (i32, i32) {
    %c0_i32 = arith.constant 0 : i32
    %c0_i32_0 = arith.constant 0 : i32
    %c0_i32_1 = arith.constant 0 : i32
    return %c0_i32, %c0_i32_0 : i32, i32
  }
  func.func @transform_5(%arg0: i32) -> (i32, i32) {
    %c0_i32 = arith.constant 0 : i32
    %c0_i32_0 = arith.constant 0 : i32
    %c0_i32_1 = arith.constant 0 : i32
    return %c0_i32, %c0_i32_0 : i32, i32
  }
  func.func @transform_6(%arg0: i32) -> (i32, i32) {
    %c0_i32 = arith.constant 0 : i32
    %c0_i32_0 = arith.constant 0 : i32
    %c0_i32_1 = arith.constant 0 : i32
    return %c0_i32, %c0_i32_0 : i32, i32
  }
  func.func @transform_7(%arg0: i32) -> (i32, i32) {
    %c0_i32 = arith.constant 0 : i32
    %c0_i32_0 = arith.constant 0 : i32
    return %arg0, %c0_i32 : i32, i32
  }
  func.func @transform_8(%arg0: i32) -> (i32, i32, i32) {
    %c0_i32 = arith.constant 0 : i32
    %c0_i32_0 = arith.constant 0 : i32
    %c0_i32_1 = arith.constant 0 : i32
    return %arg0, %c0_i32, %c0_i32_0 : i32, i32, i32
  }
}

</mosaic_0001>

<llo_original>
// kernel: mul.56
$region0: #{mul.56}
  %s0 = inlined_call_operand.vmem [shape: f32[2,8], index: 0, kind: input, shape index: {}]
  %s1 = inlined_call_operand.vmem [shape: f32[16], index: 1, kind: output, shape index: {}]
  $region1: #{mul.56} parent=0
    #allocation0 [shape = 'u8[4096]{0}', space=vmem, size = 0x1000, scoped, tag = 'scoped mem for output reshape']
    #allocation1 [shape = 'u8[4096]{0}', space=vmem, size = 0x1000, scoped, tag = 'scoped mem for input reshape']
    %s3 = ssub.s32 4, 1
    %v4 = vld [vmem:[%s0] sm:%s3]
    %5 = vst [vmem:[#allocation1] sm:%s3] %v4
    %v6 = vld [vmem:[#allocation1] sm:$0x1]
    %vm7 = vcmask 64512
    %8 = vst.msk [vmem:[#allocation0] sm:$0x1] %vm7, %v6
    %s9 = scalar_lea.vmem [#allocation1], 1
    %v10 = vld [vmem:[%s9] sm:$0x1]
    %11 = vrot.lane.b32.xlu0 %v10, 8
    %v12 = vpop.permute.xlu0 %11
    %vm13 = vcmask 130112
    %14 = vst.msk [vmem:[#allocation0] sm:$0x1] %vm13, %v12
    %s16 = ssub.s32 2, 1
    %v17 = vld [vmem:[#allocation0] sm:%s16]
    %s19 = ssub.s32 2, 1
    %20 = vst [vmem:[%s1] sm:%s19] %v17

// kernel: seqmolec_forward.10
$region0: #{seqmolec_forward.10}
  #allocation0 [shape = 'u32[]', space=smem, size = 0x4, offset = 0x4, fixed_abs, tag = 'smem constant byte address 0x4 - core index']
  #allocation1 [shape = 'u32[72,128]{1,0:T(1,128)}', space=vmem, size = 0x9000, scoped, tag = 'internal scratch']
  %s0 = inlined_call_operand.vmem [shape: f32[16,32], index: 0, kind: input, shape index: {}]
  %s1 = inlined_call_operand.vmem [shape: f32[16,1], index: 1, kind: input, shape index: {}]
  %s2 = inlined_call_operand.vmem [shape: f32[2,32], index: 2, kind: input, shape index: {}]
  %s3 = inlined_call_operand.vmem [shape: f32[1,32], index: 3, kind: input, shape index: {}]
  %s4 = inlined_call_operand.vmem [shape: f32[1,32], index: 4, kind: input, shape index: {}]
  %s5 = inlined_call_operand.vmem [shape: bf16[32,8], index: 5, kind: input, shape index: {}]
  %s6 = inlined_call_operand.vmem [shape: f32[1,8], index: 6, kind: input, shape index: {}]
  %s7 = inlined_call_operand.vmem [shape: f32[16,8], index: 7, kind: output, shape index: {0}]
  %s8 = inlined_call_operand.vmem [shape: f32[2,2,8], index: 8, kind: output, shape index: {1}]
  %9 = xla_tuple %s7, %s8
  %s10 = sld [smem:[#allocation0]]
  $region69: #{seqmolec_forward.10} parent=0
    _
  %s12 = ssub.s32 1, %s10
  %s13 = scalar_select 0, %s12, %s10
  loop: start=0, step=1, limit=4
  $region2: #{seqmolec_forward.10} parent=0 // loop_pre_header
    _
  $region3: #{seqmolec_forward.10} parent=0 // loop_header
    %s15 = sphi 0, %s19
    %p16 = scmp.ge.s32.totalorder %s15, 4
    %s25 = sphi 0, %s27
    %s28 = sphi 0, %s25
    %s29 = sphi 0, %s28
    %s45 = sphi 0, %s29
    %s51 = sphi 0, %s53
    %s54 = sphi 0, %s51
    %s55 = sphi 0, %s54
    %s71 = sphi 0, %s55
    %s75 = sphi 0, %s75
    %s77 = sphi 0, %s75
    %s78 = sphi 0, %s77
    %s92 = sphi 0, %s78
    %s96 = sphi 0, %s96
    %s98 = sphi 0, %s96
    %s99 = sphi 0, %s98
    %s113 = sphi 0, %s99
    %s117 = sphi 0, %s117
    %s119 = sphi 0, %s117
    %s120 = sphi 0, %s119
    %s134 = sphi 0, %s120
    %s138 = sphi 0, %s138
    %s140 = sphi 0, %s138
    %s141 = sphi 0, %s140
    %s155 = sphi 0, %s141
    %s159 = sphi 0, %s159
    %s161 = sphi 0, %s159
    %s162 = sphi 0, %s161
    %s176 = sphi 0, %s162
    %s182 = sphi 0, %s184
    %s185 = sphi 0, %s182
    %s186 = sphi 0, %s185
    %s202 = sphi 0, %s186
    %s208 = sphi 0, %s210
    %s211 = sphi 0, %s208
    %s212 = sphi 0, %s211
    %s228 = sphi 0, %s212
  $region4: #{seqmolec_forward.10} parent=0 // loop_header_branch
    %18 = sbr.rel (%p16) target = $region8
  $region5: #{seqmolec_forward.10} parent=0 // loop_body
    %s20 = ssub.s32 %s15, 1
    %s21 = ssub.s32 %s15, 2
    %s22 = sadd.s32 %s15, 1
    %s23 = ssub.s32 %s15, %s22
    %p24 = scmp.eq.s32.totalorder %s23, 0
    %s26 = sadd.s32 %s25, 1
    %s27 = scalar_select %p24, %s25, %s26
    %p30 = pneg %p24
    %p31 = scmp.eq.s32.totalorder %s15, 1
    %p32 = por %p30, %p31
    %p33 = scmp.ne.s32.totalorder %s25, %s28
    %p34 = scmp.eq.s32.totalorder %s15, 0
    %p35 = por %p33, %p34
    %p36 = scmp.ne.s32.totalorder %s25, %s28
    %p37 = scmp.eq.s32.totalorder %s20, 1
    %p38 = por %p36, %p37
    %p39 = scmp.ne.s32.totalorder %s28, %s29
    %p40 = scmp.eq.s32.totalorder %s20, 0
    %p41 = por %p39, %p40
    %p42 = scmp.ne.s32.totalorder %s28, %s29
    %p43 = scmp.eq.s32.totalorder %s21, 1
    %p44 = por %p42, %p43
    %p46 = scmp.ne.s32.totalorder %s29, %s45
    %p47 = scmp.eq.s32.totalorder %s21, 0
    %p48 = por %p46, %p47
    %s49 = ssub.s32 %s15, %s22
    %p50 = scmp.eq.s32.totalorder %s49, 0
    %s52 = sadd.s32 %s51, 1
    %s53 = scalar_select %p50, %s51, %s52
    %p56 = pneg %p50
    %p57 = scmp.eq.s32.totalorder %s15, 1
    %p58 = por %p56, %p57
    %p59 = scmp.ne.s32.totalorder %s51, %s54
    %p60 = scmp.eq.s32.totalorder %s15, 0
    %p61 = por %p59, %p60
    %p62 = scmp.ne.s32.totalorder %s51, %s54
    %p63 = scmp.eq.s32.totalorder %s20, 1
    %p64 = por %p62, %p63
    %p65 = scmp.ne.s32.totalorder %s54, %s55
    %p66 = scmp.eq.s32.totalorder %s20, 0
    %p67 = por %p65, %p66
    %p68 = scmp.ne.s32.totalorder %s54, %s55
    %p69 = scmp.eq.s32.totalorder %s21, 1
    %p70 = por %p68, %p69
    %p72 = scmp.ne.s32.totalorder %s55, %s71
    %p73 = scmp.eq.s32.totalorder %s21, 0
    %p74 = por %p72, %p73
    %s76 = sadd.s32 %s75, 1
    %p79 = scmp.eq.s32.totalorder %s15, 1
    %p80 = scmp.ne.s32.totalorder %s75, %s77
    %p81 = scmp.eq.s32.totalorder %s15, 0
    %p82 = por %p80, %p81
    %p83 = scmp.ne.s32.totalorder %s75, %s77
    %p84 = scmp.eq.s32.totalorder %s20, 1
    %p85 = por %p83, %p84
    %p86 = scmp.ne.s32.totalorder %s77, %s78
    %p87 = scmp.eq.s32.totalorder %s20, 0
    %p88 = por %p86, %p87
    %p89 = scmp.ne.s32.totalorder %s77, %s78
    %p90 = scmp.eq.s32.totalorder %s21, 1
    %p91 = por %p89, %p90
    %p93 = scmp.ne.s32.totalorder %s78, %s92
    %p94 = scmp.eq.s32.totalorder %s21, 0
    %p95 = por %p93, %p94
    %s97 = sadd.s32 %s96, 1
    %p100 = scmp.eq.s32.totalorder %s15, 1
    %p101 = scmp.ne.s32.totalorder %s96, %s98
    %p102 = scmp.eq.s32.totalorder %s15, 0
    %p103 = por %p101, %p102
    %p104 = scmp.ne.s32.totalorder %s96, %s98
    %p105 = scmp.eq.s32.totalorder %s20, 1
    %p106 = por %p104, %p105
    %p107 = scmp.ne.s32.totalorder %s98, %s99
    %p108 = scmp.eq.s32.totalorder %s20, 0
    %p109 = por %p107, %p108
    %p110 = scmp.ne.s32.totalorder %s98, %s99
    %p111 = scmp.eq.s32.totalorder %s21, 1
    %p112 = por %p110, %p111
    %p114 = scmp.ne.s32.totalorder %s99, %s113
    %p115 = scmp.eq.s32.totalorder %s21, 0
    %p116 = por %p114, %p115
    %s118 = sadd.s32 %s117, 1
    %p121 = scmp.eq.s32.totalorder %s15, 1
    %p122 = scmp.ne.s32.totalorder %s117, %s119
    %p123 = scmp.eq.s32.totalorder %s15, 0
    %p124 = por %p122, %p123
    %p125 = scmp.ne.s32.totalorder %s117, %s119
    %p126 = scmp.eq.s32.totalorder %s20, 1
    %p127 = por %p125, %p126
    %p128 = scmp.ne.s32.totalorder %s119, %s120
    %p129 = scmp.eq.s32.totalorder %s20, 0
    %p130 = por %p128, %p129
    %p131 = scmp.ne.s32.totalorder %s119, %s120
    %p132 = scmp.eq.s32.totalorder %s21, 1
    %p133 = por %p131, %p132
    %p135 = scmp.ne.s32.totalorder %s120, %s134
    %p136 = scmp.eq.s32.totalorder %s21, 0
    %p137 = por %p135, %p136
    %s139 = sadd.s32 %s138, 1
    %p142 = scmp.eq.s32.totalorder %s15, 1
    %p143 = scmp.ne.s32.totalorder %s138, %s140
    %p144 = scmp.eq.s32.totalorder %s15, 0
    %p145 = por %p143, %p144
    %p146 = scmp.ne.s32.totalorder %s138, %s140
    %p147 = scmp.eq.s32.totalorder %s20, 1
    %p148 = por %p146, %p147
    %p149 = scmp.ne.s32.totalorder %s140, %s141
    %p150 = scmp.eq.s32.totalorder %s20, 0
    %p151 = por %p149, %p150
    %p152 = scmp.ne.s32.totalorder %s140, %s141
    %p153 = scmp.eq.s32.totalorder %s21, 1
    %p154 = por %p152, %p153
    %p156 = scmp.ne.s32.totalorder %s141, %s155
    %p157 = scmp.eq.s32.totalorder %s21, 0
    %p158 = por %p156, %p157
    %s160 = sadd.s32 %s159, 1
    %p163 = scmp.eq.s32.totalorder %s15, 1
    %p164 = scmp.ne.s32.totalorder %s159, %s161
    %p165 = scmp.eq.s32.totalorder %s15, 0
    %p166 = por %p164, %p165
    %p167 = scmp.ne.s32.totalorder %s159, %s161
    %p168 = scmp.eq.s32.totalorder %s20, 1
    %p169 = por %p167, %p168
    %p170 = scmp.ne.s32.totalorder %s161, %s162
    %p171 = scmp.eq.s32.totalorder %s20, 0
    %p172 = por %p170, %p171
    %p173 = scmp.ne.s32.totalorder %s161, %s162
    %p174 = scmp.eq.s32.totalorder %s21, 1
    %p175 = por %p173, %p174
    %p177 = scmp.ne.s32.totalorder %s162, %s176
    %p178 = scmp.eq.s32.totalorder %s21, 0
    %p179 = por %p177, %p178
    %s180 = ssub.s32 %s15, %s22
    %p181 = scmp.eq.s32.totalorder %s180, 0
    %s183 = sadd.s32 %s182, 1
    %s184 = scalar_select %p181, %s182, %s183
    %p187 = pneg %p181
    %p188 = scmp.eq.s32.totalorder %s15, 1
    %p189 = por %p187, %p188
    %p190 = scmp.ne.s32.totalorder %s182, %s185
    %p191 = scmp.eq.s32.totalorder %s15, 0
    %p192 = por %p190, %p191
    %p193 = scmp.ne.s32.totalorder %s182, %s185
    %p194 = scmp.eq.s32.totalorder %s20, 1
    %p195 = por %p193, %p194
    %p196 = scmp.ne.s32.totalorder %s185, %s186
    %p197 = scmp.eq.s32.totalorder %s20, 0
    %p198 = por %p196, %p197
    %p199 = scmp.ne.s32.totalorder %s185, %s186
    %p200 = scmp.eq.s32.totalorder %s21, 1
    %p201 = por %p199, %p200
    %p203 = scmp.ne.s32.totalorder %s186, %s202
    %p204 = scmp.eq.s32.totalorder %s21, 0
    %p205 = por %p203, %p204
    %s206 = ssub.s32 %s15, %s22
    %p207 = scmp.eq.s32.totalorder %s206, 0
    %s209 = sadd.s32 %s208, 1
    %s210 = scalar_select %p207, %s208, %s209
    %p213 = pneg %p207
    %p214 = scmp.eq.s32.totalorder %s15, 1
    %p215 = por %p213, %p214
    %p216 = scmp.ne.s32.totalorder %s208, %s211
    %p217 = scmp.eq.s32.totalorder %s15, 0
    %p218 = por %p216, %p217
    %p219 = scmp.ne.s32.totalorder %s208, %s211
    %p220 = scmp.eq.s32.totalorder %s20, 1
    %p221 = por %p219, %p220
    %p222 = scmp.ne.s32.totalorder %s211, %s212
    %p223 = scmp.eq.s32.totalorder %s20, 0
    %p224 = por %p222, %p223
    %p225 = scmp.ne.s32.totalorder %s211, %s212
    %p226 = scmp.eq.s32.totalorder %s21, 1
    %p227 = por %p225, %p226
    %p229 = scmp.ne.s32.totalorder %s212, %s228
    %p230 = scmp.eq.s32.totalorder %s21, 0
    %p231 = por %p229, %p230
    %p232 = scmp.le.s32.totalorder 1, %s15
    %p233 = scmp.lt.s32.totalorder %s15, 3
    %p234 = pnand %p232, %p233
    %p235 = pneg %p234
    // Predicated region
    $region9: #{seqmolec_forward.10} parent=5 // pred_check
      _
    $region10: #{seqmolec_forward.10} parent=5 // pred_check_branch
      %237 = sbr.rel (%p234) target = $region12
    $region11: #{seqmolec_forward.10} parent=5 // pred_region
      %s238 = ssub.s32 %s15, 1
      // Predicated region
      $region13: #{seqmolec_forward.10} parent=11 // pred_check
        %p239 = pneg %p88
      $region14: #{seqmolec_forward.10} parent=11 // pred_check_branch
        %241 = sbr.rel (%p239) target = $region16
      $region15: #{seqmolec_forward.10} parent=11 // pred_region
        _
      $region16: #{seqmolec_forward.10} parent=11 // pred_fallthru
        _
      // Predicated region
      $region17: #{seqmolec_forward.10} parent=11 // pred_check
        %p242 = pneg %p109
      $region18: #{seqmolec_forward.10} parent=11 // pred_check_branch
        %244 = sbr.rel (%p242) target = $region20
      $region19: #{seqmolec_forward.10} parent=11 // pred_region
        _
      $region20: #{seqmolec_forward.10} parent=11 // pred_fallthru
        _
      // Predicated region
      $region21: #{seqmolec_forward.10} parent=11 // pred_check
        %p245 = pneg %p130
      $region22: #{seqmolec_forward.10} parent=11 // pred_check_branch
        %247 = sbr.rel (%p245) target = $region24
      $region23: #{seqmolec_forward.10} parent=11 // pred_region
        _
      $region24: #{seqmolec_forward.10} parent=11 // pred_fallthru
        _
      // Predicated region
      $region25: #{seqmolec_forward.10} parent=11 // pred_check
        %p248 = pneg %p151
      $region26: #{seqmolec_forward.10} parent=11 // pred_check_branch
        %250 = sbr.rel (%p248) target = $region28
      $region27: #{seqmolec_forward.10} parent=11 // pred_region
        _
      $region28: #{seqmolec_forward.10} parent=11 // pred_fallthru
        _
      // Predicated region
      $region29: #{seqmolec_forward.10} parent=11 // pred_check
        %p251 = pneg %p172
      $region30: #{seqmolec_forward.10} parent=11 // pred_check_branch
        %253 = sbr.rel (%p251) target = $region32
      $region31: #{seqmolec_forward.10} parent=11 // pred_region
        _
      $region32: #{seqmolec_forward.10} parent=11 // pred_fallthru
        _
    $region12: #{seqmolec_forward.10} parent=5 // pred_fallthru
      _
    %p254 = scmp.lt.s32.totalorder %s15, 2
    // Predicated region
    $region33: #{seqmolec_forward.10} parent=5 // pred_check
      %p255 = pneg %p254
    $region34: #{seqmolec_forward.10} parent=5 // pred_check_branch
      %257 = sbr.rel (%p255) target = $region36
    $region35: #{seqmolec_forward.10} parent=5 // pred_region
      // Predicated region
      $region37: #{seqmolec_forward.10} parent=35 // pred_check
        %p258 = pneg %p35
      $region38: #{seqmolec_forward.10} parent=35 // pred_check_branch
        %260 = sbr.rel (%p258) target = $region40
      $region39: #{seqmolec_forward.10} parent=35 // pred_region
        %p261 = scmp.lt.s32.totalorder %s15, 1
        %s262 = scalar_select %p261, %s15, 1
        %s263 = smul.addr %s262, 8
        %s264 = scalar_lea.vmem %s0, %s263
      $region40: #{seqmolec_forward.10} parent=35 // pred_fallthru
        _
      // Predicated region
      $region41: #{seqmolec_forward.10} parent=35 // pred_check
        %p265 = pneg %p61
      $region42: #{seqmolec_forward.10} parent=35 // pred_check_branch
        %267 = sbr.rel (%p265) target = $region44
      $region43: #{seqmolec_forward.10} parent=35 // pred_region
        %p268 = scmp.lt.s32.totalorder %s15, 1
        %s269 = scalar_select %p268, %s15, 1
        %s270 = smul.addr %s269, 8
        %s271 = scalar_lea.vmem %s1, %s270
      $region44: #{seqmolec_forward.10} parent=35 // pred_fallthru
        _
    $region36: #{seqmolec_forward.10} parent=5 // pred_fallthru
      _
    %p272 = scmp.le.s32.totalorder 1, %s15
    %p273 = scmp.lt.s32.totalorder %s15, 3
    %p274 = pnand %p272, %p273
    %p275 = pneg %p274
    // Predicated region
    $region45: #{seqmolec_forward.10} parent=5 // pred_check
      _
    $region46: #{seqmolec_forward.10} parent=5 // pred_check_branch
      %277 = sbr.rel (%p274) target = $region48
    $region47: #{seqmolec_forward.10} parent=5 // pred_region
      %s278 = ssub.s32 %s15, 1
      %p279 = scmp.lt.s32.totalorder %s20, 1
      %s280 = scalar_select %p279, %s20, 1
      %s281 = smul.addr %s280, 8
      %s282 = scalar_lea.vmem %s0, %s281
      %p283 = pneg %p41
      %p284 = pneg %p38
      %p285 = scmp.lt.s32.totalorder %s20, 1
      %s286 = scalar_select %p285, %s20, 1
      %s287 = smul.addr %s286, 8
      %s288 = scalar_lea.vmem %s1, %s287
      %p289 = pneg %p67
      %p290 = pneg %p64
      %p291 = pneg %p88
      %p292 = pneg %p85
      %p293 = pneg %p109
      %p294 = pneg %p106
      %p295 = pneg %p130
      %p296 = pneg %p127
      %p297 = pneg %p151
      %p298 = pneg %p148
      %p299 = pneg %p172
      %p300 = pneg %p169
      %p301 = pneg %p198
      %p302 = pneg %p195
      %p303 = scmp.lt.s32.totalorder %s20, 1
      %s304 = scalar_select %p303, %s20, 1
      %s305 = smul.addr %s304, 8
      %s306 = scalar_lea.vmem %s7, %s305
      %p307 = pneg %p224
      %p308 = pneg %p221
      %p309 = scmp.lt.s32.totalorder %s20, 1
      %s310 = scalar_select %p309, %s20, 1
      %s311 = smul.addr %s310, 2
      %s312 = scalar_lea.vmem %s8, %s311
      %p313 = scmp.lt.s32.totalorder %s20, 1
      %s314 = scalar_select %p313, %s20, 1
      %s315 = smul.addr %s314, 8
      %s316 = scalar_lea.vmem %s0, %s315
      %p317 = scmp.lt.s32.totalorder %s20, 1
      %s318 = scalar_select %p317, %s20, 1
      %s319 = smul.addr %s318, 8
      %s320 = scalar_lea.vmem %s1, %s319
      %p321 = scmp.lt.s32.totalorder %s20, 1
      %s322 = scalar_select %p321, %s20, 1
      %s323 = smul.addr %s322, 8
      %s324 = scalar_lea.vmem %s7, %s323
      %p325 = scmp.lt.s32.totalorder %s20, 1
      %s326 = scalar_select %p325, %s20, 1
      %s327 = smul.addr %s326, 2
      %s328 = scalar_lea.vmem %s8, %s327
      %v330 = vld [vmem:[%s320] sm:$0xff]
      %v331 = vld [vmem:[%s316] sm:$0xff]
      %333 = vset.pattern.permute.xlu0 0
      %334 = vperm.xlu0 %333, %v330
      %v335 = vpop.permute.xlu0 %334
      %v337 = vmul.f32 %v331, %v335
      %v338 = vld [vmem:[%s2] sm:$0x3]
      %v339 = vld [vmem:[%s3] sm:$0x1]
      %v340 = vld [vmem:[%s4] sm:$0x1]
      %v341 = vperm.slane %v338, 0
      %v342 = vsub.f32 %v337, %v341
      %v343 = vperm.slane %v338, 1
      %v344 = vmul.f32 %v342, %v343
      %v346 = vperm.slane %v339, 0
      %v348 = vmul.f32 %v346, %v344
      %v350 = vperm.slane %v340, 0
      %v352 = vadd.f32 %v348, %v350
      %v353 = vsub.f32 0.0, %v352
      %v354 = vmul.f32 %v353, 1.442695
      %v355 = vpow.pop %v354
      %v356 = vadd.f32 %v355, 1.0
      %v357 = vrcp.pop %v356
      %v358 = vmul.f32 %v352, %v357
      %v359 = vpack.c.bf16 %v358, %v358
      %v360 = vld [vmem:[%s5] sm:$0xf]
      %v361 = vld [vmem:[%s5 + $0x4] sm:$0xf]
      %v362 = vld [vmem:[%s5 + $0x8] sm:$0xf]
      %v363 = vld [vmem:[%s5 + $0xc] sm:$0xf]
      %v364 = vld [vmem:[%s6] sm:$0x1]
      %v366 = vperm.slane %v364, 0
      %v372 = vunpack.c.l.b16 %v360
      %v373 = vunpack.c.l.b16 %v361
      %v374 = vunpack.c.l.b16 %v362
      %v375 = vunpack.c.l.b16 %v363
      %v376 = vpack.c.b16 %v373, %v372
      %v377 = vpack.c.b16 %v375, %v374
      %vm380 = vcmask 261120
      %v382 = vsel %vm380, %v359, 0
      %384 = vmatpush.bf16.msra.mxu0 0
      %385 = vmatpush.bf16.msra.mxu0 0
      %386 = vmatpush.bf16.msra.mxu0 0
      %387 = vmatpush.bf16.msra.mxu0 0
      %388 = vmatpush.bf16.msra.mxu0 0
      %389 = vmatpush.bf16.msra.mxu0 0
      %390 = vmatpush.bf16.msra.mxu0 %v377
      %391 = vmatpush.bf16.msra.mxu0 %v376
      %392 = vmatmul.bf16.gmra.mxu0 %v382
      %v393 = vpop.f32.mrf.mxu0
      %v394 = vadd.f32 %v366, %v393
      %v395 = vpop.f32.mrf.mxu0
      %396 = vdwg.mxu0
      %vm397 = vcmask 64512
      %398 = vst.msk [vmem:[%s324] sm:$0xff] %vm397, %v394
      %v399 = vmul.f32 %v394, %v335
      %v400 = vsel %vm397, %v399, 0.0
      %v401 = vrot.slane %v400, 4
      %v402 = vadd.f32 %v400, %v401
      %v403 = vrot.slane %v402, 2
      %v404 = vadd.f32 %v402, %v403
      %v405 = vrot.slane %v404, 1
      %v406 = vadd.f32 %v404, %v405
      %vm407 = vcmask 57344
      %408 = vst.msk [vmem:[%s328] sm:$0x1] %vm407, %v406
      %v409 = vmul.f32 %v399, %v399
      %v410 = vsel %vm397, %v409, 0.0
      %v411 = vrot.slane %v410, 4
      %v412 = vadd.f32 %v410, %v411
      %v413 = vrot.slane %v412, 2
      %v414 = vadd.f32 %v412, %v413
      %v415 = vrot.slane %v414, 1
      %v416 = vadd.f32 %v414, %v415
      %417 = vst.msk [vmem:[%s328 + $0x1] sm:$0x1] %vm407, %v416
      %p418 = scmp.lt.s32.totalorder %s20, 1
      %s419 = scalar_select %p418, %s20, 1
      %s420 = smul.addr %s419, 8
      %s421 = scalar_lea.vmem %s7, %s420
      %p422 = scmp.lt.s32.totalorder %s20, 1
      %s423 = scalar_select %p422, %s20, 1
      %s424 = smul.addr %s423, 2
      %s425 = scalar_lea.vmem %s8, %s424
      // Predicated region
      $region49: #{seqmolec_forward.10} parent=47 // pred_check
        %p426 = pneg %p195
      $region50: #{seqmolec_forward.10} parent=47 // pred_check_branch
        %428 = sbr.rel (%p426) target = $region52
      $region51: #{seqmolec_forward.10} parent=47 // pred_region
        _
      $region52: #{seqmolec_forward.10} parent=47 // pred_fallthru
        _
      // Predicated region
      $region53: #{seqmolec_forward.10} parent=47 // pred_check
        %p429 = pneg %p221
      $region54: #{seqmolec_forward.10} parent=47 // pred_check_branch
        %431 = sbr.rel (%p429) target = $region56
      $region55: #{seqmolec_forward.10} parent=47 // pred_region
        _
      $region56: #{seqmolec_forward.10} parent=47 // pred_fallthru
        _
    $region48: #{seqmolec_forward.10} parent=5 // pred_fallthru
      _
    %p432 = scmp.le.s32.totalorder 2, %s15
    // Predicated region
    $region57: #{seqmolec_forward.10} parent=5 // pred_check
      %p433 = pneg %p432
    $region58: #{seqmolec_forward.10} parent=5 // pred_check_branch
      %435 = sbr.rel (%p433) target = $region60
    $region59: #{seqmolec_forward.10} parent=5 // pred_region
      %s436 = ssub.s32 %s15, 2
      // Predicated region
      $region61: #{seqmolec_forward.10} parent=59 // pred_check
        %p437 = pneg %p201
      $region62: #{seqmolec_forward.10} parent=59 // pred_check_branch
        %439 = sbr.rel (%p437) target = $region64
      $region63: #{seqmolec_forward.10} parent=59 // pred_region
        %p440 = scmp.lt.s32.totalorder %s21, 1
        %s441 = scalar_select %p440, %s21, 1
        %s442 = smul.addr %s441, 8
        %s443 = scalar_lea.vmem %s7, %s442
      $region64: #{seqmolec_forward.10} parent=59 // pred_fallthru
        _
      // Predicated region
      $region65: #{seqmolec_forward.10} parent=59 // pred_check
        %p444 = pneg %p227
      $region66: #{seqmolec_forward.10} parent=59 // pred_check_branch
        %446 = sbr.rel (%p444) target = $region68
      $region67: #{seqmolec_forward.10} parent=59 // pred_region
        %p447 = scmp.lt.s32.totalorder %s21, 1
        %s448 = scalar_select %p447, %s21, 1
        %s449 = smul.addr %s448, 2
        %s450 = scalar_lea.vmem %s8, %s449
      $region68: #{seqmolec_forward.10} parent=59 // pred_fallthru
        _
    $region60: #{seqmolec_forward.10} parent=5 // pred_fallthru
      _
  $region6: #{seqmolec_forward.10} parent=0 // loop_footer
    %s19 = sadd.s32 1, %s15
  $region7: #{seqmolec_forward.10} parent=0 // loop_footer_branch
    %14 = sbr.rel target = $region3
  $region8: #{seqmolec_forward.10} parent=0 // loop_exit
    _

// kernel: seqmolec_forward.12
$region0: #{seqmolec_forward.12}
  #allocation0 [shape = 'u32[]', space=smem, size = 0x4, offset = 0x4, fixed_abs, tag = 'smem constant byte address 0x4 - core index']
  #allocation1 [shape = 'u32[72,128]{1,0:T(1,128)}', space=vmem, size = 0x9000, scoped, tag = 'internal scratch']
  %s0 = inlined_call_operand.vmem [shape: f32[16,32], index: 0, kind: input, shape index: {}, may-alias: {0,8}]
  %s1 = inlined_call_operand.vmem [shape: f32[16,8], index: 1, kind: input, shape index: {}]
  %s2 = inlined_call_operand.vmem [shape: f32[16,1], index: 2, kind: input, shape index: {}]
  %s3 = inlined_call_operand.vmem [shape: f32[2,8], index: 3, kind: input, shape index: {}]
  %s4 = inlined_call_operand.vmem [shape: f32[1,8], index: 4, kind: input, shape index: {}]
  %s5 = inlined_call_operand.vmem [shape: f32[1,8], index: 5, kind: input, shape index: {}]
  %s6 = inlined_call_operand.vmem [shape: bf16[8,32], index: 6, kind: input, shape index: {}]
  %s7 = inlined_call_operand.vmem [shape: f32[1,32], index: 7, kind: input, shape index: {}]
  %s8 = inlined_call_operand.vmem [shape: f32[16,32], index: 8, kind: output, shape index: {0}, may-alias: {0,8}]
  %s9 = inlined_call_operand.vmem [shape: f32[2,2,32], index: 9, kind: output, shape index: {1}]
  %10 = xla_tuple %s8, %s9
  %s11 = sld [smem:[#allocation0]]
  $region73: #{seqmolec_forward.12} parent=0
    _
  %s13 = ssub.s32 1, %s11
  %s14 = scalar_select 0, %s13, %s11
  loop: start=0, step=1, limit=4
  $region2: #{seqmolec_forward.12} parent=0 // loop_pre_header
    _
  $region3: #{seqmolec_forward.12} parent=0 // loop_header
    %s16 = sphi 0, %s20
    %p17 = scmp.ge.s32.totalorder %s16, 4
    %s26 = sphi 0, %s28
    %s29 = sphi 0, %s26
    %s30 = sphi 0, %s29
    %s46 = sphi 0, %s30
    %s52 = sphi 0, %s54
    %s55 = sphi 0, %s52
    %s56 = sphi 0, %s55
    %s72 = sphi 0, %s56
    %s78 = sphi 0, %s80
    %s81 = sphi 0, %s78
    %s82 = sphi 0, %s81
    %s98 = sphi 0, %s82
    %s102 = sphi 0, %s102
    %s104 = sphi 0, %s102
    %s105 = sphi 0, %s104
    %s119 = sphi 0, %s105
    %s123 = sphi 0, %s123
    %s125 = sphi 0, %s123
    %s126 = sphi 0, %s125
    %s140 = sphi 0, %s126
    %s144 = sphi 0, %s144
    %s146 = sphi 0, %s144
    %s147 = sphi 0, %s146
    %s161 = sphi 0, %s147
    %s165 = sphi 0, %s165
    %s167 = sphi 0, %s165
    %s168 = sphi 0, %s167
    %s182 = sphi 0, %s168
    %s186 = sphi 0, %s186
    %s188 = sphi 0, %s186
    %s189 = sphi 0, %s188
    %s203 = sphi 0, %s189
    %s209 = sphi 0, %s211
    %s212 = sphi 0, %s209
    %s213 = sphi 0, %s212
    %s229 = sphi 0, %s213
    %s235 = sphi 0, %s237
    %s238 = sphi 0, %s235
    %s239 = sphi 0, %s238
    %s255 = sphi 0, %s239
  $region4: #{seqmolec_forward.12} parent=0 // loop_header_branch
    %19 = sbr.rel (%p17) target = $region8
  $region5: #{seqmolec_forward.12} parent=0 // loop_body
    %s21 = ssub.s32 %s16, 1
    %s22 = ssub.s32 %s16, 2
    %s23 = sadd.s32 %s16, 1
    %s24 = ssub.s32 %s16, %s23
    %p25 = scmp.eq.s32.totalorder %s24, 0
    %s27 = sadd.s32 %s26, 1
    %s28 = scalar_select %p25, %s26, %s27
    %p31 = pneg %p25
    %p32 = scmp.eq.s32.totalorder %s16, 1
    %p33 = por %p31, %p32
    %p34 = scmp.ne.s32.totalorder %s26, %s29
    %p35 = scmp.eq.s32.totalorder %s16, 0
    %p36 = por %p34, %p35
    %p37 = scmp.ne.s32.totalorder %s26, %s29
    %p38 = scmp.eq.s32.totalorder %s21, 1
    %p39 = por %p37, %p38
    %p40 = scmp.ne.s32.totalorder %s29, %s30
    %p41 = scmp.eq.s32.totalorder %s21, 0
    %p42 = por %p40, %p41
    %p43 = scmp.ne.s32.totalorder %s29, %s30
    %p44 = scmp.eq.s32.totalorder %s22, 1
    %p45 = por %p43, %p44
    %p47 = scmp.ne.s32.totalorder %s30, %s46
    %p48 = scmp.eq.s32.totalorder %s22, 0
    %p49 = por %p47, %p48
    %s50 = ssub.s32 %s16, %s23
    %p51 = scmp.eq.s32.totalorder %s50, 0
    %s53 = sadd.s32 %s52, 1
    %s54 = scalar_select %p51, %s52, %s53
    %p57 = pneg %p51
    %p58 = scmp.eq.s32.totalorder %s16, 1
    %p59 = por %p57, %p58
    %p60 = scmp.ne.s32.totalorder %s52, %s55
    %p61 = scmp.eq.s32.totalorder %s16, 0
    %p62 = por %p60, %p61
    %p63 = scmp.ne.s32.totalorder %s52, %s55
    %p64 = scmp.eq.s32.totalorder %s21, 1
    %p65 = por %p63, %p64
    %p66 = scmp.ne.s32.totalorder %s55, %s56
    %p67 = scmp.eq.s32.totalorder %s21, 0
    %p68 = por %p66, %p67
    %p69 = scmp.ne.s32.totalorder %s55, %s56
    %p70 = scmp.eq.s32.totalorder %s22, 1
    %p71 = por %p69, %p70
    %p73 = scmp.ne.s32.totalorder %s56, %s72
    %p74 = scmp.eq.s32.totalorder %s22, 0
    %p75 = por %p73, %p74
    %s76 = ssub.s32 %s16, %s23
    %p77 = scmp.eq.s32.totalorder %s76, 0
    %s79 = sadd.s32 %s78, 1
    %s80 = scalar_select %p77, %s78, %s79
    %p83 = pneg %p77
    %p84 = scmp.eq.s32.totalorder %s16, 1
    %p85 = por %p83, %p84
    %p86 = scmp.ne.s32.totalorder %s78, %s81
    %p87 = scmp.eq.s32.totalorder %s16, 0
    %p88 = por %p86, %p87
    %p89 = scmp.ne.s32.totalorder %s78, %s81
    %p90 = scmp.eq.s32.totalorder %s21, 1
    %p91 = por %p89, %p90
    %p92 = scmp.ne.s32.totalorder %s81, %s82
    %p93 = scmp.eq.s32.totalorder %s21, 0
    %p94 = por %p92, %p93
    %p95 = scmp.ne.s32.totalorder %s81, %s82
    %p96 = scmp.eq.s32.totalorder %s22, 1
    %p97 = por %p95, %p96
    %p99 = scmp.ne.s32.totalorder %s82, %s98
    %p100 = scmp.eq.s32.totalorder %s22, 0
    %p101 = por %p99, %p100
    %s103 = sadd.s32 %s102, 1
    %p106 = scmp.eq.s32.totalorder %s16, 1
    %p107 = scmp.ne.s32.totalorder %s102, %s104
    %p108 = scmp.eq.s32.totalorder %s16, 0
    %p109 = por %p107, %p108
    %p110 = scmp.ne.s32.totalorder %s102, %s104
    %p111 = scmp.eq.s32.totalorder %s21, 1
    %p112 = por %p110, %p111
    %p113 = scmp.ne.s32.totalorder %s104, %s105
    %p114 = scmp.eq.s32.totalorder %s21, 0
    %p115 = por %p113, %p114
    %p116 = scmp.ne.s32.totalorder %s104, %s105
    %p117 = scmp.eq.s32.totalorder %s22, 1
    %p118 = por %p116, %p117
    %p120 = scmp.ne.s32.totalorder %s105, %s119
    %p121 = scmp.eq.s32.totalorder %s22, 0
    %p122 = por %p120, %p121
    %s124 = sadd.s32 %s123, 1
    %p127 = scmp.eq.s32.totalorder %s16, 1
    %p128 = scmp.ne.s32.totalorder %s123, %s125
    %p129 = scmp.eq.s32.totalorder %s16, 0
    %p130 = por %p128, %p129
    %p131 = scmp.ne.s32.totalorder %s123, %s125
    %p132 = scmp.eq.s32.totalorder %s21, 1
    %p133 = por %p131, %p132
    %p134 = scmp.ne.s32.totalorder %s125, %s126
    %p135 = scmp.eq.s32.totalorder %s21, 0
    %p136 = por %p134, %p135
    %p137 = scmp.ne.s32.totalorder %s125, %s126
    %p138 = scmp.eq.s32.totalorder %s22, 1
    %p139 = por %p137, %p138
    %p141 = scmp.ne.s32.totalorder %s126, %s140
    %p142 = scmp.eq.s32.totalorder %s22, 0
    %p143 = por %p141, %p142
    %s145 = sadd.s32 %s144, 1
    %p148 = scmp.eq.s32.totalorder %s16, 1
    %p149 = scmp.ne.s32.totalorder %s144, %s146
    %p150 = scmp.eq.s32.totalorder %s16, 0
    %p151 = por %p149, %p150
    %p152 = scmp.ne.s32.totalorder %s144, %s146
    %p153 = scmp.eq.s32.totalorder %s21, 1
    %p154 = por %p152, %p153
    %p155 = scmp.ne.s32.totalorder %s146, %s147
    %p156 = scmp.eq.s32.totalorder %s21, 0
    %p157 = por %p155, %p156
    %p158 = scmp.ne.s32.totalorder %s146, %s147
    %p159 = scmp.eq.s32.totalorder %s22, 1
    %p160 = por %p158, %p159
    %p162 = scmp.ne.s32.totalorder %s147, %s161
    %p163 = scmp.eq.s32.totalorder %s22, 0
    %p164 = por %p162, %p163
    %s166 = sadd.s32 %s165, 1
    %p169 = scmp.eq.s32.totalorder %s16, 1
    %p170 = scmp.ne.s32.totalorder %s165, %s167
    %p171 = scmp.eq.s32.totalorder %s16, 0
    %p172 = por %p170, %p171
    %p173 = scmp.ne.s32.totalorder %s165, %s167
    %p174 = scmp.eq.s32.totalorder %s21, 1
    %p175 = por %p173, %p174
    %p176 = scmp.ne.s32.totalorder %s167, %s168
    %p177 = scmp.eq.s32.totalorder %s21, 0
    %p178 = por %p176, %p177
    %p179 = scmp.ne.s32.totalorder %s167, %s168
    %p180 = scmp.eq.s32.totalorder %s22, 1
    %p181 = por %p179, %p180
    %p183 = scmp.ne.s32.totalorder %s168, %s182
    %p184 = scmp.eq.s32.totalorder %s22, 0
    %p185 = por %p183, %p184
    %s187 = sadd.s32 %s186, 1
    %p190 = scmp.eq.s32.totalorder %s16, 1
    %p191 = scmp.ne.s32.totalorder %s186, %s188
    %p192 = scmp.eq.s32.totalorder %s16, 0
    %p193 = por %p191, %p192
    %p194 = scmp.ne.s32.totalorder %s186, %s188
    %p195 = scmp.eq.s32.totalorder %s21, 1
    %p196 = por %p194, %p195
    %p197 = scmp.ne.s32.totalorder %s188, %s189
    %p198 = scmp.eq.s32.totalorder %s21, 0
    %p199 = por %p197, %p198
    %p200 = scmp.ne.s32.totalorder %s188, %s189
    %p201 = scmp.eq.s32.totalorder %s22, 1
    %p202 = por %p200, %p201
    %p204 = scmp.ne.s32.totalorder %s189, %s203
    %p205 = scmp.eq.s32.totalorder %s22, 0
    %p206 = por %p204, %p205
    %s207 = ssub.s32 %s16, %s23
    %p208 = scmp.eq.s32.totalorder %s207, 0
    %s210 = sadd.s32 %s209, 1
    %s211 = scalar_select %p208, %s209, %s210
    %p214 = pneg %p208
    %p215 = scmp.eq.s32.totalorder %s16, 1
    %p216 = por %p214, %p215
    %p217 = scmp.ne.s32.totalorder %s209, %s212
    %p218 = scmp.eq.s32.totalorder %s16, 0
    %p219 = por %p217, %p218
    %p220 = scmp.ne.s32.totalorder %s209, %s212
    %p221 = scmp.eq.s32.totalorder %s21, 1
    %p222 = por %p220, %p221
    %p223 = scmp.ne.s32.totalorder %s212, %s213
    %p224 = scmp.eq.s32.totalorder %s21, 0
    %p225 = por %p223, %p224
    %p226 = scmp.ne.s32.totalorder %s212, %s213
    %p227 = scmp.eq.s32.totalorder %s22, 1
    %p228 = por %p226, %p227
    %p230 = scmp.ne.s32.totalorder %s213, %s229
    %p231 = scmp.eq.s32.totalorder %s22, 0
    %p232 = por %p230, %p231
    %s233 = ssub.s32 %s16, %s23
    %p234 = scmp.eq.s32.totalorder %s233, 0
    %s236 = sadd.s32 %s235, 1
    %s237 = scalar_select %p234, %s235, %s236
    %p240 = pneg %p234
    %p241 = scmp.eq.s32.totalorder %s16, 1
    %p242 = por %p240, %p241
    %p243 = scmp.ne.s32.totalorder %s235, %s238
    %p244 = scmp.eq.s32.totalorder %s16, 0
    %p245 = por %p243, %p244
    %p246 = scmp.ne.s32.totalorder %s235, %s238
    %p247 = scmp.eq.s32.totalorder %s21, 1
    %p248 = por %p246, %p247
    %p249 = scmp.ne.s32.totalorder %s238, %s239
    %p250 = scmp.eq.s32.totalorder %s21, 0
    %p251 = por %p249, %p250
    %p252 = scmp.ne.s32.totalorder %s238, %s239
    %p253 = scmp.eq.s32.totalorder %s22, 1
    %p254 = por %p252, %p253
    %p256 = scmp.ne.s32.totalorder %s239, %s255
    %p257 = scmp.eq.s32.totalorder %s22, 0
    %p258 = por %p256, %p257
    %p259 = scmp.le.s32.totalorder 1, %s16
    %p260 = scmp.lt.s32.totalorder %s16, 3
    %p261 = pnand %p259, %p260
    %p262 = pneg %p261
    // Predicated region
    $region9: #{seqmolec_forward.12} parent=5 // pred_check
      _
    $region10: #{seqmolec_forward.12} parent=5 // pred_check_branch
      %264 = sbr.rel (%p261) target = $region12
    $region11: #{seqmolec_forward.12} parent=5 // pred_region
      %s265 = ssub.s32 %s16, 1
      // Predicated region
      $region13: #{seqmolec_forward.12} parent=11 // pred_check
        %p266 = pneg %p115
      $region14: #{seqmolec_forward.12} parent=11 // pred_check_branch
        %268 = sbr.rel (%p266) target = $region16
      $region15: #{seqmolec_forward.12} parent=11 // pred_region
        _
      $region16: #{seqmolec_forward.12} parent=11 // pred_fallthru
        _
      // Predicated region
      $region17: #{seqmolec_forward.12} parent=11 // pred_check
        %p269 = pneg %p136
      $region18: #{seqmolec_forward.12} parent=11 // pred_check_branch
        %271 = sbr.rel (%p269) target = $region20
      $region19: #{seqmolec_forward.12} parent=11 // pred_region
        _
      $region20: #{seqmolec_forward.12} parent=11 // pred_fallthru
        _
      // Predicated region
      $region21: #{seqmolec_forward.12} parent=11 // pred_check
        %p272 = pneg %p157
      $region22: #{seqmolec_forward.12} parent=11 // pred_check_branch
        %274 = sbr.rel (%p272) target = $region24
      $region23: #{seqmolec_forward.12} parent=11 // pred_region
        _
      $region24: #{seqmolec_forward.12} parent=11 // pred_fallthru
        _
      // Predicated region
      $region25: #{seqmolec_forward.12} parent=11 // pred_check
        %p275 = pneg %p178
      $region26: #{seqmolec_forward.12} parent=11 // pred_check_branch
        %277 = sbr.rel (%p275) target = $region28
      $region27: #{seqmolec_forward.12} parent=11 // pred_region
        _
      $region28: #{seqmolec_forward.12} parent=11 // pred_fallthru
        _
      // Predicated region
      $region29: #{seqmolec_forward.12} parent=11 // pred_check
        %p278 = pneg %p199
      $region30: #{seqmolec_forward.12} parent=11 // pred_check_branch
        %280 = sbr.rel (%p278) target = $region32
      $region31: #{seqmolec_forward.12} parent=11 // pred_region
        _
      $region32: #{seqmolec_forward.12} parent=11 // pred_fallthru
        _
    $region12: #{seqmolec_forward.12} parent=5 // pred_fallthru
      _
    %p281 = scmp.lt.s32.totalorder %s16, 2
    // Predicated region
    $region33: #{seqmolec_forward.12} parent=5 // pred_check
      %p282 = pneg %p281
    $region34: #{seqmolec_forward.12} parent=5 // pred_check_branch
      %284 = sbr.rel (%p282) target = $region36
    $region35: #{seqmolec_forward.12} parent=5 // pred_region
      // Predicated region
      $region37: #{seqmolec_forward.12} parent=35 // pred_check
        %p285 = pneg %p36
      $region38: #{seqmolec_forward.12} parent=35 // pred_check_branch
        %287 = sbr.rel (%p285) target = $region40
      $region39: #{seqmolec_forward.12} parent=35 // pred_region
        %p288 = scmp.lt.s32.totalorder %s16, 1
        %s289 = scalar_select %p288, %s16, 1
        %s290 = smul.addr %s289, 8
        %s291 = scalar_lea.vmem %s0, %s290
      $region40: #{seqmolec_forward.12} parent=35 // pred_fallthru
        _
      // Predicated region
      $region41: #{seqmolec_forward.12} parent=35 // pred_check
        %p292 = pneg %p62
      $region42: #{seqmolec_forward.12} parent=35 // pred_check_branch
        %294 = sbr.rel (%p292) target = $region44
      $region43: #{seqmolec_forward.12} parent=35 // pred_region
        %p295 = scmp.lt.s32.totalorder %s16, 1
        %s296 = scalar_select %p295, %s16, 1
        %s297 = smul.addr %s296, 8
        %s298 = scalar_lea.vmem %s1, %s297
      $region44: #{seqmolec_forward.12} parent=35 // pred_fallthru
        _
      // Predicated region
      $region45: #{seqmolec_forward.12} parent=35 // pred_check
        %p299 = pneg %p88
      $region46: #{seqmolec_forward.12} parent=35 // pred_check_branch
        %301 = sbr.rel (%p299) target = $region48
      $region47: #{seqmolec_forward.12} parent=35 // pred_region
        %p302 = scmp.lt.s32.totalorder %s16, 1
        %s303 = scalar_select %p302, %s16, 1
        %s304 = smul.addr %s303, 8
        %s305 = scalar_lea.vmem %s2, %s304
      $region48: #{seqmolec_forward.12} parent=35 // pred_fallthru
        _
    $region36: #{seqmolec_forward.12} parent=5 // pred_fallthru
      _
    %p306 = scmp.le.s32.totalorder 1, %s16
    %p307 = scmp.lt.s32.totalorder %s16, 3
    %p308 = pnand %p306, %p307
    %p309 = pneg %p308
    // Predicated region
    $region49: #{seqmolec_forward.12} parent=5 // pred_check
      _
    $region50: #{seqmolec_forward.12} parent=5 // pred_check_branch
      %311 = sbr.rel (%p308) target = $region52
    $region51: #{seqmolec_forward.12} parent=5 // pred_region
      %s312 = ssub.s32 %s16, 1
      %p313 = scmp.lt.s32.totalorder %s21, 1
      %s314 = scalar_select %p313, %s21, 1
      %s315 = smul.addr %s314, 8
      %s316 = scalar_lea.vmem %s0, %s315
      %p317 = pneg %p42
      %p318 = pneg %p39
      %p319 = scmp.lt.s32.totalorder %s21, 1
      %s320 = scalar_select %p319, %s21, 1
      %s321 = smul.addr %s320, 8
      %s322 = scalar_lea.vmem %s1, %s321
      %p323 = pneg %p68
      %p324 = pneg %p65
      %p325 = scmp.lt.s32.totalorder %s21, 1
      %s326 = scalar_select %p325, %s21, 1
      %s327 = smul.addr %s326, 8
      %s328 = scalar_lea.vmem %s2, %s327
      %p329 = pneg %p94
      %p330 = pneg %p91
      %p331 = pneg %p115
      %p332 = pneg %p112
      %p333 = pneg %p136
      %p334 = pneg %p133
      %p335 = pneg %p157
      %p336 = pneg %p154
      %p337 = pneg %p178
      %p338 = pneg %p175
      %p339 = pneg %p199
      %p340 = pneg %p196
      %p341 = pneg %p225
      %p342 = pneg %p222
      %p343 = scmp.lt.s32.totalorder %s21, 1
      %s344 = scalar_select %p343, %s21, 1
      %s345 = smul.addr %s344, 8
      %s346 = scalar_lea.vmem %s8, %s345
      %p347 = pneg %p251
      %p348 = pneg %p248
      %p349 = scmp.lt.s32.totalorder %s21, 1
      %s350 = scalar_select %p349, %s21, 1
      %s351 = smul.addr %s350, 2
      %s352 = scalar_lea.vmem %s9, %s351
      %p353 = scmp.lt.s32.totalorder %s21, 1
      %s354 = scalar_select %p353, %s21, 1
      %s355 = smul.addr %s354, 8
      %s356 = scalar_lea.vmem %s0, %s355
      %p357 = scmp.lt.s32.totalorder %s21, 1
      %s358 = scalar_select %p357, %s21, 1
      %s359 = smul.addr %s358, 8
      %s360 = scalar_lea.vmem %s1, %s359
      %p361 = scmp.lt.s32.totalorder %s21, 1
      %s362 = scalar_select %p361, %s21, 1
      %s363 = smul.addr %s362, 8
      %s364 = scalar_lea.vmem %s2, %s363
      %p365 = scmp.lt.s32.totalorder %s21, 1
      %s366 = scalar_select %p365, %s21, 1
      %s367 = smul.addr %s366, 8
      %s368 = scalar_lea.vmem %s8, %s367
      %p369 = scmp.lt.s32.totalorder %s21, 1
      %s370 = scalar_select %p369, %s21, 1
      %s371 = smul.addr %s370, 2
      %s372 = scalar_lea.vmem %s9, %s371
      %v374 = vld [vmem:[%s364] sm:$0xff]
      %v375 = vld [vmem:[%s360] sm:$0xff]
      %377 = vset.pattern.permute.xlu0 0
      %378 = vperm.xlu0 %377, %v374
      %v379 = vpop.permute.xlu0 %378
      %v381 = vmul.f32 %v375, %v379
      %v382 = vld [vmem:[%s3] sm:$0x3]
      %v383 = vld [vmem:[%s4] sm:$0x1]
      %v384 = vld [vmem:[%s5] sm:$0x1]
      %v385 = vperm.slane %v382, 0
      %v386 = vsub.f32 %v381, %v385
      %v387 = vperm.slane %v382, 1
      %v388 = vmul.f32 %v386, %v387
      %v390 = vperm.slane %v383, 0
      %v392 = vmul.f32 %v390, %v388
      %v394 = vperm.slane %v384, 0
      %v396 = vadd.f32 %v392, %v394
      %v397 = vsub.f32 0.0, %v396
      %v398 = vmul.f32 %v397, 1.442695
      %v399 = vpow.pop %v398
      %v400 = vadd.f32 %v399, 1.0
      %v401 = vrcp.pop %v400
      %v402 = vmul.f32 %v396, %v401
      %v403 = vld [vmem:[%s356] sm:$0xff]
      %v404 = vpack.c.bf16 %v402, %v402
      %v405 = vld [vmem:[%s6] sm:$0xf]
      %vm406 = vcmask 64512
      %v408 = vsel %vm406, %v404, 0
      %vm410 = vcmask 1043456
      %v412 = vsel %vm410, %v405, 0
      %414 = vmatpush.bf16.msra.mxu0 0
      %415 = vmatpush.bf16.msra.mxu0 0
      %416 = vmatpush.bf16.msra.mxu0 0
      %417 = vmatpush.bf16.msra.mxu0 0
      %418 = vmatpush.bf16.msra.mxu0 0
      %419 = vmatpush.bf16.msra.mxu0 0
      %420 = vmatpush.bf16.msra.mxu0 0
      %421 = vmatpush.bf16.msra.mxu0 %v412
      %422 = vmatmul.bf16.gmra.mxu0 %v408
      %v423 = vpop.f32.mrf.mxu0
      %v424 = vadd.f32 0.0, %v423
      %v425 = vpop.f32.mrf.mxu0
      %426 = vdwg.mxu0
      %v427 = vadd.f32 %v403, %v424
      %v428 = vld [vmem:[%s7] sm:$0x1]
      %v430 = vperm.slane %v428, 0
      %v432 = vadd.f32 %v427, %v430
      %vm433 = vcmask 261120
      %434 = vst.msk [vmem:[%s368] sm:$0xff] %vm433, %v432
      %v435 = vmul.f32 %v432, %v379
      %v436 = vsel %vm433, %v435, 0.0
      %v437 = vrot.slane %v436, 4
      %v438 = vadd.f32 %v436, %v437
      %v439 = vrot.slane %v438, 2
      %v440 = vadd.f32 %v438, %v439
      %v441 = vrot.slane %v440, 1
      %v442 = vadd.f32 %v440, %v441
      %vm443 = vcmask 253952
      %444 = vst.msk [vmem:[%s372] sm:$0x1] %vm443, %v442
      %v445 = vmul.f32 %v435, %v435
      %v446 = vsel %vm433, %v445, 0.0
      %v447 = vrot.slane %v446, 4
      %v448 = vadd.f32 %v446, %v447
      %v449 = vrot.slane %v448, 2
      %v450 = vadd.f32 %v448, %v449
      %v451 = vrot.slane %v450, 1
      %v452 = vadd.f32 %v450, %v451
      %453 = vst.msk [vmem:[%s372 + $0x1] sm:$0x1] %vm443, %v452
      %p454 = scmp.lt.s32.totalorder %s21, 1
      %s455 = scalar_select %p454, %s21, 1
      %s456 = smul.addr %s455, 8
      %s457 = scalar_lea.vmem %s8, %s456
      %p458 = scmp.lt.s32.totalorder %s21, 1
      %s459 = scalar_select %p458, %s21, 1
      %s460 = smul.addr %s459, 2
      %s461 = scalar_lea.vmem %s9, %s460
      // Predicated region
      $region53: #{seqmolec_forward.12} parent=51 // pred_check
        %p462 = pneg %p222
      $region54: #{seqmolec_forward.12} parent=51 // pred_check_branch
        %464 = sbr.rel (%p462) target = $region56
      $region55: #{seqmolec_forward.12} parent=51 // pred_region
        _
      $region56: #{seqmolec_forward.12} parent=51 // pred_fallthru
        _
      // Predicated region
      $region57: #{seqmolec_forward.12} parent=51 // pred_check
        %p465 = pneg %p248
      $region58: #{seqmolec_forward.12} parent=51 // pred_check_branch
        %467 = sbr.rel (%p465) target = $region60
      $region59: #{seqmolec_forward.12} parent=51 // pred_region
        _
      $region60: #{seqmolec_forward.12} parent=51 // pred_fallthru
        _
    $region52: #{seqmolec_forward.12} parent=5 // pred_fallthru
      _
    %p468 = scmp.le.s32.totalorder 2, %s16
    // Predicated region
    $region61: #{seqmolec_forward.12} parent=5 // pred_check
      %p469 = pneg %p468
    $region62: #{seqmolec_forward.12} parent=5 // pred_check_branch
      %471 = sbr.rel (%p469) target = $region64
    $region63: #{seqmolec_forward.12} parent=5 // pred_region
      %s472 = ssub.s32 %s16, 2
      // Predicated region
      $region65: #{seqmolec_forward.12} parent=63 // pred_check
        %p473 = pneg %p228
      $region66: #{seqmolec_forward.12} parent=63 // pred_check_branch
        %475 = sbr.rel (%p473) target = $region68
      $region67: #{seqmolec_forward.12} parent=63 // pred_region
        %p476 = scmp.lt.s32.totalorder %s22, 1
        %s477 = scalar_select %p476, %s22, 1
        %s478 = smul.addr %s477, 8
        %s479 = scalar_lea.vmem %s8, %s478
      $region68: #{seqmolec_forward.12} parent=63 // pred_fallthru
        _
      // Predicated region
      $region69: #{seqmolec_forward.12} parent=63 // pred_check
        %p480 = pneg %p254
      $region70: #{seqmolec_forward.12} parent=63 // pred_check_branch
        %482 = sbr.rel (%p480) target = $region72
      $region71: #{seqmolec_forward.12} parent=63 // pred_region
        %p483 = scmp.lt.s32.totalorder %s22, 1
        %s484 = scalar_select %p483, %s22, 1
        %s485 = smul.addr %s484, 2
        %s486 = scalar_lea.vmem %s9, %s485
      $region72: #{seqmolec_forward.12} parent=63 // pred_fallthru
        _
    $region64: #{seqmolec_forward.12} parent=5 // pred_fallthru
      _
  $region6: #{seqmolec_forward.12} parent=0 // loop_footer
    %s20 = sadd.s32 1, %s16
  $region7: #{seqmolec_forward.12} parent=0 // loop_footer_branch
    %15 = sbr.rel target = $region3
  $region8: #{seqmolec_forward.12} parent=0 // loop_exit
    _

// kernel: seqmolec_forward.19
$region0: #{seqmolec_forward.19}
  #allocation0 [shape = 'u32[]', space=smem, size = 0x4, offset = 0x4, fixed_abs, tag = 'smem constant byte address 0x4 - core index']
  #allocation1 [shape = 'u32[72,128]{1,0:T(1,128)}', space=vmem, size = 0x9000, scoped, tag = 'internal scratch']
  %s0 = inlined_call_operand.vmem [shape: f32[16,32], index: 0, kind: input, shape index: {}]
  %s1 = inlined_call_operand.vmem [shape: f32[16,1], index: 1, kind: input, shape index: {}]
  %s2 = inlined_call_operand.vmem [shape: f32[2,32], index: 2, kind: input, shape index: {}]
  %s3 = inlined_call_operand.vmem [shape: f32[1,32], index: 3, kind: input, shape index: {}]
  %s4 = inlined_call_operand.vmem [shape: f32[1,32], index: 4, kind: input, shape index: {}]
  %s5 = inlined_call_operand.vmem [shape: bf16[32,38], index: 5, kind: input, shape index: {}]
  %s6 = inlined_call_operand.vmem [shape: f32[1,38], index: 6, kind: input, shape index: {}]
  %s7 = inlined_call_operand.hbm [shape: f32[16,38], index: 7, kind: output, shape index: {0}]
  %s8 = inlined_call_operand.hbm [shape: f32[2,2,38], index: 8, kind: output, shape index: {1}]
  %9 = xla_tuple %s7, %s8
  %s10 = sld [smem:[#allocation0]]
  $region69: #{seqmolec_forward.19} parent=0
    _
  %s12 = ssub.s32 1, %s10
  %s13 = scalar_select 0, %s12, %s10
  $region1: #{seqmolec_forward.19} parent=0
    #allocation2 [shape = 'u8[8192]{0}', space=vmem, size = 0x2000, scoped, tag = 'output window, operand 0']
    #allocation3 [shape = 's32[2]{0}', space=sflag, size = 0x8, scoped, tag = 'scoped memory for seqmolec_forward.19']
    #allocation4 [shape = 'u8[2048]{0}', space=vmem, size = 0x800, scoped, tag = 'output window, operand 1']
    #allocation5 [shape = 's32[2]{0}', space=sflag, size = 0x8, scoped, tag = 'scoped memory for seqmolec_forward.19']
    %14 = vsyncpa [#allocation3], 0
    %s15 = scalar_lea.sflag [#allocation3], 1
    %16 = vsyncpa %s15, 0
    %17 = vsyncpa [#allocation5], 0
    %s18 = scalar_lea.sflag [#allocation5], 1
    %19 = vsyncpa %s18, 0
    loop: start=0, step=1, limit=4
    $region2: #{seqmolec_forward.19} parent=1 // loop_pre_header
      _
    $region3: #{seqmolec_forward.19} parent=1 // loop_header
      %s21 = sphi 0, %s25
      %p22 = scmp.ge.s32.totalorder %s21, 4
      %s31 = sphi 0, %s33
      %s34 = sphi 0, %s31
      %s35 = sphi 0, %s34
      %s51 = sphi 0, %s35
      %s57 = sphi 0, %s59
      %s60 = sphi 0, %s57
      %s61 = sphi 0, %s60
      %s77 = sphi 0, %s61
      %s81 = sphi 0, %s81
      %s83 = sphi 0, %s81
      %s84 = sphi 0, %s83
      %s98 = sphi 0, %s84
      %s102 = sphi 0, %s102
      %s104 = sphi 0, %s102
      %s105 = sphi 0, %s104
      %s119 = sphi 0, %s105
      %s123 = sphi 0, %s123
      %s125 = sphi 0, %s123
      %s126 = sphi 0, %s125
      %s140 = sphi 0, %s126
      %s144 = sphi 0, %s144
      %s146 = sphi 0, %s144
      %s147 = sphi 0, %s146
      %s161 = sphi 0, %s147
      %s165 = sphi 0, %s165
      %s167 = sphi 0, %s165
      %s168 = sphi 0, %s167
      %s182 = sphi 0, %s168
      %s188 = sphi 0, %s190
      %s191 = sphi 0, %s188
      %s192 = sphi 0, %s191
      %s208 = sphi 0, %s192
      %s214 = sphi 0, %s216
      %s217 = sphi 0, %s214
      %s218 = sphi 0, %s217
      %s234 = sphi 0, %s218
    $region4: #{seqmolec_forward.19} parent=1 // loop_header_branch
      %24 = sbr.rel (%p22) target = $region8
    $region5: #{seqmolec_forward.19} parent=1 // loop_body
      %s26 = ssub.s32 %s21, 1
      %s27 = ssub.s32 %s21, 2
      %s28 = sadd.s32 %s21, 1
      %s29 = ssub.s32 %s21, %s28
      %p30 = scmp.eq.s32.totalorder %s29, 0
      %s32 = sadd.s32 %s31, 1
      %s33 = scalar_select %p30, %s31, %s32
      %p36 = pneg %p30
      %p37 = scmp.eq.s32.totalorder %s21, 1
      %p38 = por %p36, %p37
      %p39 = scmp.ne.s32.totalorder %s31, %s34
      %p40 = scmp.eq.s32.totalorder %s21, 0
      %p41 = por %p39, %p40
      %p42 = scmp.ne.s32.totalorder %s31, %s34
      %p43 = scmp.eq.s32.totalorder %s26, 1
      %p44 = por %p42, %p43
      %p45 = scmp.ne.s32.totalorder %s34, %s35
      %p46 = scmp.eq.s32.totalorder %s26, 0
      %p47 = por %p45, %p46
      %p48 = scmp.ne.s32.totalorder %s34, %s35
      %p49 = scmp.eq.s32.totalorder %s27, 1
      %p50 = por %p48, %p49
      %p52 = scmp.ne.s32.totalorder %s35, %s51
      %p53 = scmp.eq.s32.totalorder %s27, 0
      %p54 = por %p52, %p53
      %s55 = ssub.s32 %s21, %s28
      %p56 = scmp.eq.s32.totalorder %s55, 0
      %s58 = sadd.s32 %s57, 1
      %s59 = scalar_select %p56, %s57, %s58
      %p62 = pneg %p56
      %p63 = scmp.eq.s32.totalorder %s21, 1
      %p64 = por %p62, %p63
      %p65 = scmp.ne.s32.totalorder %s57, %s60
      %p66 = scmp.eq.s32.totalorder %s21, 0
      %p67 = por %p65, %p66
      %p68 = scmp.ne.s32.totalorder %s57, %s60
      %p69 = scmp.eq.s32.totalorder %s26, 1
      %p70 = por %p68, %p69
      %p71 = scmp.ne.s32.totalorder %s60, %s61
      %p72 = scmp.eq.s32.totalorder %s26, 0
      %p73 = por %p71, %p72
      %p74 = scmp.ne.s32.totalorder %s60, %s61
      %p75 = scmp.eq.s32.totalorder %s27, 1
      %p76 = por %p74, %p75
      %p78 = scmp.ne.s32.totalorder %s61, %s77
      %p79 = scmp.eq.s32.totalorder %s27, 0
      %p80 = por %p78, %p79
      %s82 = sadd.s32 %s81, 1
      %p85 = scmp.eq.s32.totalorder %s21, 1
      %p86 = scmp.ne.s32.totalorder %s81, %s83
      %p87 = scmp.eq.s32.totalorder %s21, 0
      %p88 = por %p86, %p87
      %p89 = scmp.ne.s32.totalorder %s81, %s83
      %p90 = scmp.eq.s32.totalorder %s26, 1
      %p91 = por %p89, %p90
      %p92 = scmp.ne.s32.totalorder %s83, %s84
      %p93 = scmp.eq.s32.totalorder %s26, 0
      %p94 = por %p92, %p93
      %p95 = scmp.ne.s32.totalorder %s83, %s84
      %p96 = scmp.eq.s32.totalorder %s27, 1
      %p97 = por %p95, %p96
      %p99 = scmp.ne.s32.totalorder %s84, %s98
      %p100 = scmp.eq.s32.totalorder %s27, 0
      %p101 = por %p99, %p100
      %s103 = sadd.s32 %s102, 1
      %p106 = scmp.eq.s32.totalorder %s21, 1
      %p107 = scmp.ne.s32.totalorder %s102, %s104
      %p108 = scmp.eq.s32.totalorder %s21, 0
      %p109 = por %p107, %p108
      %p110 = scmp.ne.s32.totalorder %s102, %s104
      %p111 = scmp.eq.s32.totalorder %s26, 1
      %p112 = por %p110, %p111
      %p113 = scmp.ne.s32.totalorder %s104, %s105
      %p114 = scmp.eq.s32.totalorder %s26, 0
      %p115 = por %p113, %p114
      %p116 = scmp.ne.s32.totalorder %s104, %s105
      %p117 = scmp.eq.s32.totalorder %s27, 1
      %p118 = por %p116, %p117
      %p120 = scmp.ne.s32.totalorder %s105, %s119
      %p121 = scmp.eq.s32.totalorder %s27, 0
      %p122 = por %p120, %p121
      %s124 = sadd.s32 %s123, 1
      %p127 = scmp.eq.s32.totalorder %s21, 1
      %p128 = scmp.ne.s32.totalorder %s123, %s125
      %p129 = scmp.eq.s32.totalorder %s21, 0
      %p130 = por %p128, %p129
      %p131 = scmp.ne.s32.totalorder %s123, %s125
      %p132 = scmp.eq.s32.totalorder %s26, 1
      %p133 = por %p131, %p132
      %p134 = scmp.ne.s32.totalorder %s125, %s126
      %p135 = scmp.eq.s32.totalorder %s26, 0
      %p136 = por %p134, %p135
      %p137 = scmp.ne.s32.totalorder %s125, %s126
      %p138 = scmp.eq.s32.totalorder %s27, 1
      %p139 = por %p137, %p138
      %p141 = scmp.ne.s32.totalorder %s126, %s140
      %p142 = scmp.eq.s32.totalorder %s27, 0
      %p143 = por %p141, %p142
      %s145 = sadd.s32 %s144, 1
      %p148 = scmp.eq.s32.totalorder %s21, 1
      %p149 = scmp.ne.s32.totalorder %s144, %s146
      %p150 = scmp.eq.s32.totalorder %s21, 0
      %p151 = por %p149, %p150
      %p152 = scmp.ne.s32.totalorder %s144, %s146
      %p153 = scmp.eq.s32.totalorder %s26, 1
      %p154 = por %p152, %p153
      %p155 = scmp.ne.s32.totalorder %s146, %s147
      %p156 = scmp.eq.s32.totalorder %s26, 0
      %p157 = por %p155, %p156
      %p158 = scmp.ne.s32.totalorder %s146, %s147
      %p159 = scmp.eq.s32.totalorder %s27, 1
      %p160 = por %p158, %p159
      %p162 = scmp.ne.s32.totalorder %s147, %s161
      %p163 = scmp.eq.s32.totalorder %s27, 0
      %p164 = por %p162, %p163
      %s166 = sadd.s32 %s165, 1
      %p169 = scmp.eq.s32.totalorder %s21, 1
      %p170 = scmp.ne.s32.totalorder %s165, %s167
      %p171 = scmp.eq.s32.totalorder %s21, 0
      %p172 = por %p170, %p171
      %p173 = scmp.ne.s32.totalorder %s165, %s167
      %p174 = scmp.eq.s32.totalorder %s26, 1
      %p175 = por %p173, %p174
      %p176 = scmp.ne.s32.totalorder %s167, %s168
      %p177 = scmp.eq.s32.totalorder %s26, 0
      %p178 = por %p176, %p177
      %p179 = scmp.ne.s32.totalorder %s167, %s168
      %p180 = scmp.eq.s32.totalorder %s27, 1
      %p181 = por %p179, %p180
      %p183 = scmp.ne.s32.totalorder %s168, %s182
      %p184 = scmp.eq.s32.totalorder %s27, 0
      %p185 = por %p183, %p184
      %s186 = ssub.s32 %s21, %s28
      %p187 = scmp.eq.s32.totalorder %s186, 0
      %s189 = sadd.s32 %s188, 1
      %s190 = scalar_select %p187, %s188, %s189
      %p193 = pneg %p187
      %p194 = scmp.eq.s32.totalorder %s21, 1
      %p195 = por %p193, %p194
      %p196 = scmp.ne.s32.totalorder %s188, %s191
      %p197 = scmp.eq.s32.totalorder %s21, 0
      %p198 = por %p196, %p197
      %p199 = scmp.ne.s32.totalorder %s188, %s191
      %p200 = scmp.eq.s32.totalorder %s26, 1
      %p201 = por %p199, %p200
      %p202 = scmp.ne.s32.totalorder %s191, %s192
      %p203 = scmp.eq.s32.totalorder %s26, 0
      %p204 = por %p202, %p203
      %p205 = scmp.ne.s32.totalorder %s191, %s192
      %p206 = scmp.eq.s32.totalorder %s27, 1
      %p207 = por %p205, %p206
      %p209 = scmp.ne.s32.totalorder %s192, %s208
      %p210 = scmp.eq.s32.totalorder %s27, 0
      %p211 = por %p209, %p210
      %s212 = ssub.s32 %s21, %s28
      %p213 = scmp.eq.s32.totalorder %s212, 0
      %s215 = sadd.s32 %s214, 1
      %s216 = scalar_select %p213, %s214, %s215
      %p219 = pneg %p213
      %p220 = scmp.eq.s32.totalorder %s21, 1
      %p221 = por %p219, %p220
      %p222 = scmp.ne.s32.totalorder %s214, %s217
      %p223 = scmp.eq.s32.totalorder %s21, 0
      %p224 = por %p222, %p223
      %p225 = scmp.ne.s32.totalorder %s214, %s217
      %p226 = scmp.eq.s32.totalorder %s26, 1
      %p227 = por %p225, %p226
      %p228 = scmp.ne.s32.totalorder %s217, %s218
      %p229 = scmp.eq.s32.totalorder %s26, 0
      %p230 = por %p228, %p229
      %p231 = scmp.ne.s32.totalorder %s217, %s218
      %p232 = scmp.eq.s32.totalorder %s27, 1
      %p233 = por %p231, %p232
      %p235 = scmp.ne.s32.totalorder %s218, %s234
      %p236 = scmp.eq.s32.totalorder %s27, 0
      %p237 = por %p235, %p236
      %p238 = scmp.le.s32.totalorder 1, %s21
      %p239 = scmp.lt.s32.totalorder %s21, 3
      %p240 = pnand %p238, %p239
      %p241 = pneg %p240
      // Predicated region
      $region9: #{seqmolec_forward.19} parent=5 // pred_check
        _
      $region10: #{seqmolec_forward.19} parent=5 // pred_check_branch
        %243 = sbr.rel (%p240) target = $region12
      $region11: #{seqmolec_forward.19} parent=5 // pred_region
        %s244 = ssub.s32 %s21, 1
        // Predicated region
        $region13: #{seqmolec_forward.19} parent=11 // pred_check
          %p245 = pneg %p94
        $region14: #{seqmolec_forward.19} parent=11 // pred_check_branch
          %247 = sbr.rel (%p245) target = $region16
        $region15: #{seqmolec_forward.19} parent=11 // pred_region
          _
        $region16: #{seqmolec_forward.19} parent=11 // pred_fallthru
          _
        // Predicated region
        $region17: #{seqmolec_forward.19} parent=11 // pred_check
          %p248 = pneg %p115
        $region18: #{seqmolec_forward.19} parent=11 // pred_check_branch
          %250 = sbr.rel (%p248) target = $region20
        $region19: #{seqmolec_forward.19} parent=11 // pred_region
          _
        $region20: #{seqmolec_forward.19} parent=11 // pred_fallthru
          _
        // Predicated region
        $region21: #{seqmolec_forward.19} parent=11 // pred_check
          %p251 = pneg %p136
        $region22: #{seqmolec_forward.19} parent=11 // pred_check_branch
          %253 = sbr.rel (%p251) target = $region24
        $region23: #{seqmolec_forward.19} parent=11 // pred_region
          _
        $region24: #{seqmolec_forward.19} parent=11 // pred_fallthru
          _
        // Predicated region
        $region25: #{seqmolec_forward.19} parent=11 // pred_check
          %p254 = pneg %p157
        $region26: #{seqmolec_forward.19} parent=11 // pred_check_branch
          %256 = sbr.rel (%p254) target = $region28
        $region27: #{seqmolec_forward.19} parent=11 // pred_region
          _
        $region28: #{seqmolec_forward.19} parent=11 // pred_fallthru
          _
        // Predicated region
        $region29: #{seqmolec_forward.19} parent=11 // pred_check
          %p257 = pneg %p178
        $region30: #{seqmolec_forward.19} parent=11 // pred_check_branch
          %259 = sbr.rel (%p257) target = $region32
        $region31: #{seqmolec_forward.19} parent=11 // pred_region
          _
        $region32: #{seqmolec_forward.19} parent=11 // pred_fallthru
          _
      $region12: #{seqmolec_forward.19} parent=5 // pred_fallthru
        _
      %p260 = scmp.lt.s32.totalorder %s21, 2
      // Predicated region
      $region33: #{seqmolec_forward.19} parent=5 // pred_check
        %p261 = pneg %p260
      $region34: #{seqmolec_forward.19} parent=5 // pred_check_branch
        %263 = sbr.rel (%p261) target = $region36
      $region35: #{seqmolec_forward.19} parent=5 // pred_region
        // Predicated region
        $region37: #{seqmolec_forward.19} parent=35 // pred_check
          %p264 = pneg %p41
        $region38: #{seqmolec_forward.19} parent=35 // pred_check_branch
          %266 = sbr.rel (%p264) target = $region40
        $region39: #{seqmolec_forward.19} parent=35 // pred_region
          %p267 = scmp.lt.s32.totalorder %s21, 1
          %s268 = scalar_select %p267, %s21, 1
          %s269 = smul.addr %s268, 8
          %s270 = scalar_lea.vmem %s0, %s269
        $region40: #{seqmolec_forward.19} parent=35 // pred_fallthru
          _
        // Predicated region
        $region41: #{seqmolec_forward.19} parent=35 // pred_check
          %p271 = pneg %p67
        $region42: #{seqmolec_forward.19} parent=35 // pred_check_branch
          %273 = sbr.rel (%p271) target = $region44
        $region43: #{seqmolec_forward.19} parent=35 // pred_region
          %p274 = scmp.lt.s32.totalorder %s21, 1
          %s275 = scalar_select %p274, %s21, 1
          %s276 = smul.addr %s275, 8
          %s277 = scalar_lea.vmem %s1, %s276
        $region44: #{seqmolec_forward.19} parent=35 // pred_fallthru
          _
      $region36: #{seqmolec_forward.19} parent=5 // pred_fallthru
        _
      %p278 = scmp.le.s32.totalorder 1, %s21
      %p279 = scmp.lt.s32.totalorder %s21, 3
      %p280 = pnand %p278, %p279
      %p281 = pneg %p280
      // Predicated region
      $region45: #{seqmolec_forward.19} parent=5 // pred_check
        _
      $region46: #{seqmolec_forward.19} parent=5 // pred_check_branch
        %283 = sbr.rel (%p280) target = $region48
      $region47: #{seqmolec_forward.19} parent=5 // pred_region
        %s284 = ssub.s32 %s21, 1
        %p285 = scmp.lt.s32.totalorder %s26, 1
        %s286 = scalar_select %p285, %s26, 1
        %s287 = smul.addr %s286, 8
        %s288 = scalar_lea.vmem %s0, %s287
        %p289 = pneg %p47
        %p290 = pneg %p44
        %p291 = scmp.lt.s32.totalorder %s26, 1
        %s292 = scalar_select %p291, %s26, 1
        %s293 = smul.addr %s292, 8
        %s294 = scalar_lea.vmem %s1, %s293
        %p295 = pneg %p73
        %p296 = pneg %p70
        %p297 = pneg %p94
        %p298 = pneg %p91
        %p299 = pneg %p115
        %p300 = pneg %p112
        %p301 = pneg %p136
        %p302 = pneg %p133
        %p303 = pneg %p157
        %p304 = pneg %p154
        %p305 = pneg %p178
        %p306 = pneg %p175
        %p307 = pneg %p204
        %p308 = pneg %p201
        %s309 = sand.u32 %s191, 1
        %s310 = scalar_lea.sflag [#allocation3], %s309
        %s311 = sand.u32 %s191, 1
        %s312 = smul.addr %s311, 8
        %s313 = scalar_lea.vmem [#allocation2], %s312
        %p314 = pneg %p230
        %p315 = pneg %p227
        %s316 = sand.u32 %s217, 1
        %s317 = scalar_lea.sflag [#allocation5], %s316
        %s318 = sand.u32 %s217, 1
        %s319 = smul.addr %s318, 2
        %s320 = scalar_lea.vmem [#allocation4], %s319
        %p321 = scmp.lt.s32.totalorder %s26, 1
        %s322 = scalar_select %p321, %s26, 1
        %s323 = smul.addr %s322, 8
        %s324 = scalar_lea.vmem %s0, %s323
        %p325 = scmp.lt.s32.totalorder %s26, 1
        %s326 = scalar_select %p325, %s26, 1
        %s327 = smul.addr %s326, 8
        %s328 = scalar_lea.vmem %s1, %s327
        %v330 = vld [vmem:[%s328] sm:$0xff]
        %v331 = vld [vmem:[%s324] sm:$0xff]
        %333 = vset.pattern.permute.xlu0 0
        %334 = vperm.xlu0 %333, %v330
        %v335 = vpop.permute.xlu0 %334
        %v337 = vmul.f32 %v331, %v335
        %v338 = vld [vmem:[%s2] sm:$0x3]
        %v339 = vld [vmem:[%s3] sm:$0x1]
        %v340 = vld [vmem:[%s4] sm:$0x1]
        %v341 = vperm.slane %v338, 0
        %v342 = vsub.f32 %v337, %v341
        %v343 = vperm.slane %v338, 1
        %v344 = vmul.f32 %v342, %v343
        %v346 = vperm.slane %v339, 0
        %v348 = vmul.f32 %v346, %v344
        %v350 = vperm.slane %v340, 0
        %v352 = vadd.f32 %v348, %v350
        %v353 = vsub.f32 0.0, %v352
        %v354 = vmul.f32 %v353, 1.442695
        %v355 = vpow.pop %v354
        %v356 = vadd.f32 %v355, 1.0
        %v357 = vrcp.pop %v356
        %v358 = vmul.f32 %v352, %v357
        %v359 = vpack.c.bf16 %v358, %v358
        %v360 = vld [vmem:[%s5] sm:$0xf]
        %v361 = vld [vmem:[%s5 + $0x4] sm:$0xf]
        %v362 = vld [vmem:[%s5 + $0x8] sm:$0xf]
        %v363 = vld [vmem:[%s5 + $0xc] sm:$0xf]
        %v364 = vld [vmem:[%s6] sm:$0x1]
        %v366 = vperm.slane %v364, 0
        %v372 = vunpack.c.l.b16 %v360
        %v373 = vunpack.c.l.b16 %v361
        %v374 = vunpack.c.l.b16 %v362
        %v375 = vunpack.c.l.b16 %v363
        %v376 = vpack.c.b16 %v373, %v372
        %v377 = vpack.c.b16 %v375, %v374
        %vm380 = vcmask 261120
        %v382 = vsel %vm380, %v359, 0
        %384 = vmatpush.bf16.msra.mxu0 0
        %385 = vmatpush.bf16.msra.mxu0 0
        %386 = vmatpush.bf16.msra.mxu0 0
        %387 = vmatpush.bf16.msra.mxu0 0
        %388 = vmatpush.bf16.msra.mxu0 0
        %389 = vmatpush.bf16.msra.mxu0 0
        %390 = vmatpush.bf16.msra.mxu0 %v377
        %391 = vmatpush.bf16.msra.mxu0 %v376
        %392 = vmatmul.bf16.gmra.mxu0 %v382
        %v393 = vpop.f32.mrf.mxu0
        %v394 = vadd.f32 %v366, %v393
        %v395 = vpop.f32.mrf.mxu0
        %396 = vdwg.mxu0
        %vm397 = vcmask 310272
        %398 = vst.msk [vmem:[%s313] sm:$0xff] %vm397, %v394
        %v399 = vmul.f32 %v394, %v335
        %v400 = vsel %vm397, %v399, 0.0
        %v401 = vrot.slane %v400, 4
        %v402 = vadd.f32 %v400, %v401
        %v403 = vrot.slane %v402, 2
        %v404 = vadd.f32 %v402, %v403
        %v405 = vrot.slane %v404, 1
        %v406 = vadd.f32 %v404, %v405
        %vm407 = vcmask 303104
        %408 = vst.msk [vmem:[%s320] sm:$0x1] %vm407, %v406
        %v409 = vmul.f32 %v399, %v399
        %v410 = vsel %vm397, %v409, 0.0
        %v411 = vrot.slane %v410, 4
        %v412 = vadd.f32 %v410, %v411
        %v413 = vrot.slane %v412, 2
        %v414 = vadd.f32 %v412, %v413
        %v415 = vrot.slane %v414, 1
        %v416 = vadd.f32 %v414, %v415
        %417 = vst.msk [vmem:[%s320 + $0x1] sm:$0x1] %vm407, %v416
        %s418 = sand.u32 %s191, 1
        %s419 = scalar_lea.sflag [#allocation3], %s418
        %s420 = sand.u32 %s191, 1
        %s421 = smul.addr %s420, 8
        %s422 = scalar_lea.vmem [#allocation2], %s421
        %s423 = sand.u32 %s217, 1
        %s424 = scalar_lea.sflag [#allocation5], %s423
        %s425 = sand.u32 %s217, 1
        %s426 = smul.addr %s425, 2
        %s427 = scalar_lea.vmem [#allocation4], %s426
        // Predicated region
        $region49: #{seqmolec_forward.19} parent=47 // pred_check
          %p428 = pneg %p201
        $region50: #{seqmolec_forward.19} parent=47 // pred_check_branch
          %430 = sbr.rel (%p428) target = $region52
        $region51: #{seqmolec_forward.19} parent=47 // pred_region
          %432 = vsyncadd %s419, 0
          %s433 = smul.addr %s26, 8
          %s434 = scalar_lea.hbm %s7, %s433
          %s436 = sshll.u32 %s422, 4
          %s437 = int_to_ptr.vmem [resolvable:$true] %s436
          %s438 = sshll.u32 %s434, 4
          %s439 = int_to_ptr.hbm [resolvable:$true] %s438
          %441 = dma.vmem_to_hbm [thread:$0]  %s437, 128, %s439, %s419
        $region52: #{seqmolec_forward.19} parent=47 // pred_fallthru
          _
        // Predicated region
        $region53: #{seqmolec_forward.19} parent=47 // pred_check
          %p442 = pneg %p227
        $region54: #{seqmolec_forward.19} parent=47 // pred_check_branch
          %444 = sbr.rel (%p442) target = $region56
        $region55: #{seqmolec_forward.19} parent=47 // pred_region
          %446 = vsyncadd %s424, 0
          %s447 = smul.addr %s26, 2
          %s448 = scalar_lea.hbm %s8, %s447
          %s450 = sshll.u32 %s427, 4
          %s451 = int_to_ptr.vmem [resolvable:$true] %s450
          %s452 = sshll.u32 %s448, 4
          %s453 = int_to_ptr.hbm [resolvable:$true] %s452
          %455 = dma.vmem_to_hbm [thread:$0]  %s451, 32, %s453, %s424
        $region56: #{seqmolec_forward.19} parent=47 // pred_fallthru
          _
      $region48: #{seqmolec_forward.19} parent=5 // pred_fallthru
        _
      %p456 = scmp.le.s32.totalorder 2, %s21
      // Predicated region
      $region57: #{seqmolec_forward.19} parent=5 // pred_check
        %p457 = pneg %p456
      $region58: #{seqmolec_forward.19} parent=5 // pred_check_branch
        %459 = sbr.rel (%p457) target = $region60
      $region59: #{seqmolec_forward.19} parent=5 // pred_region
        %s460 = ssub.s32 %s21, 2
        // Predicated region
        $region61: #{seqmolec_forward.19} parent=59 // pred_check
          %p461 = pneg %p207
        $region62: #{seqmolec_forward.19} parent=59 // pred_check_branch
          %463 = sbr.rel (%p461) target = $region64
        $region63: #{seqmolec_forward.19} parent=59 // pred_region
          %s464 = sand.u32 %s192, 1
          %s465 = scalar_lea.sflag [#allocation3], %s464
          %s466 = sand.u32 %s192, 1
          %s467 = smul.addr %s466, 8
          %s468 = scalar_lea.vmem [#allocation2], %s467
          %470 = dma.done %s465, 128
        $region64: #{seqmolec_forward.19} parent=59 // pred_fallthru
          _
        // Predicated region
        $region65: #{seqmolec_forward.19} parent=59 // pred_check
          %p471 = pneg %p233
        $region66: #{seqmolec_forward.19} parent=59 // pred_check_branch
          %473 = sbr.rel (%p471) target = $region68
        $region67: #{seqmolec_forward.19} parent=59 // pred_region
          %s474 = sand.u32 %s218, 1
          %s475 = scalar_lea.sflag [#allocation5], %s474
          %s476 = sand.u32 %s218, 1
          %s477 = smul.addr %s476, 2
          %s478 = scalar_lea.vmem [#allocation4], %s477
          %480 = dma.done %s475, 32
        $region68: #{seqmolec_forward.19} parent=59 // pred_fallthru
          _
      $region60: #{seqmolec_forward.19} parent=5 // pred_fallthru
        _
    $region6: #{seqmolec_forward.19} parent=1 // loop_footer
      %s25 = sadd.s32 1, %s21
    $region7: #{seqmolec_forward.19} parent=1 // loop_footer_branch
      %20 = sbr.rel target = $region3
    $region8: #{seqmolec_forward.19} parent=1 // loop_exit
      _
    %481 = vsyncpa [#allocation3], 1
    %s482 = scalar_lea.sflag [#allocation3], 1
    %483 = vsyncpa %s482, 1
    %484 = vsyncpa [#allocation5], 1
    %s485 = scalar_lea.sflag [#allocation5], 1
    %486 = vsyncpa %s485, 1

// kernel: seqmolec_forward.11
$region0: #{seqmolec_forward.11}
  #allocation0 [shape = 'u32[]', space=smem, size = 0x4, offset = 0x4, fixed_abs, tag = 'smem constant byte address 0x4 - core index']
  #allocation1 [shape = 'u32[72,128]{1,0:T(1,128)}', space=vmem, size = 0x9000, scoped, tag = 'internal scratch']
  #allocation2 [shape = 'f32[8,8]{1,0:T(8,128)}', space=vmem, size = 0x1000, scoped, tag = 'scratch operand']
  %s0 = inlined_call_operand.vmem [shape: f32[2,8,8], index: 0, kind: input, shape index: {}]
  %s1 = inlined_call_operand.vmem [shape: f32[2,8,8], index: 1, kind: input, shape index: {}]
  %s2 = inlined_call_operand.vmem [shape: f32[16,8], index: 2, kind: input, shape index: {}]
  %s3 = inlined_call_operand.vmem [shape: f32[2,8], index: 3, kind: input, shape index: {}]
  %s4 = inlined_call_operand.vmem [shape: f32[1,8], index: 4, kind: input, shape index: {}]
  %s5 = inlined_call_operand.vmem [shape: f32[1,8], index: 5, kind: input, shape index: {}]
  %s6 = inlined_call_operand.vmem [shape: f32[3,8], index: 6, kind: input, shape index: {}]
  %s7 = inlined_call_operand.vmem [shape: f32[1,8], index: 7, kind: input, shape index: {}]
  %s8 = inlined_call_operand.vmem [shape: bf16[8,72], index: 8, kind: input, shape index: {}]
  %s9 = inlined_call_operand.vmem [shape: f32[1,8], index: 9, kind: input, shape index: {}]
  %s10 = inlined_call_operand.vmem [shape: f32[16,8], index: 10, kind: output, shape index: {0}]
  %s11 = inlined_call_operand.vmem [shape: f32[2,2,8], index: 11, kind: output, shape index: {1}]
  %12 = xla_tuple %s10, %s11
  %s13 = sld [smem:[#allocation0]]
  $region101: #{seqmolec_forward.11} parent=0
    _
  %s15 = ssub.s32 1, %s13
  %s16 = scalar_select 0, %s15, %s13
  $region1: #{seqmolec_forward.11} parent=0
    #allocation3 [shape = 'u8[2048]{0}', space=smem, size = 0x800, scoped, tag = 'input window, operand 6, single buffered']
    #allocation4 [shape = 's32[2]{0}', space=sflag, size = 0x8, scoped, tag = 'scoped memory for seqmolec_forward.11']
    #allocation5 [shape = 'u8[512]{0}', space=smem, size = 0x200, scoped, tag = 'input window, operand 7, single buffered']
    #allocation6 [shape = 's32[1]{0}', space=sflag, size = 0x4, scoped, tag = 'scoped memory for seqmolec_forward.11']
    %17 = vsyncpa [#allocation4], 0
    %18 = vsyncpa [#allocation6], 0
    loop: start=0, step=1, limit=4
    $region2: #{seqmolec_forward.11} parent=1 // loop_pre_header
      _
    $region3: #{seqmolec_forward.11} parent=1 // loop_header
      %s20 = sphi 0, %s24
      %p21 = scmp.ge.s32.totalorder %s20, 4
      %s27 = sphi 0, %s39
      %s28 = sphi 0, %s35
      %s29 = sphi 0, %s27
      %s30 = sphi 0, %s28
      %s31 = sphi 0, %s29
      %s32 = sphi 0, %s30
      %s42 = sphi 0, %s44
      %s45 = sphi 0, %s42
      %s46 = sphi 0, %s45
      %s62 = sphi 0, %s46
      %s70 = sphi 0, %s72
      %s73 = sphi 0, %s70
      %s74 = sphi 0, %s73
      %s90 = sphi 0, %s74
      %s98 = sphi 0, %s100
      %s101 = sphi 0, %s98
      %s102 = sphi 0, %s101
      %s118 = sphi 0, %s102
      %s122 = sphi 0, %s122
      %s124 = sphi 0, %s122
      %s125 = sphi 0, %s124
      %s139 = sphi 0, %s125
      %s143 = sphi 0, %s143
      %s145 = sphi 0, %s143
      %s146 = sphi 0, %s145
      %s160 = sphi 0, %s146
      %s164 = sphi 0, %s164
      %s166 = sphi 0, %s164
      %s167 = sphi 0, %s166
      %s181 = sphi 0, %s167
      %s185 = sphi 0, %s185
      %s187 = sphi 0, %s185
      %s188 = sphi 0, %s187
      %s202 = sphi 0, %s188
      %s206 = sphi 0, %s206
      %s208 = sphi 0, %s206
      %s209 = sphi 0, %s208
      %s223 = sphi 0, %s209
      %s227 = sphi 0, %s227
      %s229 = sphi 0, %s227
      %s230 = sphi 0, %s229
      %s244 = sphi 0, %s230
      %s248 = sphi 0, %s248
      %s250 = sphi 0, %s248
      %s251 = sphi 0, %s250
      %s265 = sphi 0, %s251
      %s271 = sphi 0, %s273
      %s274 = sphi 0, %s271
      %s275 = sphi 0, %s274
      %s291 = sphi 0, %s275
      %s297 = sphi 0, %s299
      %s300 = sphi 0, %s297
      %s301 = sphi 0, %s300
      %s317 = sphi 0, %s301
    $region4: #{seqmolec_forward.11} parent=1 // loop_header_branch
      %23 = sbr.rel (%p21) target = $region8
    $region5: #{seqmolec_forward.11} parent=1 // loop_body
      %s25 = ssub.s32 %s20, 1
      %s26 = ssub.s32 %s20, 2
      %s33 = sadd.s32 1, %s28
      %p34 = scmp.ge.s32.totalorder %s33, 1
      %s35 = scalar_select %p34, 0, %s33
      %s36 = sadd.s32 1, %s27
      %s37 = scalar_select %p34, %s36, %s27
      %p38 = scmp.ge.s32.totalorder %s37, 2
      %s39 = scalar_select %p38, 0, %s37
      %s40 = ssub.s32 %s27, %s39
      %p41 = scmp.eq.s32.totalorder %s40, 0
      %s43 = sadd.s32 %s42, 1
      %s44 = scalar_select %p41, %s42, %s43
      %p47 = pneg %p41
      %p48 = scmp.eq.s32.totalorder %s20, 1
      %p49 = por %p47, %p48
      %p50 = scmp.ne.s32.totalorder %s42, %s45
      %p51 = scmp.eq.s32.totalorder %s20, 0
      %p52 = por %p50, %p51
      %p53 = scmp.ne.s32.totalorder %s42, %s45
      %p54 = scmp.eq.s32.totalorder %s25, 1
      %p55 = por %p53, %p54
      %p56 = scmp.ne.s32.totalorder %s45, %s46
      %p57 = scmp.eq.s32.totalorder %s25, 0
      %p58 = por %p56, %p57
      %p59 = scmp.ne.s32.totalorder %s45, %s46
      %p60 = scmp.eq.s32.totalorder %s26, 1
      %p61 = por %p59, %p60
      %p63 = scmp.ne.s32.totalorder %s46, %s62
      %p64 = scmp.eq.s32.totalorder %s26, 0
      %p65 = por %p63, %p64
      %s66 = ssub.s32 %s27, %s39
      %s67 = ssub.s32 %s28, %s35
      %s68 = sor.u32 %s66, %s67
      %p69 = scmp.eq.s32.totalorder %s68, 0
      %s71 = sadd.s32 %s70, 1
      %s72 = scalar_select %p69, %s70, %s71
      %p75 = pneg %p69
      %p76 = scmp.eq.s32.totalorder %s20, 1
      %p77 = por %p75, %p76
      %p78 = scmp.ne.s32.totalorder %s70, %s73
      %p79 = scmp.eq.s32.totalorder %s20, 0
      %p80 = por %p78, %p79
      %p81 = scmp.ne.s32.totalorder %s70, %s73
      %p82 = scmp.eq.s32.totalorder %s25, 1
      %p83 = por %p81, %p82
      %p84 = scmp.ne.s32.totalorder %s73, %s74
      %p85 = scmp.eq.s32.totalorder %s25, 0
      %p86 = por %p84, %p85
      %p87 = scmp.ne.s32.totalorder %s73, %s74
      %p88 = scmp.eq.s32.totalorder %s26, 1
      %p89 = por %p87, %p88
      %p91 = scmp.ne.s32.totalorder %s74, %s90
      %p92 = scmp.eq.s32.totalorder %s26, 0
      %p93 = por %p91, %p92
      %s94 = sadd.s32 %s27, %s28
      %s95 = sadd.s32 %s39, %s35
      %s96 = ssub.s32 %s94, %s95
      %p97 = scmp.eq.s32.totalorder %s96, 0
      %s99 = sadd.s32 %s98, 1
      %s100 = scalar_select %p97, %s98, %s99
      %p103 = pneg %p97
      %p104 = scmp.eq.s32.totalorder %s20, 1
      %p105 = por %p103, %p104
      %p106 = scmp.ne.s32.totalorder %s98, %s101
      %p107 = scmp.eq.s32.totalorder %s20, 0
      %p108 = por %p106, %p107
      %p109 = scmp.ne.s32.totalorder %s98, %s101
      %p110 = scmp.eq.s32.totalorder %s25, 1
      %p111 = por %p109, %p110
      %p112 = scmp.ne.s32.totalorder %s101, %s102
      %p113 = scmp.eq.s32.totalorder %s25, 0
      %p114 = por %p112, %p113
      %p115 = scmp.ne.s32.totalorder %s101, %s102
      %p116 = scmp.eq.s32.totalorder %s26, 1
      %p117 = por %p115, %p116
      %p119 = scmp.ne.s32.totalorder %s102, %s118
      %p120 = scmp.eq.s32.totalorder %s26, 0
      %p121 = por %p119, %p120
      %s123 = sadd.s32 %s122, 1
      %p126 = scmp.eq.s32.totalorder %s20, 1
      %p127 = scmp.ne.s32.totalorder %s122, %s124
      %p128 = scmp.eq.s32.totalorder %s20, 0
      %p129 = por %p127, %p128
      %p130 = scmp.ne.s32.totalorder %s122, %s124
      %p131 = scmp.eq.s32.totalorder %s25, 1
      %p132 = por %p130, %p131
      %p133 = scmp.ne.s32.totalorder %s124, %s125
      %p134 = scmp.eq.s32.totalorder %s25, 0
      %p135 = por %p133, %p134
      %p136 = scmp.ne.s32.totalorder %s124, %s125
      %p137 = scmp.eq.s32.totalorder %s26, 1
      %p138 = por %p136, %p137
      %p140 = scmp.ne.s32.totalorder %s125, %s139
      %p141 = scmp.eq.s32.totalorder %s26, 0
      %p142 = por %p140, %p141
      %s144 = sadd.s32 %s143, 1
      %p147 = scmp.eq.s32.totalorder %s20, 1
      %p148 = scmp.ne.s32.totalorder %s143, %s145
      %p149 = scmp.eq.s32.totalorder %s20, 0
      %p150 = por %p148, %p149
      %p151 = scmp.ne.s32.totalorder %s143, %s145
      %p152 = scmp.eq.s32.totalorder %s25, 1
      %p153 = por %p151, %p152
      %p154 = scmp.ne.s32.totalorder %s145, %s146
      %p155 = scmp.eq.s32.totalorder %s25, 0
      %p156 = por %p154, %p155
      %p157 = scmp.ne.s32.totalorder %s145, %s146
      %p158 = scmp.eq.s32.totalorder %s26, 1
      %p159 = por %p157, %p158
      %p161 = scmp.ne.s32.totalorder %s146, %s160
      %p162 = scmp.eq.s32.totalorder %s26, 0
      %p163 = por %p161, %p162
      %s165 = sadd.s32 %s164, 1
      %p168 = scmp.eq.s32.totalorder %s20, 1
      %p169 = scmp.ne.s32.totalorder %s164, %s166
      %p170 = scmp.eq.s32.totalorder %s20, 0
      %p171 = por %p169, %p170
      %p172 = scmp.ne.s32.totalorder %s164, %s166
      %p173 = scmp.eq.s32.totalorder %s25, 1
      %p174 = por %p172, %p173
      %p175 = scmp.ne.s32.totalorder %s166, %s167
      %p176 = scmp.eq.s32.totalorder %s25, 0
      %p177 = por %p175, %p176
      %p178 = scmp.ne.s32.totalorder %s166, %s167
      %p179 = scmp.eq.s32.totalorder %s26, 1
      %p180 = por %p178, %p179
      %p182 = scmp.ne.s32.totalorder %s167, %s181
      %p183 = scmp.eq.s32.totalorder %s26, 0
      %p184 = por %p182, %p183
      %s186 = sadd.s32 %s185, 1
      %p189 = scmp.eq.s32.totalorder %s20, 1
      %p190 = scmp.ne.s32.totalorder %s185, %s187
      %p191 = scmp.eq.s32.totalorder %s20, 0
      %p192 = por %p190, %p191
      %p193 = scmp.ne.s32.totalorder %s185, %s187
      %p194 = scmp.eq.s32.totalorder %s25, 1
      %p195 = por %p193, %p194
      %p196 = scmp.ne.s32.totalorder %s187, %s188
      %p197 = scmp.eq.s32.totalorder %s25, 0
      %p198 = por %p196, %p197
      %p199 = scmp.ne.s32.totalorder %s187, %s188
      %p200 = scmp.eq.s32.totalorder %s26, 1
      %p201 = por %p199, %p200
      %p203 = scmp.ne.s32.totalorder %s188, %s202
      %p204 = scmp.eq.s32.totalorder %s26, 0
      %p205 = por %p203, %p204
      %s207 = sadd.s32 %s206, 1
      %p210 = scmp.eq.s32.totalorder %s20, 1
      %p211 = scmp.ne.s32.totalorder %s206, %s208
      %p212 = scmp.eq.s32.totalorder %s20, 0
      %p213 = por %p211, %p212
      %p214 = scmp.ne.s32.totalorder %s206, %s208
      %p215 = scmp.eq.s32.totalorder %s25, 1
      %p216 = por %p214, %p215
      %p217 = scmp.ne.s32.totalorder %s208, %s209
      %p218 = scmp.eq.s32.totalorder %s25, 0
      %p219 = por %p217, %p218
      %p220 = scmp.ne.s32.totalorder %s208, %s209
      %p221 = scmp.eq.s32.totalorder %s26, 1
      %p222 = por %p220, %p221
      %p224 = scmp.ne.s32.totalorder %s209, %s223
      %p225 = scmp.eq.s32.totalorder %s26, 0
      %p226 = por %p224, %p225
      %s228 = sadd.s32 %s227, 1
      %p231 = scmp.eq.s32.totalorder %s20, 1
      %p232 = scmp.ne.s32.totalorder %s227, %s229
      %p233 = scmp.eq.s32.totalorder %s20, 0
      %p234 = por %p232, %p233
      %p235 = scmp.ne.s32.totalorder %s227, %s229
      %p236 = scmp.eq.s32.totalorder %s25, 1
      %p237 = por %p235, %p236
      %p238 = scmp.ne.s32.totalorder %s229, %s230
      %p239 = scmp.eq.s32.totalorder %s25, 0
      %p240 = por %p238, %p239
      %p241 = scmp.ne.s32.totalorder %s229, %s230
      %p242 = scmp.eq.s32.totalorder %s26, 1
      %p243 = por %p241, %p242
      %p245 = scmp.ne.s32.totalorder %s230, %s244
      %p246 = scmp.eq.s32.totalorder %s26, 0
      %p247 = por %p245, %p246
      %s249 = sadd.s32 %s248, 1
      %p252 = scmp.eq.s32.totalorder %s20, 1
      %p253 = scmp.ne.s32.totalorder %s248, %s250
      %p254 = scmp.eq.s32.totalorder %s20, 0
      %p255 = por %p253, %p254
      %p256 = scmp.ne.s32.totalorder %s248, %s250
      %p257 = scmp.eq.s32.totalorder %s25, 1
      %p258 = por %p256, %p257
      %p259 = scmp.ne.s32.totalorder %s250, %s251
      %p260 = scmp.eq.s32.totalorder %s25, 0
      %p261 = por %p259, %p260
      %p262 = scmp.ne.s32.totalorder %s250, %s251
      %p263 = scmp.eq.s32.totalorder %s26, 1
      %p264 = por %p262, %p263
      %p266 = scmp.ne.s32.totalorder %s251, %s265
      %p267 = scmp.eq.s32.totalorder %s26, 0
      %p268 = por %p266, %p267
      %s269 = ssub.s32 %s27, %s39
      %p270 = scmp.eq.s32.totalorder %s269, 0
      %s272 = sadd.s32 %s271, 1
      %s273 = scalar_select %p270, %s271, %s272
      %p276 = pneg %p270
      %p277 = scmp.eq.s32.totalorder %s20, 1
      %p278 = por %p276, %p277
      %p279 = scmp.ne.s32.totalorder %s271, %s274
      %p280 = scmp.eq.s32.totalorder %s20, 0
      %p281 = por %p279, %p280
      %p282 = scmp.ne.s32.totalorder %s271, %s274
      %p283 = scmp.eq.s32.totalorder %s25, 1
      %p284 = por %p282, %p283
      %p285 = scmp.ne.s32.totalorder %s274, %s275
      %p286 = scmp.eq.s32.totalorder %s25, 0
      %p287 = por %p285, %p286
      %p288 = scmp.ne.s32.totalorder %s274, %s275
      %p289 = scmp.eq.s32.totalorder %s26, 1
      %p290 = por %p288, %p289
      %p292 = scmp.ne.s32.totalorder %s275, %s291
      %p293 = scmp.eq.s32.totalorder %s26, 0
      %p294 = por %p292, %p293
      %s295 = ssub.s32 %s27, %s39
      %p296 = scmp.eq.s32.totalorder %s295, 0
      %s298 = sadd.s32 %s297, 1
      %s299 = scalar_select %p296, %s297, %s298
      %p302 = pneg %p296
      %p303 = scmp.eq.s32.totalorder %s20, 1
      %p304 = por %p302, %p303
      %p305 = scmp.ne.s32.totalorder %s297, %s300
      %p306 = scmp.eq.s32.totalorder %s20, 0
      %p307 = por %p305, %p306
      %p308 = scmp.ne.s32.totalorder %s297, %s300
      %p309 = scmp.eq.s32.totalorder %s25, 1
      %p310 = por %p308, %p309
      %p311 = scmp.ne.s32.totalorder %s300, %s301
      %p312 = scmp.eq.s32.totalorder %s25, 0
      %p313 = por %p311, %p312
      %p314 = scmp.ne.s32.totalorder %s300, %s301
      %p315 = scmp.eq.s32.totalorder %s26, 1
      %p316 = por %p314, %p315
      %p318 = scmp.ne.s32.totalorder %s301, %s317
      %p319 = scmp.eq.s32.totalorder %s26, 0
      %p320 = por %p318, %p319
      %p321 = scmp.le.s32.totalorder 1, %s20
      %p322 = scmp.lt.s32.totalorder %s20, 3
      %p323 = pnand %p321, %p322
      %p324 = pneg %p323
      // Predicated region
      $region9: #{seqmolec_forward.11} parent=5 // pred_check
        _
      $region10: #{seqmolec_forward.11} parent=5 // pred_check_branch
        %326 = sbr.rel (%p323) target = $region12
      $region11: #{seqmolec_forward.11} parent=5 // pred_region
        %s327 = ssub.s32 %s20, 1
        // Predicated region
        $region13: #{seqmolec_forward.11} parent=11 // pred_check
          %p328 = pneg %p135
        $region14: #{seqmolec_forward.11} parent=11 // pred_check_branch
          %330 = sbr.rel (%p328) target = $region16
        $region15: #{seqmolec_forward.11} parent=11 // pred_region
          _
        $region16: #{seqmolec_forward.11} parent=11 // pred_fallthru
          _
        // Predicated region
        $region17: #{seqmolec_forward.11} parent=11 // pred_check
          %p331 = pneg %p156
        $region18: #{seqmolec_forward.11} parent=11 // pred_check_branch
          %333 = sbr.rel (%p331) target = $region20
        $region19: #{seqmolec_forward.11} parent=11 // pred_region
          _
        $region20: #{seqmolec_forward.11} parent=11 // pred_fallthru
          _
        // Predicated region
        $region21: #{seqmolec_forward.11} parent=11 // pred_check
          %p334 = pneg %p177
        $region22: #{seqmolec_forward.11} parent=11 // pred_check_branch
          %336 = sbr.rel (%p334) target = $region24
        $region23: #{seqmolec_forward.11} parent=11 // pred_region
          _
        $region24: #{seqmolec_forward.11} parent=11 // pred_fallthru
          _
        // Predicated region
        $region25: #{seqmolec_forward.11} parent=11 // pred_check
          %p337 = pneg %p198
        $region26: #{seqmolec_forward.11} parent=11 // pred_check_branch
          %339 = sbr.rel (%p337) target = $region28
        $region27: #{seqmolec_forward.11} parent=11 // pred_region
          %341 = vsyncadd [#allocation4], 0
          %s343 = sshll.u32 %s6, 4
          %s344 = int_to_ptr.vmem [resolvable:$true] %s343
          %346 = dma.vmem_to_smem %s344, 64, [#allocation3], [#allocation4]
        $region28: #{seqmolec_forward.11} parent=11 // pred_fallthru
          _
        // Predicated region
        $region29: #{seqmolec_forward.11} parent=11 // pred_check
          %p347 = pneg %p219
        $region30: #{seqmolec_forward.11} parent=11 // pred_check_branch
          %349 = sbr.rel (%p347) target = $region32
        $region31: #{seqmolec_forward.11} parent=11 // pred_region
          %351 = vsyncadd [#allocation6], 0
          %s353 = sshll.u32 %s7, 4
          %s354 = int_to_ptr.vmem [resolvable:$true] %s353
          %356 = dma.vmem_to_smem %s354, 16, [#allocation5], [#allocation6]
        $region32: #{seqmolec_forward.11} parent=11 // pred_fallthru
          _
        // Predicated region
        $region33: #{seqmolec_forward.11} parent=11 // pred_check
          %p357 = pneg %p240
        $region34: #{seqmolec_forward.11} parent=11 // pred_check_branch
          %359 = sbr.rel (%p357) target = $region36
        $region35: #{seqmolec_forward.11} parent=11 // pred_region
          _
        $region36: #{seqmolec_forward.11} parent=11 // pred_fallthru
          _
        // Predicated region
        $region37: #{seqmolec_forward.11} parent=11 // pred_check
          %p360 = pneg %p261
        $region38: #{seqmolec_forward.11} parent=11 // pred_check_branch
          %362 = sbr.rel (%p360) target = $region40
        $region39: #{seqmolec_forward.11} parent=11 // pred_region
          _
        $region40: #{seqmolec_forward.11} parent=11 // pred_fallthru
          _
      $region12: #{seqmolec_forward.11} parent=5 // pred_fallthru
        _
      %p363 = scmp.lt.s32.totalorder %s20, 2
      // Predicated region
      $region41: #{seqmolec_forward.11} parent=5 // pred_check
        %p364 = pneg %p363
      $region42: #{seqmolec_forward.11} parent=5 // pred_check_branch
        %366 = sbr.rel (%p364) target = $region44
      $region43: #{seqmolec_forward.11} parent=5 // pred_region
        // Predicated region
        $region45: #{seqmolec_forward.11} parent=43 // pred_check
          %p367 = pneg %p52
        $region46: #{seqmolec_forward.11} parent=43 // pred_check_branch
          %369 = sbr.rel (%p367) target = $region48
        $region47: #{seqmolec_forward.11} parent=43 // pred_region
          %p370 = scmp.lt.s32.totalorder %s27, 1
          %s371 = scalar_select %p370, %s27, 1
          %s372 = smul.addr %s371, 8
          %s373 = scalar_lea.vmem %s0, %s372
        $region48: #{seqmolec_forward.11} parent=43 // pred_fallthru
          _
        // Predicated region
        $region49: #{seqmolec_forward.11} parent=43 // pred_check
          %p374 = pneg %p80
        $region50: #{seqmolec_forward.11} parent=43 // pred_check_branch
          %376 = sbr.rel (%p374) target = $region52
        $region51: #{seqmolec_forward.11} parent=43 // pred_region
          %p377 = scmp.lt.s32.totalorder %s27, 1
          %s378 = scalar_select %p377, %s27, 1
          %p379 = scmp.lt.s32.totalorder %s28, 0
          %s380 = scalar_select %p379, %s28, 0
          %s381 = sadd.s32 %s380, %s378
          %s382 = smul.addr %s381, 8
          %s383 = scalar_lea.vmem %s1, %s382
        $region52: #{seqmolec_forward.11} parent=43 // pred_fallthru
          _
        // Predicated region
        $region53: #{seqmolec_forward.11} parent=43 // pred_check
          %p384 = pneg %p108
        $region54: #{seqmolec_forward.11} parent=43 // pred_check_branch
          %386 = sbr.rel (%p384) target = $region56
        $region55: #{seqmolec_forward.11} parent=43 // pred_region
          %s387 = sadd.s32 %s27, %s28
          %p388 = scmp.lt.s32.totalorder %s387, 1
          %s389 = scalar_select %p388, %s387, 1
          %s390 = smul.addr %s389, 8
          %s391 = scalar_lea.vmem %s2, %s390
          %s392 = sadd.s32 %s27, %s28
        $region56: #{seqmolec_forward.11} parent=43 // pred_fallthru
          _
      $region44: #{seqmolec_forward.11} parent=5 // pred_fallthru
        _
      %p393 = scmp.le.s32.totalorder 1, %s20
      %p394 = scmp.lt.s32.totalorder %s20, 3
      %p395 = pnand %p393, %p394
      %p396 = pneg %p395
      // Predicated region
      $region57: #{seqmolec_forward.11} parent=5 // pred_check
        _
      $region58: #{seqmolec_forward.11} parent=5 // pred_check_branch
        %398 = sbr.rel (%p395) target = $region60
      $region59: #{seqmolec_forward.11} parent=5 // pred_region
        %s399 = ssub.s32 %s20, 1
        // Predicated region
        $region61: #{seqmolec_forward.11} parent=59 // pred_check
          %p400 = pneg %p198
        $region62: #{seqmolec_forward.11} parent=59 // pred_check_branch
          %402 = sbr.rel (%p400) target = $region64
        $region63: #{seqmolec_forward.11} parent=59 // pred_region
          %404 = dma.done [#allocation4], 64
        $region64: #{seqmolec_forward.11} parent=59 // pred_fallthru
          _
        // Predicated region
        $region65: #{seqmolec_forward.11} parent=59 // pred_check
          %p405 = pneg %p219
        $region66: #{seqmolec_forward.11} parent=59 // pred_check_branch
          %407 = sbr.rel (%p405) target = $region68
        $region67: #{seqmolec_forward.11} parent=59 // pred_region
          %409 = dma.done [#allocation6], 16
        $region68: #{seqmolec_forward.11} parent=59 // pred_fallthru
          _
        %410 = sfence
        %p411 = scmp.lt.s32.totalorder %s29, 1
        %s412 = scalar_select %p411, %s29, 1
        %s413 = smul.addr %s412, 8
        %s414 = scalar_lea.vmem %s0, %s413
        %p415 = pneg %p58
        %p416 = pneg %p55
        %p417 = scmp.lt.s32.totalorder %s29, 1
        %s418 = scalar_select %p417, %s29, 1
        %p419 = scmp.lt.s32.totalorder %s30, 0
        %s420 = scalar_select %p419, %s30, 0
        %s421 = sadd.s32 %s420, %s418
        %s422 = smul.addr %s421, 8
        %s423 = scalar_lea.vmem %s1, %s422
        %p424 = pneg %p86
        %p425 = pneg %p83
        %s426 = sadd.s32 %s29, %s30
        %p427 = scmp.lt.s32.totalorder %s426, 1
        %s428 = scalar_select %p427, %s426, 1
        %s429 = smul.addr %s428, 8
        %s430 = scalar_lea.vmem %s2, %s429
        %p431 = pneg %p114
        %p432 = pneg %p111
        %p433 = pneg %p135
        %p434 = pneg %p132
        %p435 = pneg %p156
        %p436 = pneg %p153
        %p437 = pneg %p177
        %p438 = pneg %p174
        %p439 = pneg %p198
        %p440 = pneg %p195
        %p441 = pneg %p219
        %p442 = pneg %p216
        %p443 = pneg %p240
        %p444 = pneg %p237
        %p445 = pneg %p261
        %p446 = pneg %p258
        %p447 = pneg %p287
        %p448 = pneg %p284
        %p449 = scmp.lt.s32.totalorder %s29, 1
        %s450 = scalar_select %p449, %s29, 1
        %s451 = smul.addr %s450, 8
        %s452 = scalar_lea.vmem %s10, %s451
        %p453 = pneg %p313
        %p454 = pneg %p310
        %p455 = scmp.lt.s32.totalorder %s29, 1
        %s456 = scalar_select %p455, %s29, 1
        %s457 = smul.addr %s456, 2
        %s458 = scalar_lea.vmem %s11, %s457
        %p459 = scmp.lt.s32.totalorder %s29, 1
        %s460 = scalar_select %p459, %s29, 1
        %s461 = smul.addr %s460, 8
        %s462 = scalar_lea.vmem %s0, %s461
        %p463 = scmp.lt.s32.totalorder %s29, 1
        %s464 = scalar_select %p463, %s29, 1
        %p465 = scmp.lt.s32.totalorder %s30, 0
        %s466 = scalar_select %p465, %s30, 0
        %s467 = sadd.s32 %s466, %s464
        %s468 = smul.addr %s467, 8
        %s469 = scalar_lea.vmem %s1, %s468
        %s470 = sadd.s32 %s29, %s30
        %p471 = scmp.lt.s32.totalorder %s470, 1
        %s472 = scalar_select %p471, %s470, 1
        %s473 = smul.addr %s472, 8
        %s474 = scalar_lea.vmem %s2, %s473
        %s475 = sadd.s32 %s29, %s30
        %p476 = scmp.lt.s32.totalorder %s29, 1
        %s477 = scalar_select %p476, %s29, 1
        %s478 = smul.addr %s477, 8
        %s479 = scalar_lea.vmem %s10, %s478
        %p480 = scmp.lt.s32.totalorder %s29, 1
        %s481 = scalar_select %p480, %s29, 1
        %s482 = smul.addr %s481, 2
        %s483 = scalar_lea.vmem %s11, %s482
        %v485 = vld [vmem:[%s462] sm:$0xff]
        %v486 = vld [vmem:[%s469] sm:$0xff]
        %v487 = vld [vmem:[%s474] sm:$0xff]
        %v488 = vld [vmem:[%s3] sm:$0x3]
        %v489 = vld [vmem:[%s4] sm:$0x1]
        %v490 = vld [vmem:[%s5] sm:$0x1]
        %v491 = vperm.slane %v488, 0
        %v492 = vsub.f32 %v487, %v491
        %v493 = vperm.slane %v488, 1
        %v494 = vmul.f32 %v492, %v493
        %v496 = vperm.slane %v489, 0
        %v498 = vmul.f32 %v496, %v494
        %v500 = vperm.slane %v490, 0
        %v502 = vadd.f32 %v498, %v500
        %v503 = vsub.f32 0.0, %v502
        %v504 = vmul.f32 %v503, 1.442695
        %v505 = vpow.pop %v504
        %v506 = vadd.f32 %v505, 1.0
        %v507 = vrcp.pop %v506
        %v508 = vmul.f32 %v502, %v507
        %v509 = vpack.c.bf16 %v508, %v508
        %v510 = vld [vmem:[%s8] sm:$0xf]
        %vm511 = vcmask 64512
        %v513 = vsel %vm511, %v509, 0
        %vm515 = vcmask 1043456
        %v517 = vsel %vm515, %v510, 0
        %519 = vmatpush.bf16.msra.mxu0 0
        %520 = vmatpush.bf16.msra.mxu0 0
        %521 = vmatpush.bf16.msra.mxu0 0
        %522 = vmatpush.bf16.msra.mxu0 0
        %523 = vmatpush.bf16.msra.mxu0 0
        %524 = vmatpush.bf16.msra.mxu0 0
        %525 = vmatpush.bf16.msra.mxu0 0
        %526 = vmatpush.bf16.msra.mxu0 %v517
        %527 = vmatmul.bf16.gmra.mxu0 %v513
        %v528 = vpop.f32.mrf.mxu0
        %v529 = vadd.f32 0.0, %v528
        %v530 = vpop.f32.mrf.mxu0
        %531 = vdwg.mxu0
        %v532 = vpack.c.bf16 %v529, %v529
        %534 = vset.pattern.permute.xlu0 0
        %535 = vperm.xlu0 %534, %v485
        %v536 = vpop.permute.xlu0 %535
        %v538 = vperm.slane %v486, 0
        %v539 = vsub.f32 %v536, %v538
        %540 = vset.pattern.permute.xlu0 1
        %541 = vperm.xlu0 %540, %v485
        %v542 = vpop.permute.xlu0 %541
        %v544 = vperm.slane %v486, 1
        %v545 = vsub.f32 %v542, %v544
        %546 = vset.pattern.permute.xlu0 2
        %547 = vperm.xlu0 %546, %v485
        %v548 = vpop.permute.xlu0 %547
        %v550 = vperm.slane %v486, 2
        %v551 = vsub.f32 %v548, %v550
        %v552 = vlaneseq
        %v553 = vshrl.u32 %v552, 7
        %v554 = vlaneseq
        %v555 = vand.u32 %v554, 127
        %s556 = smul.u32 %s30, 8
        %v557 = vstv %s556
        %v558 = vadd.s32 %v555, %v557
        %vm559 = vcmp.le.s32.totalorder %v558, %v553
        %v560 = vsel %vm559, 1.0, 0.0
        %v561 = vperm.slane %v486, 3
        %v562 = vmul.f32 %v560, %v561
        %v563 = vpack.c.bf16 %v562, %v562
        %s564 = sld [smem:[#allocation3]]
        %v565 = vstv %s564
        %v566 = vmul.f32 %v539, %v565
        %s567 = sld [smem:[#allocation3 + $0x80]]
        %v568 = vstv %s567
        %v569 = vmul.f32 %v545, %v568
        %v570 = vadd.f32 %v566, %v569
        %s571 = sld [smem:[#allocation3 + $0x100]]
        %v572 = vstv %s571
        %v573 = vmul.f32 %v551, %v572
        %v574 = vadd.f32 %v570, %v573
        %s575 = sld [smem:[#allocation5]]
        %v576 = vstv %s575
        %v577 = vadd.f32 %v574, %v576
        %v578 = vsub.f32 0.0, %v577
        %v579 = vmul.f32 %v578, 1.442695
        %v580 = vpow.pop %v579
        %v581 = vadd.f32 %v580, 1.0
        %v582 = vrcp.pop %v581
        %v583 = vmul.f32 %v577, %v582
        %v584 = vmul.f32 %v583, %v562
        %v585 = vpack.c.bf16 %v584, %v584
        %v587 = vunpack.c.l.b16 %v532
        %v588 = vpack.c.b16 %v587, %v587
        %589 = vrot.lane.b32.xlu0 %v588, 120
        %v590 = vpop.permute.xlu0 %589
        %v592 = vsel %vm511, %v585, 0
        %v595 = vsel %vm515, %v590, 0
        %597 = vmatpush.bf16.msra.mxu0 0
        %598 = vmatpush.bf16.msra.mxu0 0
        %599 = vmatpush.bf16.msra.mxu0 0
        %600 = vmatpush.bf16.msra.mxu0 0
        %601 = vmatpush.bf16.msra.mxu0 0
        %602 = vmatpush.bf16.msra.mxu0 0
        %603 = vmatpush.bf16.msra.mxu0 0
        %604 = vmatpush.bf16.msra.mxu0 %v595
        %605 = vmatmul.bf16.gmra.mxu0 %v592
        %v606 = vpop.f32.mrf.mxu0
        %v607 = vadd.f32 0.0, %v606
        %v608 = vpop.f32.mrf.mxu0
        %609 = vdwg.mxu0
        %v611 = vsel %vm511, %v563, 0
        %v614 = vsel %vm515, %v532, 0
        %616 = vmatpush.bf16.msra.mxu0 0
        %617 = vmatpush.bf16.msra.mxu0 0
        %618 = vmatpush.bf16.msra.mxu0 0
        %619 = vmatpush.bf16.msra.mxu0 0
        %620 = vmatpush.bf16.msra.mxu0 0
        %621 = vmatpush.bf16.msra.mxu0 0
        %622 = vmatpush.bf16.msra.mxu0 0
        %623 = vmatpush.bf16.msra.mxu0 %v614
        %624 = vmatmul.bf16.gmra.mxu0 %v611
        %v625 = vpop.f32.mrf.mxu0
        %v626 = vadd.f32 %v607, %v625
        %v627 = vpop.f32.mrf.mxu0
        %628 = vdwg.mxu0
        %s629 = sld [smem:[#allocation3 + $0x1]]
        %v630 = vstv %s629
        %v631 = vmul.f32 %v539, %v630
        %s632 = sld [smem:[#allocation3 + $0x81]]
        %v633 = vstv %s632
        %v634 = vmul.f32 %v545, %v633
        %v635 = vadd.f32 %v631, %v634
        %s636 = sld [smem:[#allocation3 + $0x101]]
        %v637 = vstv %s636
        %v638 = vmul.f32 %v551, %v637
        %v639 = vadd.f32 %v635, %v638
        %s640 = sld [smem:[#allocation5 + $0x1]]
        %v641 = vstv %s640
        %v642 = vadd.f32 %v639, %v641
        %v643 = vsub.f32 0.0, %v642
        %v644 = vmul.f32 %v643, 1.442695
        %v645 = vpow.pop %v644
        %v646 = vadd.f32 %v645, 1.0
        %v647 = vrcp.pop %v646
        %v648 = vmul.f32 %v642, %v647
        %v649 = vmul.f32 %v648, %v562
        %v650 = vpack.c.bf16 %v649, %v649
        %651 = vrot.lane.b32.xlu0 %v588, 112
        %v652 = vpop.permute.xlu0 %651
        %v654 = vsel %vm511, %v650, 0
        %v657 = vsel %vm515, %v652, 0
        %659 = vmatpush.bf16.msra.mxu0 0
        %660 = vmatpush.bf16.msra.mxu0 0
        %661 = vmatpush.bf16.msra.mxu0 0
        %662 = vmatpush.bf16.msra.mxu0 0
        %663 = vmatpush.bf16.msra.mxu0 0
        %664 = vmatpush.bf16.msra.mxu0 0
        %665 = vmatpush.bf16.msra.mxu0 0
        %666 = vmatpush.bf16.msra.mxu0 %v657
        %667 = vmatmul.bf16.gmra.mxu0 %v654
        %v668 = vpop.f32.mrf.mxu0
        %v669 = vadd.f32 0.0, %v668
        %v670 = vpop.f32.mrf.mxu0
        %671 = vdwg.mxu0
        %v672 = vadd.f32 %v626, %v669
        %s673 = sld [smem:[#allocation3 + $0x2]]
        %v674 = vstv %s673
        %v675 = vmul.f32 %v539, %v674
        %s676 = sld [smem:[#allocation3 + $0x82]]
        %v677 = vstv %s676
        %v678 = vmul.f32 %v545, %v677
        %v679 = vadd.f32 %v675, %v678
        %s680 = sld [smem:[#allocation3 + $0x102]]
        %v681 = vstv %s680
        %v682 = vmul.f32 %v551, %v681
        %v683 = vadd.f32 %v679, %v682
        %s684 = sld [smem:[#allocation5 + $0x2]]
        %v685 = vstv %s684
        %v686 = vadd.f32 %v683, %v685
        %v687 = vsub.f32 0.0, %v686
        %v688 = vmul.f32 %v687, 1.442695
        %v689 = vpow.pop %v688
        %v690 = vadd.f32 %v689, 1.0
        %v691 = vrcp.pop %v690
        %v692 = vmul.f32 %v686, %v691
        %v693 = vmul.f32 %v692, %v562
        %v694 = vpack.c.bf16 %v693, %v693
        %695 = vrot.lane.b32.xlu0 %v588, 104
        %v696 = vpop.permute.xlu0 %695
        %v698 = vsel %vm511, %v694, 0
        %v701 = vsel %vm515, %v696, 0
        %703 = vmatpush.bf16.msra.mxu0 0
        %704 = vmatpush.bf16.msra.mxu0 0
        %705 = vmatpush.bf16.msra.mxu0 0
        %706 = vmatpush.bf16.msra.mxu0 0
        %707 = vmatpush.bf16.msra.mxu0 0
        %708 = vmatpush.bf16.msra.mxu0 0
        %709 = vmatpush.bf16.msra.mxu0 0
        %710 = vmatpush.bf16.msra.mxu0 %v701
        %711 = vmatmul.bf16.gmra.mxu0 %v698
        %v712 = vpop.f32.mrf.mxu0
        %v713 = vadd.f32 0.0, %v712
        %v714 = vpop.f32.mrf.mxu0
        %715 = vdwg.mxu0
        %v716 = vadd.f32 %v672, %v713
        %s717 = sld [smem:[#allocation3 + $0x3]]
        %v718 = vstv %s717
        %v719 = vmul.f32 %v539, %v718
        %s720 = sld [smem:[#allocation3 + $0x83]]
        %v721 = vstv %s720
        %v722 = vmul.f32 %v545, %v721
        %v723 = vadd.f32 %v719, %v722
        %s724 = sld [smem:[#allocation3 + $0x103]]
        %v725 = vstv %s724
        %v726 = vmul.f32 %v551, %v725
        %v727 = vadd.f32 %v723, %v726
        %s728 = sld [smem:[#allocation5 + $0x3]]
        %v729 = vstv %s728
        %v730 = vadd.f32 %v727, %v729
        %v731 = vsub.f32 0.0, %v730
        %v732 = vmul.f32 %v731, 1.442695
        %v733 = vpow.pop %v732
        %v734 = vadd.f32 %v733, 1.0
        %v735 = vrcp.pop %v734
        %v736 = vmul.f32 %v730, %v735
        %v737 = vmul.f32 %v736, %v562
        %v738 = vpack.c.bf16 %v737, %v737
        %739 = vrot.lane.b32.xlu0 %v588, 96
        %v740 = vpop.permute.xlu0 %739
        %v742 = vsel %vm511, %v738, 0
        %v745 = vsel %vm515, %v740, 0
        %747 = vmatpush.bf16.msra.mxu0 0
        %748 = vmatpush.bf16.msra.mxu0 0
        %749 = vmatpush.bf16.msra.mxu0 0
        %750 = vmatpush.bf16.msra.mxu0 0
        %751 = vmatpush.bf16.msra.mxu0 0
        %752 = vmatpush.bf16.msra.mxu0 0
        %753 = vmatpush.bf16.msra.mxu0 0
        %754 = vmatpush.bf16.msra.mxu0 %v745
        %755 = vmatmul.bf16.gmra.mxu0 %v742
        %v756 = vpop.f32.mrf.mxu0
        %v757 = vadd.f32 0.0, %v756
        %v758 = vpop.f32.mrf.mxu0
        %759 = vdwg.mxu0
        %v760 = vadd.f32 %v716, %v757
        %s761 = sld [smem:[#allocation3 + $0x4]]
        %v762 = vstv %s761
        %v763 = vmul.f32 %v539, %v762
        %s764 = sld [smem:[#allocation3 + $0x84]]
        %v765 = vstv %s764
        %v766 = vmul.f32 %v545, %v765
        %v767 = vadd.f32 %v763, %v766
        %s768 = sld [smem:[#allocation3 + $0x104]]
        %v769 = vstv %s768
        %v770 = vmul.f32 %v551, %v769
        %v771 = vadd.f32 %v767, %v770
        %s772 = sld [smem:[#allocation5 + $0x4]]
        %v773 = vstv %s772
        %v774 = vadd.f32 %v771, %v773
        %v775 = vsub.f32 0.0, %v774
        %v776 = vmul.f32 %v775, 1.442695
        %v777 = vpow.pop %v776
        %v778 = vadd.f32 %v777, 1.0
        %v779 = vrcp.pop %v778
        %v780 = vmul.f32 %v774, %v779
        %v781 = vmul.f32 %v780, %v562
        %v782 = vpack.c.bf16 %v781, %v781
        %783 = vrot.lane.b32.xlu0 %v588, 88
        %v784 = vpop.permute.xlu0 %783
        %v786 = vsel %vm511, %v782, 0
        %v789 = vsel %vm515, %v784, 0
        %791 = vmatpush.bf16.msra.mxu0 0
        %792 = vmatpush.bf16.msra.mxu0 0
        %793 = vmatpush.bf16.msra.mxu0 0
        %794 = vmatpush.bf16.msra.mxu0 0
        %795 = vmatpush.bf16.msra.mxu0 0
        %796 = vmatpush.bf16.msra.mxu0 0
        %797 = vmatpush.bf16.msra.mxu0 0
        %798 = vmatpush.bf16.msra.mxu0 %v789
        %799 = vmatmul.bf16.gmra.mxu0 %v786
        %v800 = vpop.f32.mrf.mxu0
        %v801 = vadd.f32 0.0, %v800
        %v802 = vpop.f32.mrf.mxu0
        %803 = vdwg.mxu0
        %v804 = vadd.f32 %v760, %v801
        %s805 = sld [smem:[#allocation3 + $0x5]]
        %v806 = vstv %s805
        %v807 = vmul.f32 %v539, %v806
        %s808 = sld [smem:[#allocation3 + $0x85]]
        %v809 = vstv %s808
        %v810 = vmul.f32 %v545, %v809
        %v811 = vadd.f32 %v807, %v810
        %s812 = sld [smem:[#allocation3 + $0x105]]
        %v813 = vstv %s812
        %v814 = vmul.f32 %v551, %v813
        %v815 = vadd.f32 %v811, %v814
        %s816 = sld [smem:[#allocation5 + $0x5]]
        %v817 = vstv %s816
        %v818 = vadd.f32 %v815, %v817
        %v819 = vsub.f32 0.0, %v818
        %v820 = vmul.f32 %v819, 1.442695
        %v821 = vpow.pop %v820
        %v822 = vadd.f32 %v821, 1.0
        %v823 = vrcp.pop %v822
        %v824 = vmul.f32 %v818, %v823
        %v825 = vmul.f32 %v824, %v562
        %v826 = vpack.c.bf16 %v825, %v825
        %827 = vrot.lane.b32.xlu0 %v588, 80
        %v828 = vpop.permute.xlu0 %827
        %v830 = vsel %vm511, %v826, 0
        %v833 = vsel %vm515, %v828, 0
        %835 = vmatpush.bf16.msra.mxu0 0
        %836 = vmatpush.bf16.msra.mxu0 0
        %837 = vmatpush.bf16.msra.mxu0 0
        %838 = vmatpush.bf16.msra.mxu0 0
        %839 = vmatpush.bf16.msra.mxu0 0
        %840 = vmatpush.bf16.msra.mxu0 0
        %841 = vmatpush.bf16.msra.mxu0 0
        %842 = vmatpush.bf16.msra.mxu0 %v833
        %843 = vmatmul.bf16.gmra.mxu0 %v830
        %v844 = vpop.f32.mrf.mxu0
        %v845 = vadd.f32 0.0, %v844
        %v846 = vpop.f32.mrf.mxu0
        %847 = vdwg.mxu0
        %v848 = vadd.f32 %v804, %v845
        %s849 = sld [smem:[#allocation3 + $0x6]]
        %v850 = vstv %s849
        %v851 = vmul.f32 %v539, %v850
        %s852 = sld [smem:[#allocation3 + $0x86]]
        %v853 = vstv %s852
        %v854 = vmul.f32 %v545, %v853
        %v855 = vadd.f32 %v851, %v854
        %s856 = sld [smem:[#allocation3 + $0x106]]
        %v857 = vstv %s856
        %v858 = vmul.f32 %v551, %v857
        %v859 = vadd.f32 %v855, %v858
        %s860 = sld [smem:[#allocation5 + $0x6]]
        %v861 = vstv %s860
        %v862 = vadd.f32 %v859, %v861
        %v863 = vsub.f32 0.0, %v862
        %v864 = vmul.f32 %v863, 1.442695
        %v865 = vpow.pop %v864
        %v866 = vadd.f32 %v865, 1.0
        %v867 = vrcp.pop %v866
        %v868 = vmul.f32 %v862, %v867
        %v869 = vmul.f32 %v868, %v562
        %v870 = vpack.c.bf16 %v869, %v869
        %871 = vrot.lane.b32.xlu0 %v588, 72
        %v872 = vpop.permute.xlu0 %871
        %v874 = vsel %vm511, %v870, 0
        %v877 = vsel %vm515, %v872, 0
        %879 = vmatpush.bf16.msra.mxu0 0
        %880 = vmatpush.bf16.msra.mxu0 0
        %881 = vmatpush.bf16.msra.mxu0 0
        %882 = vmatpush.bf16.msra.mxu0 0
        %883 = vmatpush.bf16.msra.mxu0 0
        %884 = vmatpush.bf16.msra.mxu0 0
        %885 = vmatpush.bf16.msra.mxu0 0
        %886 = vmatpush.bf16.msra.mxu0 %v877
        %887 = vmatmul.bf16.gmra.mxu0 %v874
        %v888 = vpop.f32.mrf.mxu0
        %v889 = vadd.f32 0.0, %v888
        %v890 = vpop.f32.mrf.mxu0
        %891 = vdwg.mxu0
        %v892 = vadd.f32 %v848, %v889
        %s893 = sld [smem:[#allocation3 + $0x7]]
        %v894 = vstv %s893
        %v895 = vmul.f32 %v539, %v894
        %s896 = sld [smem:[#allocation3 + $0x87]]
        %v897 = vstv %s896
        %v898 = vmul.f32 %v545, %v897
        %v899 = vadd.f32 %v895, %v898
        %s900 = sld [smem:[#allocation3 + $0x107]]
        %v901 = vstv %s900
        %v902 = vmul.f32 %v551, %v901
        %v903 = vadd.f32 %v899, %v902
        %s904 = sld [smem:[#allocation5 + $0x7]]
        %v905 = vstv %s904
        %v906 = vadd.f32 %v903, %v905
        %v907 = vsub.f32 0.0, %v906
        %v908 = vmul.f32 %v907, 1.442695
        %v909 = vpow.pop %v908
        %v910 = vadd.f32 %v909, 1.0
        %v911 = vrcp.pop %v910
        %v912 = vmul.f32 %v906, %v911
        %v913 = vmul.f32 %v912, %v562
        %v914 = vpack.c.bf16 %v913, %v913
        %915 = vrot.lane.b32.xlu0 %v588, 64
        %v916 = vpop.permute.xlu0 %915
        %v918 = vsel %vm511, %v914, 0
        %v921 = vsel %vm515, %v916, 0
        %923 = vmatpush.bf16.msra.mxu0 0
        %924 = vmatpush.bf16.msra.mxu0 0
        %925 = vmatpush.bf16.msra.mxu0 0
        %926 = vmatpush.bf16.msra.mxu0 0
        %927 = vmatpush.bf16.msra.mxu0 0
        %928 = vmatpush.bf16.msra.mxu0 0
        %929 = vmatpush.bf16.msra.mxu0 0
        %930 = vmatpush.bf16.msra.mxu0 %v921
        %931 = vmatmul.bf16.gmra.mxu0 %v918
        %v932 = vpop.f32.mrf.mxu0
        %v933 = vadd.f32 0.0, %v932
        %v934 = vpop.f32.mrf.mxu0
        %935 = vdwg.mxu0
        %v936 = vadd.f32 %v892, %v933
        %p937 = scmp.eq.s32.totalorder %s30, 0
        // Predicated region
        $region69: #{seqmolec_forward.11} parent=59 // pred_check
          %p938 = pneg %p937
        $region70: #{seqmolec_forward.11} parent=59 // pred_check_branch
          %940 = sbr.rel (%p938) target = $region72
        $region71: #{seqmolec_forward.11} parent=59 // pred_region
          %941 = vst.msk [vmem:[#allocation2] sm:$0xff] %vm511, %v936
        $region72: #{seqmolec_forward.11} parent=59 // pred_fallthru
          _
        %p942 = scmp.gt.s32.totalorder %s30, 0
        // Predicated region
        $region73: #{seqmolec_forward.11} parent=59 // pred_check
          %p943 = pneg %p942
        $region74: #{seqmolec_forward.11} parent=59 // pred_check_branch
          %945 = sbr.rel (%p943) target = $region76
        $region75: #{seqmolec_forward.11} parent=59 // pred_region
          %v946 = vld [vmem:[#allocation2] sm:$0xff]
          %v947 = vadd.f32 %v946, %v936
          %948 = vst.msk [vmem:[#allocation2] sm:$0xff] %vm511, %v947
        $region76: #{seqmolec_forward.11} parent=59 // pred_fallthru
          _
        // Predicated region
        $region77: #{seqmolec_forward.11} parent=59 // pred_check
          %p949 = pneg %p937
        $region78: #{seqmolec_forward.11} parent=59 // pred_check_branch
          %951 = sbr.rel (%p949) target = $region80
        $region79: #{seqmolec_forward.11} parent=59 // pred_region
          %v952 = vld [vmem:[#allocation2] sm:$0xff]
          %953 = vset.pattern.permute.xlu0 3
          %954 = vperm.xlu0 %953, %v485
          %v955 = vpop.permute.xlu0 %954
          %v957 = vmul.f32 %v952, %v955
          %v958 = vld [vmem:[%s9] sm:$0x1]
          %v960 = vperm.slane %v958, 0
          %v962 = vadd.f32 %v957, %v960
          %963 = vst.msk [vmem:[%s479] sm:$0xff] %vm511, %v962
          %964 = vset.pattern.permute.xlu0 4
          %965 = vperm.xlu0 %964, %v485
          %v966 = vpop.permute.xlu0 %965
          %v968 = vmul.f32 %v962, %v966
          %v969 = vsel %vm511, %v968, 0.0
          %v970 = vrot.slane %v969, 4
          %v971 = vadd.f32 %v969, %v970
          %v972 = vrot.slane %v971, 2
          %v973 = vadd.f32 %v971, %v972
          %v974 = vrot.slane %v973, 1
          %v975 = vadd.f32 %v973, %v974
          %vm976 = vcmask 57344
          %977 = vst.msk [vmem:[%s483] sm:$0x1] %vm976, %v975
          %v978 = vmul.f32 %v968, %v968
          %v979 = vsel %vm511, %v978, 0.0
          %v980 = vrot.slane %v979, 4
          %v981 = vadd.f32 %v979, %v980
          %v982 = vrot.slane %v981, 2
          %v983 = vadd.f32 %v981, %v982
          %v984 = vrot.slane %v983, 1
          %v985 = vadd.f32 %v983, %v984
          %986 = vst.msk [vmem:[%s483 + $0x1] sm:$0x1] %vm976, %v985
        $region80: #{seqmolec_forward.11} parent=59 // pred_fallthru
          _
        %p987 = scmp.lt.s32.totalorder %s29, 1
        %s988 = scalar_select %p987, %s29, 1
        %s989 = smul.addr %s988, 8
        %s990 = scalar_lea.vmem %s10, %s989
        %p991 = scmp.lt.s32.totalorder %s29, 1
        %s992 = scalar_select %p991, %s29, 1
        %s993 = smul.addr %s992, 2
        %s994 = scalar_lea.vmem %s11, %s993
        // Predicated region
        $region81: #{seqmolec_forward.11} parent=59 // pred_check
          %p995 = pneg %p284
        $region82: #{seqmolec_forward.11} parent=59 // pred_check_branch
          %997 = sbr.rel (%p995) target = $region84
        $region83: #{seqmolec_forward.11} parent=59 // pred_region
          _
        $region84: #{seqmolec_forward.11} parent=59 // pred_fallthru
          _
        // Predicated region
        $region85: #{seqmolec_forward.11} parent=59 // pred_check
          %p998 = pneg %p310
        $region86: #{seqmolec_forward.11} parent=59 // pred_check_branch
          %1000 = sbr.rel (%p998) target = $region88
        $region87: #{seqmolec_forward.11} parent=59 // pred_region
          _
        $region88: #{seqmolec_forward.11} parent=59 // pred_fallthru
          _
      $region60: #{seqmolec_forward.11} parent=5 // pred_fallthru
        _
      %p1001 = scmp.le.s32.totalorder 2, %s20
      // Predicated region
      $region89: #{seqmolec_forward.11} parent=5 // pred_check
        %p1002 = pneg %p1001
      $region90: #{seqmolec_forward.11} parent=5 // pred_check_branch
        %1004 = sbr.rel (%p1002) target = $region92
      $region91: #{seqmolec_forward.11} parent=5 // pred_region
        %s1005 = ssub.s32 %s20, 2
        // Predicated region
        $region93: #{seqmolec_forward.11} parent=91 // pred_check
          %p1006 = pneg %p290
        $region94: #{seqmolec_forward.11} parent=91 // pred_check_branch
          %1008 = sbr.rel (%p1006) target = $region96
        $region95: #{seqmolec_forward.11} parent=91 // pred_region
          %p1009 = scmp.lt.s32.totalorder %s31, 1
          %s1010 = scalar_select %p1009, %s31, 1
          %s1011 = smul.addr %s1010, 8
          %s1012 = scalar_lea.vmem %s10, %s1011
        $region96: #{seqmolec_forward.11} parent=91 // pred_fallthru
          _
        // Predicated region
        $region97: #{seqmolec_forward.11} parent=91 // pred_check
          %p1013 = pneg %p316
        $region98: #{seqmolec_forward.11} parent=91 // pred_check_branch
          %1015 = sbr.rel (%p1013) target = $region100
        $region99: #{seqmolec_forward.11} parent=91 // pred_region
          %p1016 = scmp.lt.s32.totalorder %s31, 1
          %s1017 = scalar_select %p1016, %s31, 1
          %s1018 = smul.addr %s1017, 2
          %s1019 = scalar_lea.vmem %s11, %s1018
        $region100: #{seqmolec_forward.11} parent=91 // pred_fallthru
          _
      $region92: #{seqmolec_forward.11} parent=5 // pred_fallthru
        _
    $region6: #{seqmolec_forward.11} parent=1 // loop_footer
      %s24 = sadd.s32 1, %s20
    $region7: #{seqmolec_forward.11} parent=1 // loop_footer_branch
      %19 = sbr.rel target = $region3
    $region8: #{seqmolec_forward.11} parent=1 // loop_exit
      _
    %1020 = vsyncpa [#allocation4], 1
    %s1021 = scalar_lea.sflag [#allocation4], 1
    %1022 = vsyncpa %s1021, 1
    %1023 = vsyncpa [#allocation6], 1

</llo_original>
